<compile_context>
chip_gen: v5e
topology: v5e:2x2
jax: 0.10.0
libtpu: 0.0.40
codegen_flags: <defaults>
</compile_context>

<pallas_src>
import functools

import jax
import jax.numpy as jnp
from jax.experimental import pallas as pl
from jax.experimental.pallas import tpu as pltpu


def _convd_kernel(x_ref, cm_ref, rv_ref, w1_ref, b1_ref, w2_ref, b2_ref, w3_ref, b3_ref,
                  o_ref, wide_ref, patch_ref, *, W, C, PAD, RMAX, LT):
    """Fused Convd forward for one batch tile (all images of the tile folded onto lanes).

    x_ref    : (C, LT)            input; channels on sublanes, flat (b,row,col) on lanes
                                  (each image carries RMAX zero pad rows top & bottom)
    cm_ref   : (2*RMAX+1, C, LT)  column validity masks (channel-broadcast), row r <-> dw=r-RMAX
    rv_ref   : (C, LT)            1.0 on real image rows, 0.0 on pad rows
    w1/w2    : (C, 9*C)           im2col weights for the 3x3 convs (no zero padding)
    w3       : (1, 25*C)          im2col weights for the 5x5 conv
    b*_ref   : (Cout, 1)          biases
    o_ref    : (1, LT)            output (single channel)
    wide_ref : (C, LT + 2*PAD)    zero-haloed flat image scratch
    patch_ref: (25*C, LT)         im2col patch scratch (3x3 convs only touch rows [:9*C])
    """
    # Zero only the halo; the interior is fully overwritten by every im2col call.  Done
    # every step (not pl.when(pid==0)): under megacore-parallel sharding the second core
    # never sees program_id 0, so a zero-once guard would leave its halo uninitialized.
    wide_ref[:, :PAD] = jnp.zeros((C, PAD), jnp.float32)
    wide_ref[:, PAD + LT:] = jnp.zeros((C, PAD), jnp.float32)

    # Hoist the (already channel-broadcast) column masks once; reused by every tap.
    col_mask = {dw: cm_ref[RMAX + dw] for dw in range(-RMAX, RMAX + 1) if dw != 0}
    row_valid = rv_ref[...]
    x = x_ref[...]                                          # (C, LT)

    # Pair taps into 8-sublane-aligned stores when 2*C is a multiple of 8 (the C=4 case).
    pair = (C % 8 != 0) and ((2 * C) % 8 == 0)

    def im2col(v, r):
        """Fill patch_ref rows [0, (2r+1)^2 * C) with shifted/masked copies of v (C, LT)."""
        wide_ref[:, PAD:PAD + LT] = v                       # interior write; halo stays zero
        wide = wide_ref[...]                                # (C, LT + 2*PAD)
        taps = []
        for dh in range(-r, r + 1):
            for dw in range(-r, r + 1):
                start = PAD + dh * W + dw
                s = wide[:, start:start + LT]               # value of v[:, p + dh*W + dw]
                if dw != 0:
                    s = s * col_mask[dw]                    # kill column wrap-around
                taps.append(s)
        t = 0
        while t < len(taps):
            if pair and t + 1 < len(taps):
                # Two taps -> one full (8, LT) unmasked store at an 8-aligned row offset.
                patch_ref[t * C:(t + 2) * C, :] = jnp.concatenate(
                    [taps[t], taps[t + 1]], axis=0)
                t += 2
            else:
                patch_ref[t * C:(t + 1) * C, :] = taps[t]
                t += 1

    def conv(v, k, w_ref, b_ref):
        im2col(v, k // 2)
        kk = k * k * C
        # K-sliced matmul: the 3x3 convs only read the first 9*C patch rows, so no
        # zero-filled / stale rows are ever touched.
        return jnp.dot(w_ref[...], patch_ref[:kk, :],
                       preferred_element_type=jnp.float32) + b_ref[...]

    # Pad rows must be re-zeroed after each conv (their raw outputs are bias/ReLU garbage)
    # so the next conv's vertical taps still see true zero padding.
    h1 = jnp.maximum(conv(x, 3, w1_ref, b1_ref), 0.0) * row_valid          # conv1 + ReLU
    h2 = (jnp.maximum(conv(h1, 3, w2_ref, b2_ref), 0.0) + x) * row_valid   # conv2 + ReLU + res
    o_ref[...] = conv(h2, 5, w3_ref, b3_ref)                               # 5x5 -> 1 channel


def init_params(channels, key):
    """Deterministic init mirroring nn.Conv2d shapes (weights stored OIHW like PyTorch)."""
    keys = jax.random.split(key, 6)

    def conv_init(kw_key, kb_key, cout, cin, k):
        bound = (1.0 / (cin * k * k)) ** 0.5
        w = jax.random.uniform(kw_key, (cout, cin, k, k), jnp.float32, -bound, bound)
        b = jax.random.uniform(kb_key, (cout,), jnp.float32, -bound, bound)
        return w, b

    w1, b1 = conv_init(keys[0], keys[1], channels, channels, 3)
    w2, b2 = conv_init(keys[2], keys[3], channels, channels, 3)
    w3, b3 = conv_init(keys[4], keys[5], 1, channels, 5)
    return dict(w1=w1, b1=b1, w2=w2, b2=b2, w3=w3, b3=b3)


@jax.jit
def convd_forward(x_nchw, params):
    """Equivalent of Convd.forward.  x_nchw: (B, C, H, W) -> (B, 1, H, W)."""
    B, C, H, W = x_nchw.shape
    RMAX = 2                                   # half-width of the largest (5x5) kernel
    Hp = H + 2 * RMAX                          # per-image height incl. zero pad rows
    L = B * Hp * W                             # folded lane extent (whole batch)
    KKC = (2 * RMAX + 1) ** 2 * C              # 5x5 patch rows
    PAD = ((RMAX * (W + 1) + 63) // 64) * 64   # wide-buffer halo (exact need = RMAX*(W+1))

    # Batch tiling over the grid: keep 2 'parallel' steps (one per v7x TensorCore) only
    # when each tile stays 128-lane aligned and >=512 lanes wide; otherwise a single wide
    # step minimizes per-step overhead (best on v5e/v6e at small B).
    num_tiles = 1
    if B % 2 == 0:
        lt2 = (B // 2) * Hp * W
        if lt2 % 128 == 0 and lt2 >= 512:
            num_tiles = 2
    LT = L // num_tiles

    def to_mat(w):                             # OIHW -> (Cout, k*k*Cin), tap-major/ch-minor
        cout, cin, kh, kw = w.shape
        return jnp.transpose(w, (0, 2, 3, 1)).reshape(cout, kh * kw * cin).astype(jnp.float32)

    w1m, w2m, w3m = to_mat(params["w1"]), to_mat(params["w2"]), to_mat(params["w3"])
    b1c = params["b1"].reshape(C, 1).astype(jnp.float32)
    b2c = params["b2"].reshape(C, 1).astype(jnp.float32)
    b3c = params["b3"].reshape(1, 1).astype(jnp.float32)

    # Input layout: RMAX zero pad rows around every image, then channels on sublanes and
    # the flat (batch, row, col) index on lanes.
    xp = jnp.pad(x_nchw.astype(jnp.float32), ((0, 0), (0, 0), (RMAX, RMAX), (0, 0)))
    xf = jnp.transpose(xp, (1, 0, 2, 3)).reshape(C, L)

    # Masks are periodic per tile, so build them tile-sized; XLA constant-folds them.
    col = jnp.arange(LT, dtype=jnp.int32) % W
    cm = jnp.stack([((col + dw >= 0) & (col + dw < W)).astype(jnp.float32)
                    for dw in range(-RMAX, RMAX + 1)], axis=0)            # (5, LT)
    cm = jnp.broadcast_to(cm[:, None, :], (2 * RMAX + 1, C, LT))          # channel-broadcast
    row = (jnp.arange(LT, dtype=jnp.int32) // W) % Hp
    rv = ((row >= RMAX) & (row < RMAX + H)).astype(jnp.float32)
    rv = jnp.broadcast_to(rv[None, :], (C, LT))

    kernel = functools.partial(_convd_kernel, W=W, C=C, PAD=PAD, RMAX=RMAX, LT=LT)

    out_flat = pl.pallas_call(
        kernel,
        out_shape=jax.ShapeDtypeStruct((1, L), jnp.float32),
        grid=(num_tiles,),
        in_specs=[
            pl.BlockSpec((C, LT), lambda t: (0, t)),                      # x (per-tile)
            pl.BlockSpec((2 * RMAX + 1, C, LT), lambda t: (0, 0, 0)),     # column masks
            pl.BlockSpec((C, LT), lambda t: (0, 0)),                      # row-valid mask
            pl.BlockSpec((C, 9 * C), lambda t: (0, 0)),                   # w1
            pl.BlockSpec((C, 1), lambda t: (0, 0)),                       # b1
            pl.BlockSpec((C, 9 * C), lambda t: (0, 0)),                   # w2
            pl.BlockSpec((C, 1), lambda t: (0, 0)),                       # b2
            pl.BlockSpec((1, KKC), lambda t: (0, 0)),                     # w3
            pl.BlockSpec((1, 1), lambda t: (0, 0)),                       # b3
        ],
        out_specs=pl.BlockSpec((1, LT), lambda t: (0, t)),
        scratch_shapes=[
            pltpu.VMEM((C, LT + 2 * PAD), jnp.float32),                   # zero-haloed image
            pltpu.VMEM((KKC, LT), jnp.float32),                           # im2col patch
        ],
        compiler_params=pltpu.CompilerParams(
            dimension_semantics=("parallel",),
            # Current need is <1 MiB; cap well below v7x's 64 MiB physical VMEM so larger
            # H*W / batch tiles fail loudly rather than thrash.
            vmem_limit_bytes=32 * 1024 * 1024,
        ),
    )(xf, cm, rv, w1m, b1c, w2m, b2c, w3m, b3c)

    out = out_flat.reshape(B, Hp, W)[:, RMAX:RMAX + H, :]                 # drop pad rows
    return out[:, None, :, :]


def _reference_forward(x_nchw, params):
    """Pure-JAX reference (lax.conv, NCHW/OIHW) for validation."""
    dn = ("NCHW", "OIHW", "NCHW")

    def conv(h, w, b, pad):
        y = jax.lax.conv_general_dilated(h, w, (1, 1), [(pad, pad), (pad, pad)],
                                         dimension_numbers=dn)
        return y + b[None, :, None, None]

    x = x_nchw.astype(jnp.float32)
    h1 = jax.nn.relu(conv(x, params["w1"], params["b1"], 1))
    h2 = jax.nn.relu(conv(h1, params["w2"], params["b2"], 1)) + x
    return conv(h2, params["w3"], params["b3"], 2)


if __name__ == "__main__":
    key = jax.random.PRNGKey(0)
    k_x, k_p = jax.random.split(key)

    B, C, H, W = 2, 4, 16, 16
    x = jax.random.normal(k_x, (B, C, H, W), jnp.float32)
    params = init_params(C, k_p)

    out = jax.block_until_ready(convd_forward(x, params))
    ref = _reference_forward(x, params)

    assert out.shape == (B, 1, H, W), out.shape
    assert jnp.allclose(out, ref, atol=1e-4, rtol=1e-4), "mismatch vs reference conv"

    print("KERNEL_OK")
</pallas_src>

<mosaic_0001>
module attributes {stable_mosaic.version = 11 : i64} {
  func.func @_convd_kernel(%arg0: i32, %arg1: memref<4x640xf32, #tpu.memory_space<vmem>>, %arg2: memref<5x4x640xf32, #tpu.memory_space<vmem>>, %arg3: memref<4x640xf32, #tpu.memory_space<vmem>>, %arg4: memref<4x36xf32, #tpu.memory_space<vmem>>, %arg5: memref<4x1xf32, #tpu.memory_space<vmem>>, %arg6: memref<4x36xf32, #tpu.memory_space<vmem>>, %arg7: memref<4x1xf32, #tpu.memory_space<vmem>>, %arg8: memref<1x100xf32, #tpu.memory_space<vmem>>, %arg9: memref<1x1xf32, #tpu.memory_space<vmem>>, %arg10: memref<1x640xf32, #tpu.memory_space<vmem>>, %arg11: memref<4x768xf32, #tpu.memory_space<vmem>>, %arg12: memref<100x640xf32, #tpu.memory_space<vmem>>) attributes {dimension_semantics = [#tpu.dimension_semantics<parallel>], iteration_bounds = array<i64: 1>, scalar_prefetch = 0 : i64, scratch_operands = 2 : i64, tpu.core_type = #tpu.core_type<tc>, window_params = [{transform_indices = @transform_0, window_bounds = array<i64: 4, 640>}, {pipeline_mode = #tpu.pipeline_mode<synchronous>, transform_indices = @transform_1, window_bounds = array<i64: 5, 4, 640>}, {pipeline_mode = #tpu.pipeline_mode<synchronous>, transform_indices = @transform_2, window_bounds = array<i64: 4, 640>}, {pipeline_mode = #tpu.pipeline_mode<synchronous>, transform_indices = @transform_3, window_bounds = array<i64: 4, 36>}, {pipeline_mode = #tpu.pipeline_mode<synchronous>, transform_indices = @transform_4, window_bounds = array<i64: 4, 1>}, {pipeline_mode = #tpu.pipeline_mode<synchronous>, transform_indices = @transform_5, window_bounds = array<i64: 4, 36>}, {pipeline_mode = #tpu.pipeline_mode<synchronous>, transform_indices = @transform_6, window_bounds = array<i64: 4, 1>}, {pipeline_mode = #tpu.pipeline_mode<synchronous>, transform_indices = @transform_7, window_bounds = array<i64: 1, 100>}, {pipeline_mode = #tpu.pipeline_mode<synchronous>, transform_indices = @transform_8, window_bounds = array<i64: 1, 1>}, {transform_indices = @transform_9, window_bounds = array<i64: 1, 640>}]} {
    %cst = arith.constant 0.000000e+00 : f32
    %0 = vector.broadcast %cst : f32 to vector<4x64xf32>
    %c0 = arith.constant 0 : index
    %c0_0 = arith.constant 0 : index
    %1 = vector.load %arg11[%c0, %c0_0] : memref<4x768xf32, #tpu.memory_space<vmem>>, vector<4x64xf32>
    tpu.vector_store %arg11[%c0, %c0_0], %0 {strides = array<i32>} : memref<4x768xf32, #tpu.memory_space<vmem>>, vector<4x64xf32>,
    %cst_1 = arith.constant 0.000000e+00 : f32
    %2 = vector.broadcast %cst_1 : f32 to vector<4x64xf32>
    %c0_2 = arith.constant 0 : index
    %c704 = arith.constant 704 : index
    %3 = vector.load %arg11[%c0_2, %c704] : memref<4x768xf32, #tpu.memory_space<vmem>>, vector<4x64xf32>
    tpu.vector_store %arg11[%c0_2, %c704], %2 {strides = array<i32>} : memref<4x768xf32, #tpu.memory_space<vmem>>, vector<4x64xf32>,
    %c0_3 = arith.constant 0 : index
    %c0_4 = arith.constant 0 : index
    %c0_5 = arith.constant 0 : index
    %4 = vector.load %arg2[%c0_3, %c0_4, %c0_5] : memref<5x4x640xf32, #tpu.memory_space<vmem>>, vector<1x4x640xf32>
    %5 = vector.shape_cast %4 : vector<1x4x640xf32> to vector<4x640xf32>
    %c1 = arith.constant 1 : index
    %c0_6 = arith.constant 0 : index
    %c0_7 = arith.constant 0 : index
    %6 = vector.load %arg2[%c1, %c0_6, %c0_7] : memref<5x4x640xf32, #tpu.memory_space<vmem>>, vector<1x4x640xf32>
    %7 = vector.shape_cast %6 : vector<1x4x640xf32> to vector<4x640xf32>
    %c3 = arith.constant 3 : index
    %c0_8 = arith.constant 0 : index
    %c0_9 = arith.constant 0 : index
    %8 = vector.load %arg2[%c3, %c0_8, %c0_9] : memref<5x4x640xf32, #tpu.memory_space<vmem>>, vector<1x4x640xf32>
    %9 = vector.shape_cast %8 : vector<1x4x640xf32> to vector<4x640xf32>
    %c4 = arith.constant 4 : index
    %c0_10 = arith.constant 0 : index
    %c0_11 = arith.constant 0 : index
    %10 = vector.load %arg2[%c4, %c0_10, %c0_11] : memref<5x4x640xf32, #tpu.memory_space<vmem>>, vector<1x4x640xf32>
    %11 = vector.shape_cast %10 : vector<1x4x640xf32> to vector<4x640xf32>
    %c0_12 = arith.constant 0 : index
    %c0_13 = arith.constant 0 : index
    %12 = vector.load %arg3[%c0_12, %c0_13] : memref<4x640xf32, #tpu.memory_space<vmem>>, vector<4x640xf32>
    %c0_14 = arith.constant 0 : index
    %c0_15 = arith.constant 0 : index
    %13 = vector.load %arg1[%c0_14, %c0_15] : memref<4x640xf32, #tpu.memory_space<vmem>>, vector<4x640xf32>
    %c0_16 = arith.constant 0 : index
    %c64 = arith.constant 64 : index
    %14 = vector.load %arg11[%c0_16, %c64] : memref<4x768xf32, #tpu.memory_space<vmem>>, vector<4x640xf32>
    tpu.vector_store %arg11[%c0_16, %c64], %13 {strides = array<i32>} : memref<4x768xf32, #tpu.memory_space<vmem>>, vector<4x640xf32>,
    %c0_17 = arith.constant 0 : index
    %c0_18 = arith.constant 0 : index
    %15 = vector.load %arg11[%c0_17, %c0_18] : memref<4x768xf32, #tpu.memory_space<vmem>>, vector<4x768xf32>
    %16 = vector.extract_strided_slice %15 {offsets = [0, 47], sizes = [4, 640], strides = [1, 1]} : vector<4x768xf32> to vector<4x640xf32>
    %17 = arith.mulf %16, %7 : vector<4x640xf32>
    %18 = vector.extract_strided_slice %15 {offsets = [0, 48], sizes = [4, 640], strides = [1, 1]} : vector<4x768xf32> to vector<4x640xf32>
    %19 = vector.extract_strided_slice %15 {offsets = [0, 49], sizes = [4, 640], strides = [1, 1]} : vector<4x768xf32> to vector<4x640xf32>
    %20 = arith.mulf %19, %9 : vector<4x640xf32>
    %21 = vector.extract_strided_slice %15 {offsets = [0, 63], sizes = [4, 640], strides = [1, 1]} : vector<4x768xf32> to vector<4x640xf32>
    %22 = arith.mulf %21, %7 : vector<4x640xf32>
    %23 = vector.extract_strided_slice %15 {offsets = [0, 64], sizes = [4, 640], strides = [1, 1]} : vector<4x768xf32> to vector<4x640xf32>
    %24 = vector.extract_strided_slice %15 {offsets = [0, 65], sizes = [4, 640], strides = [1, 1]} : vector<4x768xf32> to vector<4x640xf32>
    %25 = arith.mulf %24, %9 : vector<4x640xf32>
    %26 = vector.extract_strided_slice %15 {offsets = [0, 79], sizes = [4, 640], strides = [1, 1]} : vector<4x768xf32> to vector<4x640xf32>
    %27 = arith.mulf %26, %7 : vector<4x640xf32>
    %28 = vector.extract_strided_slice %15 {offsets = [0, 80], sizes = [4, 640], strides = [1, 1]} : vector<4x768xf32> to vector<4x640xf32>
    %29 = vector.extract_strided_slice %15 {offsets = [0, 81], sizes = [4, 640], strides = [1, 1]} : vector<4x768xf32> to vector<4x640xf32>
    %30 = arith.mulf %29, %9 : vector<4x640xf32>
    %31 = tpu.concatenate %17, %18 in 0 : vector<4x640xf32>, vector<4x640xf32> -> vector<8x640xf32>
    %c0_19 = arith.constant 0 : index
    %c0_20 = arith.constant 0 : index
    %32 = vector.load %arg12[%c0_19, %c0_20] : memref<100x640xf32, #tpu.memory_space<vmem>>, vector<8x640xf32>
    tpu.vector_store %arg12[%c0_19, %c0_20], %31 {strides = array<i32>} : memref<100x640xf32, #tpu.memory_space<vmem>>, vector<8x640xf32>,
    %33 = tpu.concatenate %20, %22 in 0 : vector<4x640xf32>, vector<4x640xf32> -> vector<8x640xf32>
    %c8 = arith.constant 8 : index
    %c0_21 = arith.constant 0 : index
    %34 = vector.load %arg12[%c8, %c0_21] : memref<100x640xf32, #tpu.memory_space<vmem>>, vector<8x640xf32>
    tpu.vector_store %arg12[%c8, %c0_21], %33 {strides = array<i32>} : memref<100x640xf32, #tpu.memory_space<vmem>>, vector<8x640xf32>,
    %35 = tpu.concatenate %23, %25 in 0 : vector<4x640xf32>, vector<4x640xf32> -> vector<8x640xf32>
    %c16 = arith.constant 16 : index
    %c0_22 = arith.constant 0 : index
    %36 = vector.load %arg12[%c16, %c0_22] : memref<100x640xf32, #tpu.memory_space<vmem>>, vector<8x640xf32>
    tpu.vector_store %arg12[%c16, %c0_22], %35 {strides = array<i32>} : memref<100x640xf32, #tpu.memory_space<vmem>>, vector<8x640xf32>,
    %37 = tpu.concatenate %27, %28 in 0 : vector<4x640xf32>, vector<4x640xf32> -> vector<8x640xf32>
    %c24 = arith.constant 24 : index
    %c0_23 = arith.constant 0 : index
    %38 = vector.load %arg12[%c24, %c0_23] : memref<100x640xf32, #tpu.memory_space<vmem>>, vector<8x640xf32>
    tpu.vector_store %arg12[%c24, %c0_23], %37 {strides = array<i32>} : memref<100x640xf32, #tpu.memory_space<vmem>>, vector<8x640xf32>,
    %c32 = arith.constant 32 : index
    %c0_24 = arith.constant 0 : index
    %39 = vector.load %arg12[%c32, %c0_24] : memref<100x640xf32, #tpu.memory_space<vmem>>, vector<4x640xf32>
    tpu.vector_store %arg12[%c32, %c0_24], %30 {strides = array<i32>} : memref<100x640xf32, #tpu.memory_space<vmem>>, vector<4x640xf32>,
    %c0_25 = arith.constant 0 : index
    %c0_26 = arith.constant 0 : index
    %40 = vector.load %arg4[%c0_25, %c0_26] : memref<4x36xf32, #tpu.memory_space<vmem>>, vector<4x36xf32>
    %c0_27 = arith.constant 0 : index
    %c0_28 = arith.constant 0 : index
    %41 = vector.load %arg12[%c0_27, %c0_28] : memref<100x640xf32, #tpu.memory_space<vmem>>, vector<36x640xf32>
    %cst_29 = arith.constant dense<0.000000e+00> : vector<4x640xf32>
    %42 = tpu.matmul %40, %41, %cst_29 {dimension_numbers = #tpu.dot_dimension_numbers<[1], [0], [0], [1], [0, 0, 1, 1], [], []>} : vector<4x36xf32>, vector<36x640xf32>, vector<4x640xf32> -> vector<4x640xf32>
    %c0_30 = arith.constant 0 : index
    %c0_31 = arith.constant 0 : index
    %43 = vector.load %arg5[%c0_30, %c0_31] : memref<4x1xf32, #tpu.memory_space<vmem>>, vector<4x1xf32>
    %44 = vector.broadcast %43 : vector<4x1xf32> to vector<4x640xf32>
    %45 = arith.addf %42, %44 : vector<4x640xf32>
    %cst_32 = arith.constant 0.000000e+00 : f32
    %46 = vector.broadcast %cst_32 : f32 to vector<4x640xf32>
    %47 = arith.maximumf %45, %46 : vector<4x640xf32>
    %48 = arith.mulf %47, %12 : vector<4x640xf32>
    %c0_33 = arith.constant 0 : index
    %c64_34 = arith.constant 64 : index
    %49 = vector.load %arg11[%c0_33, %c64_34] : memref<4x768xf32, #tpu.memory_space<vmem>>, vector<4x640xf32>
    tpu.vector_store %arg11[%c0_33, %c64_34], %48 {strides = array<i32>} : memref<4x768xf32, #tpu.memory_space<vmem>>, vector<4x640xf32>,
    %c0_35 = arith.constant 0 : index
    %c0_36 = arith.constant 0 : index
    %50 = vector.load %arg11[%c0_35, %c0_36] : memref<4x768xf32, #tpu.memory_space<vmem>>, vector<4x768xf32>
    %51 = vector.extract_strided_slice %50 {offsets = [0, 47], sizes = [4, 640], strides = [1, 1]} : vector<4x768xf32> to vector<4x640xf32>
    %52 = arith.mulf %51, %7 : vector<4x640xf32>
    %53 = vector.extract_strided_slice %50 {offsets = [0, 48], sizes = [4, 640], strides = [1, 1]} : vector<4x768xf32> to vector<4x640xf32>
    %54 = vector.extract_strided_slice %50 {offsets = [0, 49], sizes = [4, 640], strides = [1, 1]} : vector<4x768xf32> to vector<4x640xf32>
    %55 = arith.mulf %54, %9 : vector<4x640xf32>
    %56 = vector.extract_strided_slice %50 {offsets = [0, 63], sizes = [4, 640], strides = [1, 1]} : vector<4x768xf32> to vector<4x640xf32>
    %57 = arith.mulf %56, %7 : vector<4x640xf32>
    %58 = vector.extract_strided_slice %50 {offsets = [0, 64], sizes = [4, 640], strides = [1, 1]} : vector<4x768xf32> to vector<4x640xf32>
    %59 = vector.extract_strided_slice %50 {offsets = [0, 65], sizes = [4, 640], strides = [1, 1]} : vector<4x768xf32> to vector<4x640xf32>
    %60 = arith.mulf %59, %9 : vector<4x640xf32>
    %61 = vector.extract_strided_slice %50 {offsets = [0, 79], sizes = [4, 640], strides = [1, 1]} : vector<4x768xf32> to vector<4x640xf32>
    %62 = arith.mulf %61, %7 : vector<4x640xf32>
    %63 = vector.extract_strided_slice %50 {offsets = [0, 80], sizes = [4, 640], strides = [1, 1]} : vector<4x768xf32> to vector<4x640xf32>
    %64 = vector.extract_strided_slice %50 {offsets = [0, 81], sizes = [4, 640], strides = [1, 1]} : vector<4x768xf32> to vector<4x640xf32>
    %65 = arith.mulf %64, %9 : vector<4x640xf32>
    %66 = tpu.concatenate %52, %53 in 0 : vector<4x640xf32>, vector<4x640xf32> -> vector<8x640xf32>
    %c0_37 = arith.constant 0 : index
    %c0_38 = arith.constant 0 : index
    %67 = vector.load %arg12[%c0_37, %c0_38] : memref<100x640xf32, #tpu.memory_space<vmem>>, vector<8x640xf32>
    tpu.vector_store %arg12[%c0_37, %c0_38], %66 {strides = array<i32>} : memref<100x640xf32, #tpu.memory_space<vmem>>, vector<8x640xf32>,
    %68 = tpu.concatenate %55, %57 in 0 : vector<4x640xf32>, vector<4x640xf32> -> vector<8x640xf32>
    %c8_39 = arith.constant 8 : index
    %c0_40 = arith.constant 0 : index
    %69 = vector.load %arg12[%c8_39, %c0_40] : memref<100x640xf32, #tpu.memory_space<vmem>>, vector<8x640xf32>
    tpu.vector_store %arg12[%c8_39, %c0_40], %68 {strides = array<i32>} : memref<100x640xf32, #tpu.memory_space<vmem>>, vector<8x640xf32>,
    %70 = tpu.concatenate %58, %60 in 0 : vector<4x640xf32>, vector<4x640xf32> -> vector<8x640xf32>
    %c16_41 = arith.constant 16 : index
    %c0_42 = arith.constant 0 : index
    %71 = vector.load %arg12[%c16_41, %c0_42] : memref<100x640xf32, #tpu.memory_space<vmem>>, vector<8x640xf32>
    tpu.vector_store %arg12[%c16_41, %c0_42], %70 {strides = array<i32>} : memref<100x640xf32, #tpu.memory_space<vmem>>, vector<8x640xf32>,
    %72 = tpu.concatenate %62, %63 in 0 : vector<4x640xf32>, vector<4x640xf32> -> vector<8x640xf32>
    %c24_43 = arith.constant 24 : index
    %c0_44 = arith.constant 0 : index
    %73 = vector.load %arg12[%c24_43, %c0_44] : memref<100x640xf32, #tpu.memory_space<vmem>>, vector<8x640xf32>
    tpu.vector_store %arg12[%c24_43, %c0_44], %72 {strides = array<i32>} : memref<100x640xf32, #tpu.memory_space<vmem>>, vector<8x640xf32>,
    %c32_45 = arith.constant 32 : index
    %c0_46 = arith.constant 0 : index
    %74 = vector.load %arg12[%c32_45, %c0_46] : memref<100x640xf32, #tpu.memory_space<vmem>>, vector<4x640xf32>
    tpu.vector_store %arg12[%c32_45, %c0_46], %65 {strides = array<i32>} : memref<100x640xf32, #tpu.memory_space<vmem>>, vector<4x640xf32>,
    %c0_47 = arith.constant 0 : index
    %c0_48 = arith.constant 0 : index
    %75 = vector.load %arg6[%c0_47, %c0_48] : memref<4x36xf32, #tpu.memory_space<vmem>>, vector<4x36xf32>
    %c0_49 = arith.constant 0 : index
    %c0_50 = arith.constant 0 : index
    %76 = vector.load %arg12[%c0_49, %c0_50] : memref<100x640xf32, #tpu.memory_space<vmem>>, vector<36x640xf32>
    %cst_51 = arith.constant dense<0.000000e+00> : vector<4x640xf32>
    %77 = tpu.matmul %75, %76, %cst_51 {dimension_numbers = #tpu.dot_dimension_numbers<[1], [0], [0], [1], [0, 0, 1, 1], [], []>} : vector<4x36xf32>, vector<36x640xf32>, vector<4x640xf32> -> vector<4x640xf32>
    %c0_52 = arith.constant 0 : index
    %c0_53 = arith.constant 0 : index
    %78 = vector.load %arg7[%c0_52, %c0_53] : memref<4x1xf32, #tpu.memory_space<vmem>>, vector<4x1xf32>
    %79 = vector.broadcast %78 : vector<4x1xf32> to vector<4x640xf32>
    %80 = arith.addf %77, %79 : vector<4x640xf32>
    %cst_54 = arith.constant 0.000000e+00 : f32
    %81 = vector.broadcast %cst_54 : f32 to vector<4x640xf32>
    %82 = arith.maximumf %80, %81 : vector<4x640xf32>
    %83 = arith.addf %82, %13 : vector<4x640xf32>
    %84 = arith.mulf %83, %12 : vector<4x640xf32>
    %c0_55 = arith.constant 0 : index
    %c64_56 = arith.constant 64 : index
    %85 = vector.load %arg11[%c0_55, %c64_56] : memref<4x768xf32, #tpu.memory_space<vmem>>, vector<4x640xf32>
    tpu.vector_store %arg11[%c0_55, %c64_56], %84 {strides = array<i32>} : memref<4x768xf32, #tpu.memory_space<vmem>>, vector<4x640xf32>,
    %c0_57 = arith.constant 0 : index
    %c0_58 = arith.constant 0 : index
    %86 = vector.load %arg11[%c0_57, %c0_58] : memref<4x768xf32, #tpu.memory_space<vmem>>, vector<4x768xf32>
    %87 = vector.extract_strided_slice %86 {offsets = [0, 30], sizes = [4, 640], strides = [1, 1]} : vector<4x768xf32> to vector<4x640xf32>
    %88 = arith.mulf %87, %5 : vector<4x640xf32>
    %89 = vector.extract_strided_slice %86 {offsets = [0, 31], sizes = [4, 640], strides = [1, 1]} : vector<4x768xf32> to vector<4x640xf32>
    %90 = arith.mulf %89, %7 : vector<4x640xf32>
    %91 = vector.extract_strided_slice %86 {offsets = [0, 32], sizes = [4, 640], strides = [1, 1]} : vector<4x768xf32> to vector<4x640xf32>
    %92 = vector.extract_strided_slice %86 {offsets = [0, 33], sizes = [4, 640], strides = [1, 1]} : vector<4x768xf32> to vector<4x640xf32>
    %93 = arith.mulf %92, %9 : vector<4x640xf32>
    %94 = vector.extract_strided_slice %86 {offsets = [0, 34], sizes = [4, 640], strides = [1, 1]} : vector<4x768xf32> to vector<4x640xf32>
    %95 = arith.mulf %94, %11 : vector<4x640xf32>
    %96 = vector.extract_strided_slice %86 {offsets = [0, 46], sizes = [4, 640], strides = [1, 1]} : vector<4x768xf32> to vector<4x640xf32>
    %97 = arith.mulf %96, %5 : vector<4x640xf32>
    %98 = vector.extract_strided_slice %86 {offsets = [0, 47], sizes = [4, 640], strides = [1, 1]} : vector<4x768xf32> to vector<4x640xf32>
    %99 = arith.mulf %98, %7 : vector<4x640xf32>
    %100 = vector.extract_strided_slice %86 {offsets = [0, 48], sizes = [4, 640], strides = [1, 1]} : vector<4x768xf32> to vector<4x640xf32>
    %101 = vector.extract_strided_slice %86 {offsets = [0, 49], sizes = [4, 640], strides = [1, 1]} : vector<4x768xf32> to vector<4x640xf32>
    %102 = arith.mulf %101, %9 : vector<4x640xf32>
    %103 = vector.extract_strided_slice %86 {offsets = [0, 50], sizes = [4, 640], strides = [1, 1]} : vector<4x768xf32> to vector<4x640xf32>
    %104 = arith.mulf %103, %11 : vector<4x640xf32>
    %105 = vector.extract_strided_slice %86 {offsets = [0, 62], sizes = [4, 640], strides = [1, 1]} : vector<4x768xf32> to vector<4x640xf32>
    %106 = arith.mulf %105, %5 : vector<4x640xf32>
    %107 = vector.extract_strided_slice %86 {offsets = [0, 63], sizes = [4, 640], strides = [1, 1]} : vector<4x768xf32> to vector<4x640xf32>
    %108 = arith.mulf %107, %7 : vector<4x640xf32>
    %109 = vector.extract_strided_slice %86 {offsets = [0, 64], sizes = [4, 640], strides = [1, 1]} : vector<4x768xf32> to vector<4x640xf32>
    %110 = vector.extract_strided_slice %86 {offsets = [0, 65], sizes = [4, 640], strides = [1, 1]} : vector<4x768xf32> to vector<4x640xf32>
    %111 = arith.mulf %110, %9 : vector<4x640xf32>
    %112 = vector.extract_strided_slice %86 {offsets = [0, 66], sizes = [4, 640], strides = [1, 1]} : vector<4x768xf32> to vector<4x640xf32>
    %113 = arith.mulf %112, %11 : vector<4x640xf32>
    %114 = vector.extract_strided_slice %86 {offsets = [0, 78], sizes = [4, 640], strides = [1, 1]} : vector<4x768xf32> to vector<4x640xf32>
    %115 = arith.mulf %114, %5 : vector<4x640xf32>
    %116 = vector.extract_strided_slice %86 {offsets = [0, 79], sizes = [4, 640], strides = [1, 1]} : vector<4x768xf32> to vector<4x640xf32>
    %117 = arith.mulf %116, %7 : vector<4x640xf32>
    %118 = vector.extract_strided_slice %86 {offsets = [0, 80], sizes = [4, 640], strides = [1, 1]} : vector<4x768xf32> to vector<4x640xf32>
    %119 = vector.extract_strided_slice %86 {offsets = [0, 81], sizes = [4, 640], strides = [1, 1]} : vector<4x768xf32> to vector<4x640xf32>
    %120 = arith.mulf %119, %9 : vector<4x640xf32>
    %121 = vector.extract_strided_slice %86 {offsets = [0, 82], sizes = [4, 640], strides = [1, 1]} : vector<4x768xf32> to vector<4x640xf32>
    %122 = arith.mulf %121, %11 : vector<4x640xf32>
    %123 = vector.extract_strided_slice %86 {offsets = [0, 94], sizes = [4, 640], strides = [1, 1]} : vector<4x768xf32> to vector<4x640xf32>
    %124 = arith.mulf %123, %5 : vector<4x640xf32>
    %125 = vector.extract_strided_slice %86 {offsets = [0, 95], sizes = [4, 640], strides = [1, 1]} : vector<4x768xf32> to vector<4x640xf32>
    %126 = arith.mulf %125, %7 : vector<4x640xf32>
    %127 = vector.extract_strided_slice %86 {offsets = [0, 96], sizes = [4, 640], strides = [1, 1]} : vector<4x768xf32> to vector<4x640xf32>
    %128 = vector.extract_strided_slice %86 {offsets = [0, 97], sizes = [4, 640], strides = [1, 1]} : vector<4x768xf32> to vector<4x640xf32>
    %129 = arith.mulf %128, %9 : vector<4x640xf32>
    %130 = vector.extract_strided_slice %86 {offsets = [0, 98], sizes = [4, 640], strides = [1, 1]} : vector<4x768xf32> to vector<4x640xf32>
    %131 = arith.mulf %130, %11 : vector<4x640xf32>
    %132 = tpu.concatenate %88, %90 in 0 : vector<4x640xf32>, vector<4x640xf32> -> vector<8x640xf32>
    %c0_59 = arith.constant 0 : index
    %c0_60 = arith.constant 0 : index
    %133 = vector.load %arg12[%c0_59, %c0_60] : memref<100x640xf32, #tpu.memory_space<vmem>>, vector<8x640xf32>
    tpu.vector_store %arg12[%c0_59, %c0_60], %132 {strides = array<i32>} : memref<100x640xf32, #tpu.memory_space<vmem>>, vector<8x640xf32>,
    %134 = tpu.concatenate %91, %93 in 0 : vector<4x640xf32>, vector<4x640xf32> -> vector<8x640xf32>
    %c8_61 = arith.constant 8 : index
    %c0_62 = arith.constant 0 : index
    %135 = vector.load %arg12[%c8_61, %c0_62] : memref<100x640xf32, #tpu.memory_space<vmem>>, vector<8x640xf32>
    tpu.vector_store %arg12[%c8_61, %c0_62], %134 {strides = array<i32>} : memref<100x640xf32, #tpu.memory_space<vmem>>, vector<8x640xf32>,
    %136 = tpu.concatenate %95, %97 in 0 : vector<4x640xf32>, vector<4x640xf32> -> vector<8x640xf32>
    %c16_63 = arith.constant 16 : index
    %c0_64 = arith.constant 0 : index
    %137 = vector.load %arg12[%c16_63, %c0_64] : memref<100x640xf32, #tpu.memory_space<vmem>>, vector<8x640xf32>
    tpu.vector_store %arg12[%c16_63, %c0_64], %136 {strides = array<i32>} : memref<100x640xf32, #tpu.memory_space<vmem>>, vector<8x640xf32>,
    %138 = tpu.concatenate %99, %100 in 0 : vector<4x640xf32>, vector<4x640xf32> -> vector<8x640xf32>
    %c24_65 = arith.constant 24 : index
    %c0_66 = arith.constant 0 : index
    %139 = vector.load %arg12[%c24_65, %c0_66] : memref<100x640xf32, #tpu.memory_space<vmem>>, vector<8x640xf32>
    tpu.vector_store %arg12[%c24_65, %c0_66], %138 {strides = array<i32>} : memref<100x640xf32, #tpu.memory_space<vmem>>, vector<8x640xf32>,
    %140 = tpu.concatenate %102, %104 in 0 : vector<4x640xf32>, vector<4x640xf32> -> vector<8x640xf32>
    %c32_67 = arith.constant 32 : index
    %c0_68 = arith.constant 0 : index
    %141 = vector.load %arg12[%c32_67, %c0_68] : memref<100x640xf32, #tpu.memory_space<vmem>>, vector<8x640xf32>
    tpu.vector_store %arg12[%c32_67, %c0_68], %140 {strides = array<i32>} : memref<100x640xf32, #tpu.memory_space<vmem>>, vector<8x640xf32>,
    %142 = tpu.concatenate %106, %108 in 0 : vector<4x640xf32>, vector<4x640xf32> -> vector<8x640xf32>
    %c40 = arith.constant 40 : index
    %c0_69 = arith.constant 0 : index
    %143 = vector.load %arg12[%c40, %c0_69] : memref<100x640xf32, #tpu.memory_space<vmem>>, vector<8x640xf32>
    tpu.vector_store %arg12[%c40, %c0_69], %142 {strides = array<i32>} : memref<100x640xf32, #tpu.memory_space<vmem>>, vector<8x640xf32>,
    %144 = tpu.concatenate %109, %111 in 0 : vector<4x640xf32>, vector<4x640xf32> -> vector<8x640xf32>
    %c48 = arith.constant 48 : index
    %c0_70 = arith.constant 0 : index
    %145 = vector.load %arg12[%c48, %c0_70] : memref<100x640xf32, #tpu.memory_space<vmem>>, vector<8x640xf32>
    tpu.vector_store %arg12[%c48, %c0_70], %144 {strides = array<i32>} : memref<100x640xf32, #tpu.memory_space<vmem>>, vector<8x640xf32>,
    %146 = tpu.concatenate %113, %115 in 0 : vector<4x640xf32>, vector<4x640xf32> -> vector<8x640xf32>
    %c56 = arith.constant 56 : index
    %c0_71 = arith.constant 0 : index
    %147 = vector.load %arg12[%c56, %c0_71] : memref<100x640xf32, #tpu.memory_space<vmem>>, vector<8x640xf32>
    tpu.vector_store %arg12[%c56, %c0_71], %146 {strides = array<i32>} : memref<100x640xf32, #tpu.memory_space<vmem>>, vector<8x640xf32>,
    %148 = tpu.concatenate %117, %118 in 0 : vector<4x640xf32>, vector<4x640xf32> -> vector<8x640xf32>
    %c64_72 = arith.constant 64 : index
    %c0_73 = arith.constant 0 : index
    %149 = vector.load %arg12[%c64_72, %c0_73] : memref<100x640xf32, #tpu.memory_space<vmem>>, vector<8x640xf32>
    tpu.vector_store %arg12[%c64_72, %c0_73], %148 {strides = array<i32>} : memref<100x640xf32, #tpu.memory_space<vmem>>, vector<8x640xf32>,
    %150 = tpu.concatenate %120, %122 in 0 : vector<4x640xf32>, vector<4x640xf32> -> vector<8x640xf32>
    %c72 = arith.constant 72 : index
    %c0_74 = arith.constant 0 : index
    %151 = vector.load %arg12[%c72, %c0_74] : memref<100x640xf32, #tpu.memory_space<vmem>>, vector<8x640xf32>
    tpu.vector_store %arg12[%c72, %c0_74], %150 {strides = array<i32>} : memref<100x640xf32, #tpu.memory_space<vmem>>, vector<8x640xf32>,
    %152 = tpu.concatenate %124, %126 in 0 : vector<4x640xf32>, vector<4x640xf32> -> vector<8x640xf32>
    %c80 = arith.constant 80 : index
    %c0_75 = arith.constant 0 : index
    %153 = vector.load %arg12[%c80, %c0_75] : memref<100x640xf32, #tpu.memory_space<vmem>>, vector<8x640xf32>
    tpu.vector_store %arg12[%c80, %c0_75], %152 {strides = array<i32>} : memref<100x640xf32, #tpu.memory_space<vmem>>, vector<8x640xf32>,
    %154 = tpu.concatenate %127, %129 in 0 : vector<4x640xf32>, vector<4x640xf32> -> vector<8x640xf32>
    %c88 = arith.constant 88 : index
    %c0_76 = arith.constant 0 : index
    %155 = vector.load %arg12[%c88, %c0_76] : memref<100x640xf32, #tpu.memory_space<vmem>>, vector<8x640xf32>
    tpu.vector_store %arg12[%c88, %c0_76], %154 {strides = array<i32>} : memref<100x640xf32, #tpu.memory_space<vmem>>, vector<8x640xf32>,
    %c96 = arith.constant 96 : index
    %c0_77 = arith.constant 0 : index
    %156 = vector.load %arg12[%c96, %c0_77] : memref<100x640xf32, #tpu.memory_space<vmem>>, vector<4x640xf32>
    tpu.vector_store %arg12[%c96, %c0_77], %131 {strides = array<i32>} : memref<100x640xf32, #tpu.memory_space<vmem>>, vector<4x640xf32>,
    %c0_78 = arith.constant 0 : index
    %c0_79 = arith.constant 0 : index
    %157 = vector.load %arg8[%c0_78, %c0_79] : memref<1x100xf32, #tpu.memory_space<vmem>>, vector<1x100xf32>
    %c0_80 = arith.constant 0 : index
    %c0_81 = arith.constant 0 : index
    %158 = vector.load %arg12[%c0_80, %c0_81] : memref<100x640xf32, #tpu.memory_space<vmem>>, vector<100x640xf32>
    %cst_82 = arith.constant dense<0.000000e+00> : vector<1x640xf32>
    %159 = tpu.matmul %157, %158, %cst_82 {dimension_numbers = #tpu.dot_dimension_numbers<[1], [0], [0], [1], [0, 0, 1, 1], [], []>} : vector<1x100xf32>, vector<100x640xf32>, vector<1x640xf32> -> vector<1x640xf32>
    %c0_83 = arith.constant 0 : index
    %c0_84 = arith.constant 0 : index
    %160 = vector.load %arg9[%c0_83, %c0_84] : memref<1x1xf32, #tpu.memory_space<vmem>>, vector<1x1xf32>
    %161 = vector.broadcast %160 : vector<1x1xf32> to vector<1x640xf32>
    %162 = arith.addf %159, %161 : vector<1x640xf32>
    %c0_85 = arith.constant 0 : index
    %c0_86 = arith.constant 0 : index
    %163 = vector.load %arg10[%c0_85, %c0_86] : memref<1x640xf32, #tpu.memory_space<vmem>>, vector<1x640xf32>
    tpu.vector_store %arg10[%c0_85, %c0_86], %162 {strides = array<i32>} : memref<1x640xf32, #tpu.memory_space<vmem>>, vector<1x640xf32>,
    return
  }
  func.func @transform_0(%arg0: i32) -> (i32, i32) {
    %c0_i32 = arith.constant 0 : i32
    %c0_i32_0 = arith.constant 0 : i32
    return %c0_i32, %arg0 : i32, i32
  }
  func.func @transform_1(%arg0: i32) -> (i32, i32, i32) {
    %c0_i32 = arith.constant 0 : i32
    %c0_i32_0 = arith.constant 0 : i32
    %c0_i32_1 = arith.constant 0 : i32
    %c0_i32_2 = arith.constant 0 : i32
    return %c0_i32, %c0_i32_0, %c0_i32_1 : i32, i32, i32
  }
  func.func @transform_2(%arg0: i32) -> (i32, i32) {
    %c0_i32 = arith.constant 0 : i32
    %c0_i32_0 = arith.constant 0 : i32
    %c0_i32_1 = arith.constant 0 : i32
    return %c0_i32, %c0_i32_0 : i32, i32
  }
  func.func @transform_3(%arg0: i32) -> (i32, i32) {
    %c0_i32 = arith.constant 0 : i32
    %c0_i32_0 = arith.constant 0 : i32
    %c0_i32_1 = arith.constant 0 : i32
    return %c0_i32, %c0_i32_0 : i32, i32
  }
  func.func @transform_4(%arg0: i32) -> (i32, i32) {
    %c0_i32 = arith.constant 0 : i32
    %c0_i32_0 = arith.constant 0 : i32
    %c0_i32_1 = arith.constant 0 : i32
    return %c0_i32, %c0_i32_0 : i32, i32
  }
  func.func @transform_5(%arg0: i32) -> (i32, i32) {
    %c0_i32 = arith.constant 0 : i32
    %c0_i32_0 = arith.constant 0 : i32
    %c0_i32_1 = arith.constant 0 : i32
    return %c0_i32, %c0_i32_0 : i32, i32
  }
  func.func @transform_6(%arg0: i32) -> (i32, i32) {
    %c0_i32 = arith.constant 0 : i32
    %c0_i32_0 = arith.constant 0 : i32
    %c0_i32_1 = arith.constant 0 : i32
    return %c0_i32, %c0_i32_0 : i32, i32
  }
  func.func @transform_7(%arg0: i32) -> (i32, i32) {
    %c0_i32 = arith.constant 0 : i32
    %c0_i32_0 = arith.constant 0 : i32
    %c0_i32_1 = arith.constant 0 : i32
    return %c0_i32, %c0_i32_0 : i32, i32
  }
  func.func @transform_8(%arg0: i32) -> (i32, i32) {
    %c0_i32 = arith.constant 0 : i32
    %c0_i32_0 = arith.constant 0 : i32
    %c0_i32_1 = arith.constant 0 : i32
    return %c0_i32, %c0_i32_0 : i32, i32
  }
  func.func @transform_9(%arg0: i32) -> (i32, i32) {
    %c0_i32 = arith.constant 0 : i32
    %c0_i32_0 = arith.constant 0 : i32
    return %c0_i32, %arg0 : i32, i32
  }
}

</mosaic_0001>

<llo_original>
// kernel: convd_forward.1
$region0: #{convd_forward.1}
  #allocation0 [shape = 'u32[]', space=smem, size = 0x4, offset = 0x4, fixed_abs, tag = 'smem constant byte address 0x4 - core index']
  #allocation1 [shape = 'u32[72,128]{1,0:T(1,128)}', space=vmem, size = 0x9000, scoped, tag = 'internal scratch']
  #allocation2 [shape = 'f32[4,768]{1,0:T(4,128)}', space=vmem, size = 0x3000, scoped, tag = 'scratch operand']
  #allocation3 [shape = 'f32[100,640]{1,0:T(8,128)}', space=vmem, size = 0x41000, scoped, tag = 'scratch operand']
  #allocation4 [shape = 'f32[1,1]{1,0:T(1,128)S(1)}', space=vmem, size = 0x200, scoped, tag = 'scoped memory for convd_forward.1']
  %s0 = inlined_call_operand.vmem [shape: f32[4,640], index: 0, kind: input, shape index: {}]
  %s1 = inlined_call_operand.vmem [shape: f32[5,4,640], index: 1, kind: input, shape index: {}]
  %s2 = inlined_call_operand.vmem [shape: f32[4,640], index: 2, kind: input, shape index: {}]
  %s3 = inlined_call_operand.vmem [shape: f32[4,36], index: 3, kind: input, shape index: {}]
  %s4 = inlined_call_operand.vmem [shape: f32[4,1], index: 4, kind: input, shape index: {}]
  %s5 = inlined_call_operand.vmem [shape: f32[4,36], index: 5, kind: input, shape index: {}]
  %s6 = inlined_call_operand.vmem [shape: f32[4,1], index: 6, kind: input, shape index: {}]
  %s7 = inlined_call_operand.vmem [shape: f32[1,100], index: 7, kind: input, shape index: {}]
  %s8 = inlined_call_operand.<no memory space> [shape: f32[1,1], index: 8, kind: input, shape index: {}]
  %s9 = inlined_call_operand.vmem [shape: f32[1,640], index: 9, kind: output, shape index: {}]
  %s10 = sld [smem:[#allocation0]]
  $region46: #{convd_forward.1} parent=0
    _
  %s12 = ssub.s32 1, %s10
  %s13 = scalar_select 0, %s12, %s10
  %v14 = vstv %s8
  %15 = vst [vmem:[#allocation4] sm:$0x1] %v14
  // Predicated region
  $region2: #{convd_forward.1} parent=0 // pred_check
    _
  $region3: #{convd_forward.1} parent=0 // pred_check_branch
    %17 = sbr.rel (0) target = $region5
  $region4: #{convd_forward.1} parent=0 // pred_region
    _
  $region5: #{convd_forward.1} parent=0 // pred_fallthru
    _
  // Predicated region
  $region6: #{convd_forward.1} parent=0 // pred_check
    _
  $region7: #{convd_forward.1} parent=0 // pred_check_branch
    %19 = sbr.rel (0) target = $region9
  $region8: #{convd_forward.1} parent=0 // pred_region
    _
  $region9: #{convd_forward.1} parent=0 // pred_fallthru
    _
  // Predicated region
  $region10: #{convd_forward.1} parent=0 // pred_check
    _
  $region11: #{convd_forward.1} parent=0 // pred_check_branch
    %21 = sbr.rel (0) target = $region13
  $region12: #{convd_forward.1} parent=0 // pred_region
    _
  $region13: #{convd_forward.1} parent=0 // pred_fallthru
    _
  // Predicated region
  $region14: #{convd_forward.1} parent=0 // pred_check
    _
  $region15: #{convd_forward.1} parent=0 // pred_check_branch
    %23 = sbr.rel (0) target = $region17
  $region16: #{convd_forward.1} parent=0 // pred_region
    _
  $region17: #{convd_forward.1} parent=0 // pred_fallthru
    _
  // Predicated region
  $region18: #{convd_forward.1} parent=0 // pred_check
    _
  $region19: #{convd_forward.1} parent=0 // pred_check_branch
    %25 = sbr.rel (0) target = $region21
  $region20: #{convd_forward.1} parent=0 // pred_region
    _
  $region21: #{convd_forward.1} parent=0 // pred_fallthru
    _
  // Predicated region
  $region22: #{convd_forward.1} parent=0 // pred_check
    _
  $region23: #{convd_forward.1} parent=0 // pred_check_branch
    %27 = sbr.rel (0) target = $region25
  $region24: #{convd_forward.1} parent=0 // pred_region
    _
  $region25: #{convd_forward.1} parent=0 // pred_fallthru
    _
  // Predicated region
  $region26: #{convd_forward.1} parent=0 // pred_check
    _
  $region27: #{convd_forward.1} parent=0 // pred_check_branch
    %29 = sbr.rel (0) target = $region29
  $region28: #{convd_forward.1} parent=0 // pred_region
    _
  $region29: #{convd_forward.1} parent=0 // pred_fallthru
    _
  // Predicated region
  $region30: #{convd_forward.1} parent=0 // pred_check
    _
  $region31: #{convd_forward.1} parent=0 // pred_check_branch
    %31 = sbr.rel (0) target = $region33
  $region32: #{convd_forward.1} parent=0 // pred_region
    _
  $region33: #{convd_forward.1} parent=0 // pred_fallthru
    _
  // Predicated region
  $region34: #{convd_forward.1} parent=0 // pred_check
    _
  $region35: #{convd_forward.1} parent=0 // pred_check_branch
    %33 = sbr.rel (0) target = $region37
  $region36: #{convd_forward.1} parent=0 // pred_region
    _
  $region37: #{convd_forward.1} parent=0 // pred_fallthru
    _
  %vm34 = vcmask 519168
  %35 = vst.msk [vmem:[#allocation2] sm:$0xf] %vm34, 0.0
  %vm36 = vcmask 1043968
  %37 = vst.msk [vmem:[#allocation2 + $0x14] sm:$0xf] %vm36, 0.0
  %v38 = vld [vmem:[%s1] sm:$0xff]
  %v39 = vld [vmem:[%s1 + $0x8] sm:$0xff]
  %v40 = vld [vmem:[%s1 + $0x10] sm:$0xf]
  %s41 = scalar_lea.vmem %s1, 20
  %v42 = vld [vmem:[%s41] sm:$0xff]
  %v43 = vld [vmem:[%s41 + $0x8] sm:$0xff]
  %v44 = vld [vmem:[%s41 + $0x10] sm:$0xf]
  %s45 = scalar_lea.vmem %s1, 60
  %v46 = vld [vmem:[%s45] sm:$0xff]
  %v47 = vld [vmem:[%s45 + $0x8] sm:$0xff]
  %v48 = vld [vmem:[%s45 + $0x10] sm:$0xf]
  %s49 = scalar_lea.vmem %s1, 80
  %v50 = vld [vmem:[%s49] sm:$0xff]
  %v51 = vld [vmem:[%s49 + $0x8] sm:$0xff]
  %v52 = vld [vmem:[%s49 + $0x10] sm:$0xf]
  %v53 = vld [vmem:[%s2] sm:$0xff]
  %v54 = vld [vmem:[%s2 + $0x8] sm:$0xff]
  %v55 = vld [vmem:[%s2 + $0x10] sm:$0xf]
  %v56 = vld [vmem:[%s0] sm:$0xff]
  %v57 = vld [vmem:[%s0 + $0x8] sm:$0xff]
  %v58 = vld [vmem:[%s0 + $0x10] sm:$0xf]
  %62 = vrot.lane.b32.xlu0 %v56, 64
  %v63 = vpop.permute.xlu0 %62
  %64 = vrot.lane.b32.xlu0 %v57, 64
  %v65 = vpop.permute.xlu0 %64
  %66 = vrot.lane.b32.xlu0 %v58, 64
  %v67 = vpop.permute.xlu0 %66
  %v68 = vrot.slane %v63, 4
  %v69 = vrot.slane %v65, 4
  %v70 = vrot.slane %v67, 4
  %vm71 = vcmask 523264
  %v72 = vsel %vm71, %v68, %v63
  %vm73 = vcmask 1043456
  %v74 = vsel %vm73, %v68, %v69
  %v75 = vsel %vm71, %v74, %v65
  %v76 = vsel %vm73, %v69, %v70
  %v77 = vsel %vm71, %v76, %v67
  %vm81 = vcmask 1047556
  %vm82 = vmor %vm81, %vm36
  %83 = vst.msk [vmem:[#allocation2] sm:$0xff] %vm82, %v72
  %84 = vst [vmem:[#allocation2 + $0x8] sm:$0xff] %v75
  %vm85 = vcmask 523268
  %vm86 = vmor %vm85, %vm73
  %87 = vst.msk [vmem:[#allocation2 + $0x10] sm:$0xff] %vm86, %v77
  %v88 = vld [vmem:[#allocation2] sm:$0xff]
  %v89 = vld [vmem:[#allocation2 + $0x8] sm:$0xff]
  %v90 = vld [vmem:[#allocation2 + $0x10] sm:$0xff]
  %94 = vrot.lane.b32.xlu0 %v42, 47
  %v95 = vpop.permute.xlu0 %94
  %96 = vrot.lane.b32.xlu0 %v43, 47
  %v97 = vpop.permute.xlu0 %96
  %98 = vrot.lane.b32.xlu0 %v44, 47
  %v99 = vpop.permute.xlu0 %98
  %v100 = vrot.slane %v95, 4
  %v101 = vrot.slane %v97, 4
  %v102 = vrot.slane %v99, 4
  %vm103 = vcmask 384000
  %v104 = vsel %vm103, %v100, %v95
  %v105 = vsel %vm73, %v100, %v101
  %v106 = vsel %vm103, %v105, %v97
  %v107 = vsel %vm73, %v101, %v102
  %v108 = vsel %vm103, %v107, %v99
  %v112 = vmul.f32 %v88, %v104
  %v113 = vmul.f32 %v89, %v106
  %v114 = vmul.f32 %v90, %v108
  %118 = vrot.lane.b32.xlu0 %v46, 49
  %v119 = vpop.permute.xlu0 %118
  %120 = vrot.lane.b32.xlu0 %v47, 49
  %v121 = vpop.permute.xlu0 %120
  %122 = vrot.lane.b32.xlu0 %v48, 49
  %v123 = vpop.permute.xlu0 %122
  %v124 = vrot.slane %v119, 4
  %v125 = vrot.slane %v121, 4
  %v126 = vrot.slane %v123, 4
  %vm127 = vcmask 400384
  %v128 = vsel %vm127, %v124, %v119
  %v129 = vsel %vm73, %v124, %v125
  %v130 = vsel %vm127, %v129, %v121
  %v131 = vsel %vm73, %v125, %v126
  %v132 = vsel %vm127, %v131, %v123
  %v136 = vmul.f32 %v88, %v128
  %v137 = vmul.f32 %v89, %v130
  %v138 = vmul.f32 %v90, %v132
  %139 = vrot.lane.b32.xlu0 %v42, 63
  %v140 = vpop.permute.xlu0 %139
  %141 = vrot.lane.b32.xlu0 %v43, 63
  %v142 = vpop.permute.xlu0 %141
  %143 = vrot.lane.b32.xlu0 %v44, 63
  %v144 = vpop.permute.xlu0 %143
  %v145 = vrot.slane %v140, 4
  %v146 = vrot.slane %v142, 4
  %v147 = vrot.slane %v144, 4
  %vm148 = vcmask 515072
  %v149 = vsel %vm148, %v145, %v140
  %v150 = vsel %vm73, %v145, %v146
  %v151 = vsel %vm148, %v150, %v142
  %v152 = vsel %vm73, %v146, %v147
  %v153 = vsel %vm148, %v152, %v144
  %v157 = vmul.f32 %v88, %v149
  %v158 = vmul.f32 %v89, %v151
  %v159 = vmul.f32 %v90, %v153
  %160 = vrot.lane.b32.xlu0 %v46, 65
  %v161 = vpop.permute.xlu0 %160
  %162 = vrot.lane.b32.xlu0 %v47, 65
  %v163 = vpop.permute.xlu0 %162
  %164 = vrot.lane.b32.xlu0 %v48, 65
  %v165 = vpop.permute.xlu0 %164
  %v166 = vrot.slane %v161, 4
  %v167 = vrot.slane %v163, 4
  %v168 = vrot.slane %v165, 4
  %vm169 = vcmask 531456
  %v170 = vsel %vm169, %v166, %v161
  %v171 = vsel %vm73, %v166, %v167
  %v172 = vsel %vm169, %v171, %v163
  %v173 = vsel %vm73, %v167, %v168
  %v174 = vsel %vm169, %v173, %v165
  %v178 = vmul.f32 %v88, %v170
  %v179 = vmul.f32 %v89, %v172
  %v180 = vmul.f32 %v90, %v174
  %181 = vrot.lane.b32.xlu0 %v42, 79
  %v182 = vpop.permute.xlu0 %181
  %183 = vrot.lane.b32.xlu0 %v43, 79
  %v184 = vpop.permute.xlu0 %183
  %185 = vrot.lane.b32.xlu0 %v44, 79
  %v186 = vpop.permute.xlu0 %185
  %v187 = vrot.slane %v182, 4
  %v188 = vrot.slane %v184, 4
  %v189 = vrot.slane %v186, 4
  %vm190 = vcmask 646144
  %v191 = vsel %vm190, %v187, %v182
  %v192 = vsel %vm73, %v187, %v188
  %v193 = vsel %vm190, %v192, %v184
  %v194 = vsel %vm73, %v188, %v189
  %v195 = vsel %vm190, %v194, %v186
  %v199 = vmul.f32 %v88, %v191
  %v200 = vmul.f32 %v89, %v193
  %v201 = vmul.f32 %v90, %v195
  %202 = vrot.lane.b32.xlu0 %v46, 81
  %v203 = vpop.permute.xlu0 %202
  %204 = vrot.lane.b32.xlu0 %v47, 81
  %v205 = vpop.permute.xlu0 %204
  %206 = vrot.lane.b32.xlu0 %v48, 81
  %v207 = vpop.permute.xlu0 %206
  %v208 = vrot.slane %v203, 4
  %v209 = vrot.slane %v205, 4
  %v210 = vrot.slane %v207, 4
  %vm211 = vcmask 662528
  %v212 = vsel %vm211, %v208, %v203
  %v213 = vsel %vm73, %v208, %v209
  %v214 = vsel %vm211, %v213, %v205
  %v215 = vsel %vm73, %v209, %v210
  %v216 = vsel %vm211, %v215, %v207
  %v220 = vmul.f32 %v88, %v212
  %v221 = vmul.f32 %v89, %v214
  %v222 = vmul.f32 %v90, %v216
  %226 = vst [vmem:[#allocation1] ss:$2 sm:$0xff] %v112
  %s227 = scalar_lea.vmem [#allocation1], 16
  %228 = vst [vmem:[%s227] ss:$2 sm:$0xff] %v113
  %s229 = scalar_lea.vmem [#allocation1], 32
  %230 = vst [vmem:[%s229] ss:$2 sm:$0xff] %v114
  %v231 = vld.sshfl [vmem:[#allocation1] sm:$0xff pattern:$0x75316420]
  %v232 = vld.sshfl [vmem:[#allocation1 + $0x8] sm:$0xff pattern:$0x75316420]
  %v233 = vld.sshfl [vmem:[#allocation1 + $0x10] sm:$0xff pattern:$0x75316420]
  %v234 = vld.sshfl [vmem:[#allocation1 + $0x18] sm:$0xff pattern:$0x75316420]
  %v235 = vld.sshfl [vmem:[#allocation1 + $0x20] sm:$0xff pattern:$0x75316420]
  %v236 = vld.sshfl [vmem:[#allocation1 + $0x28] sm:$0xff pattern:$0x75316420]
  %s246 = scalar_lea.vmem [#allocation1], 1
  %247 = vst [vmem:[%s246] ss:$2 sm:$0xff] %v88
  %s248 = scalar_lea.vmem [#allocation1], 17
  %249 = vst [vmem:[%s248] ss:$2 sm:$0xff] %v89
  %s250 = scalar_lea.vmem [#allocation1], 33
  %251 = vst [vmem:[%s250] ss:$2 sm:$0xff] %v90
  %v252 = vld.sshfl [vmem:[#allocation1] sm:$0xff pattern:$0x75316420]
  %v253 = vld.sshfl [vmem:[#allocation1 + $0x8] sm:$0xff pattern:$0x75316420]
  %v254 = vld.sshfl [vmem:[#allocation1 + $0x10] sm:$0xff pattern:$0x75316420]
  %v255 = vld.sshfl [vmem:[#allocation1 + $0x18] sm:$0xff pattern:$0x75316420]
  %v256 = vld.sshfl [vmem:[#allocation1 + $0x20] sm:$0xff pattern:$0x75316420]
  %v257 = vld.sshfl [vmem:[#allocation1 + $0x28] sm:$0xff pattern:$0x75316420]
  %258 = vrot.lane.b32.xlu0 %v252, 127
  %v259 = vpop.permute.xlu0 %258
  %260 = vrot.lane.b32.xlu0 %v253, 127
  %v261 = vpop.permute.xlu0 %260
  %262 = vrot.lane.b32.xlu0 %v254, 127
  %v263 = vpop.permute.xlu0 %262
  %264 = vrot.lane.b32.xlu0 %v255, 127
  %v265 = vpop.permute.xlu0 %264
  %266 = vrot.lane.b32.xlu0 %v256, 127
  %v267 = vpop.permute.xlu0 %266
  %268 = vrot.lane.b32.xlu0 %v257, 127
  %v269 = vpop.permute.xlu0 %268
  %vm270 = vcmask 1039360
  %v271 = vsel %vm270, %v259, %v261
  %v272 = vsel %vm270, %v261, %v263
  %v273 = vsel %vm270, %v263, %v265
  %v274 = vsel %vm270, %v265, %v267
  %v275 = vsel %vm270, %v267, %v269
  %v282 = vsel %vm73, %v231, %v271
  %v283 = vsel %vm73, %v232, %v272
  %v284 = vsel %vm73, %v233, %v273
  %v285 = vsel %vm73, %v234, %v274
  %v286 = vsel %vm73, %v235, %v275
  %v287 = vsel %vm73, %v236, %v269
  %294 = vrot.lane.b32.xlu0 %v282, 81
  %v295 = vpop.permute.xlu0 %294
  %296 = vrot.lane.b32.xlu0 %v283, 81
  %v297 = vpop.permute.xlu0 %296
  %298 = vrot.lane.b32.xlu0 %v284, 81
  %v299 = vpop.permute.xlu0 %298
  %300 = vrot.lane.b32.xlu0 %v285, 81
  %v301 = vpop.permute.xlu0 %300
  %302 = vrot.lane.b32.xlu0 %v286, 81
  %v303 = vpop.permute.xlu0 %302
  %304 = vrot.lane.b32.xlu0 %v287, 81
  %v305 = vpop.permute.xlu0 %304
  %v306 = vsel %vm211, %v295, %v297
  %v307 = vsel %vm211, %v297, %v299
  %v308 = vsel %vm211, %v299, %v301
  %v309 = vsel %vm211, %v301, %v303
  %v310 = vsel %vm211, %v303, %v305
  %316 = vst [vmem:[#allocation3] sm:$0xff] %v306
  %317 = vst [vmem:[#allocation3 + $0x8] sm:$0xff] %v307
  %318 = vst [vmem:[#allocation3 + $0x10] sm:$0xff] %v308
  %319 = vst [vmem:[#allocation3 + $0x18] sm:$0xff] %v309
  %320 = vst [vmem:[#allocation3 + $0x20] sm:$0xff] %v310
  %324 = vst [vmem:[#allocation1] ss:$2 sm:$0xff] %v136
  %s325 = scalar_lea.vmem [#allocation1], 16
  %326 = vst [vmem:[%s325] ss:$2 sm:$0xff] %v137
  %s327 = scalar_lea.vmem [#allocation1], 32
  %328 = vst [vmem:[%s327] ss:$2 sm:$0xff] %v138
  %v329 = vld.sshfl [vmem:[#allocation1] sm:$0xff pattern:$0x75316420]
  %v330 = vld.sshfl [vmem:[#allocation1 + $0x8] sm:$0xff pattern:$0x75316420]
  %v331 = vld.sshfl [vmem:[#allocation1 + $0x10] sm:$0xff pattern:$0x75316420]
  %v332 = vld.sshfl [vmem:[#allocation1 + $0x18] sm:$0xff pattern:$0x75316420]
  %v333 = vld.sshfl [vmem:[#allocation1 + $0x20] sm:$0xff pattern:$0x75316420]
  %v334 = vld.sshfl [vmem:[#allocation1 + $0x28] sm:$0xff pattern:$0x75316420]
  %s344 = scalar_lea.vmem [#allocation1], 1
  %345 = vst [vmem:[%s344] ss:$2 sm:$0xff] %v157
  %s346 = scalar_lea.vmem [#allocation1], 17
  %347 = vst [vmem:[%s346] ss:$2 sm:$0xff] %v158
  %s348 = scalar_lea.vmem [#allocation1], 33
  %349 = vst [vmem:[%s348] ss:$2 sm:$0xff] %v159
  %v350 = vld.sshfl [vmem:[#allocation1] sm:$0xff pattern:$0x75316420]
  %v351 = vld.sshfl [vmem:[#allocation1 + $0x8] sm:$0xff pattern:$0x75316420]
  %v352 = vld.sshfl [vmem:[#allocation1 + $0x10] sm:$0xff pattern:$0x75316420]
  %v353 = vld.sshfl [vmem:[#allocation1 + $0x18] sm:$0xff pattern:$0x75316420]
  %v354 = vld.sshfl [vmem:[#allocation1 + $0x20] sm:$0xff pattern:$0x75316420]
  %v355 = vld.sshfl [vmem:[#allocation1 + $0x28] sm:$0xff pattern:$0x75316420]
  %356 = vrot.lane.b32.xlu0 %v350, 114
  %v357 = vpop.permute.xlu0 %356
  %358 = vrot.lane.b32.xlu0 %v351, 114
  %v359 = vpop.permute.xlu0 %358
  %360 = vrot.lane.b32.xlu0 %v352, 114
  %v361 = vpop.permute.xlu0 %360
  %362 = vrot.lane.b32.xlu0 %v353, 114
  %v363 = vpop.permute.xlu0 %362
  %364 = vrot.lane.b32.xlu0 %v354, 114
  %v365 = vpop.permute.xlu0 %364
  %366 = vrot.lane.b32.xlu0 %v355, 114
  %v367 = vpop.permute.xlu0 %366
  %vm368 = vcmask 932864
  %v369 = vsel %vm368, %v357, %v359
  %v370 = vsel %vm368, %v359, %v361
  %v371 = vsel %vm368, %v361, %v363
  %v372 = vsel %vm368, %v363, %v365
  %v373 = vsel %vm368, %v365, %v367
  %v380 = vsel %vm73, %v329, %v369
  %v381 = vsel %vm73, %v330, %v370
  %v382 = vsel %vm73, %v331, %v371
  %v383 = vsel %vm73, %v332, %v372
  %v384 = vsel %vm73, %v333, %v373
  %v385 = vsel %vm73, %v334, %v367
  %392 = vrot.lane.b32.xlu0 %v380, 79
  %v393 = vpop.permute.xlu0 %392
  %394 = vrot.lane.b32.xlu0 %v381, 79
  %v395 = vpop.permute.xlu0 %394
  %396 = vrot.lane.b32.xlu0 %v382, 79
  %v397 = vpop.permute.xlu0 %396
  %398 = vrot.lane.b32.xlu0 %v383, 79
  %v399 = vpop.permute.xlu0 %398
  %400 = vrot.lane.b32.xlu0 %v384, 79
  %v401 = vpop.permute.xlu0 %400
  %402 = vrot.lane.b32.xlu0 %v385, 79
  %v403 = vpop.permute.xlu0 %402
  %v404 = vsel %vm190, %v393, %v395
  %v405 = vsel %vm190, %v395, %v397
  %v406 = vsel %vm190, %v397, %v399
  %v407 = vsel %vm190, %v399, %v401
  %v408 = vsel %vm190, %v401, %v403
  %414 = vst [vmem:[#allocation3 + $0x28] sm:$0xff] %v404
  %415 = vst [vmem:[#allocation3 + $0x30] sm:$0xff] %v405
  %416 = vst [vmem:[#allocation3 + $0x38] sm:$0xff] %v406
  %417 = vst [vmem:[#allocation3 + $0x40] sm:$0xff] %v407
  %418 = vst [vmem:[#allocation3 + $0x48] sm:$0xff] %v408
  %419 = vst [vmem:[#allocation1] ss:$2 sm:$0xff] %v88
  %s420 = scalar_lea.vmem [#allocation1], 16
  %421 = vst [vmem:[%s420] ss:$2 sm:$0xff] %v89
  %s422 = scalar_lea.vmem [#allocation1], 32
  %423 = vst [vmem:[%s422] ss:$2 sm:$0xff] %v90
  %v424 = vld.sshfl [vmem:[#allocation1] sm:$0xff pattern:$0x75316420]
  %v425 = vld.sshfl [vmem:[#allocation1 + $0x8] sm:$0xff pattern:$0x75316420]
  %v426 = vld.sshfl [vmem:[#allocation1 + $0x10] sm:$0xff pattern:$0x75316420]
  %v427 = vld.sshfl [vmem:[#allocation1 + $0x18] sm:$0xff pattern:$0x75316420]
  %v428 = vld.sshfl [vmem:[#allocation1 + $0x20] sm:$0xff pattern:$0x75316420]
  %v429 = vld.sshfl [vmem:[#allocation1 + $0x28] sm:$0xff pattern:$0x75316420]
  %s439 = scalar_lea.vmem [#allocation1], 1
  %440 = vst [vmem:[%s439] ss:$2 sm:$0xff] %v178
  %s441 = scalar_lea.vmem [#allocation1], 17
  %442 = vst [vmem:[%s441] ss:$2 sm:$0xff] %v179
  %s443 = scalar_lea.vmem [#allocation1], 33
  %444 = vst [vmem:[%s443] ss:$2 sm:$0xff] %v180
  %v445 = vld.sshfl [vmem:[#allocation1] sm:$0xff pattern:$0x75316420]
  %v446 = vld.sshfl [vmem:[#allocation1 + $0x8] sm:$0xff pattern:$0x75316420]
  %v447 = vld.sshfl [vmem:[#allocation1 + $0x10] sm:$0xff pattern:$0x75316420]
  %v448 = vld.sshfl [vmem:[#allocation1 + $0x18] sm:$0xff pattern:$0x75316420]
  %v449 = vld.sshfl [vmem:[#allocation1 + $0x20] sm:$0xff pattern:$0x75316420]
  %v450 = vld.sshfl [vmem:[#allocation1 + $0x28] sm:$0xff pattern:$0x75316420]
  %451 = vrot.lane.b32.xlu0 %v445, 127
  %v452 = vpop.permute.xlu0 %451
  %453 = vrot.lane.b32.xlu0 %v446, 127
  %v454 = vpop.permute.xlu0 %453
  %455 = vrot.lane.b32.xlu0 %v447, 127
  %v456 = vpop.permute.xlu0 %455
  %457 = vrot.lane.b32.xlu0 %v448, 127
  %v458 = vpop.permute.xlu0 %457
  %459 = vrot.lane.b32.xlu0 %v449, 127
  %v460 = vpop.permute.xlu0 %459
  %461 = vrot.lane.b32.xlu0 %v450, 127
  %v462 = vpop.permute.xlu0 %461
  %v463 = vsel %vm270, %v452, %v454
  %v464 = vsel %vm270, %v454, %v456
  %v465 = vsel %vm270, %v456, %v458
  %v466 = vsel %vm270, %v458, %v460
  %v467 = vsel %vm270, %v460, %v462
  %v474 = vsel %vm73, %v424, %v463
  %v475 = vsel %vm73, %v425, %v464
  %v476 = vsel %vm73, %v426, %v465
  %v477 = vsel %vm73, %v427, %v466
  %v478 = vsel %vm73, %v428, %v467
  %v479 = vsel %vm73, %v429, %v462
  %486 = vrot.lane.b32.xlu0 %v474, 64
  %v487 = vpop.permute.xlu0 %486
  %488 = vrot.lane.b32.xlu0 %v475, 64
  %v489 = vpop.permute.xlu0 %488
  %490 = vrot.lane.b32.xlu0 %v476, 64
  %v491 = vpop.permute.xlu0 %490
  %492 = vrot.lane.b32.xlu0 %v477, 64
  %v493 = vpop.permute.xlu0 %492
  %494 = vrot.lane.b32.xlu0 %v478, 64
  %v495 = vpop.permute.xlu0 %494
  %496 = vrot.lane.b32.xlu0 %v479, 64
  %v497 = vpop.permute.xlu0 %496
  %v498 = vsel %vm71, %v487, %v489
  %v499 = vsel %vm71, %v489, %v491
  %v500 = vsel %vm71, %v491, %v493
  %v501 = vsel %vm71, %v493, %v495
  %v502 = vsel %vm71, %v495, %v497
  %508 = vst [vmem:[#allocation3 + $0x50] sm:$0xff] %v498
  %509 = vst [vmem:[#allocation3 + $0x58] sm:$0xff] %v499
  %510 = vst [vmem:[#allocation3 + $0x60] sm:$0xff] %v500
  %511 = vst [vmem:[#allocation3 + $0x68] sm:$0xff] %v501
  %512 = vst [vmem:[#allocation3 + $0x70] sm:$0xff] %v502
  %516 = vst [vmem:[#allocation1] ss:$2 sm:$0xff] %v199
  %s517 = scalar_lea.vmem [#allocation1], 16
  %518 = vst [vmem:[%s517] ss:$2 sm:$0xff] %v200
  %s519 = scalar_lea.vmem [#allocation1], 32
  %520 = vst [vmem:[%s519] ss:$2 sm:$0xff] %v201
  %v521 = vld.sshfl [vmem:[#allocation1] sm:$0xff pattern:$0x75316420]
  %v522 = vld.sshfl [vmem:[#allocation1 + $0x8] sm:$0xff pattern:$0x75316420]
  %v523 = vld.sshfl [vmem:[#allocation1 + $0x10] sm:$0xff pattern:$0x75316420]
  %v524 = vld.sshfl [vmem:[#allocation1 + $0x18] sm:$0xff pattern:$0x75316420]
  %v525 = vld.sshfl [vmem:[#allocation1 + $0x20] sm:$0xff pattern:$0x75316420]
  %v526 = vld.sshfl [vmem:[#allocation1 + $0x28] sm:$0xff pattern:$0x75316420]
  %s533 = scalar_lea.vmem [#allocation1], 1
  %534 = vst [vmem:[%s533] ss:$2 sm:$0xff] %v88
  %s535 = scalar_lea.vmem [#allocation1], 17
  %536 = vst [vmem:[%s535] ss:$2 sm:$0xff] %v89
  %s537 = scalar_lea.vmem [#allocation1], 33
  %538 = vst [vmem:[%s537] ss:$2 sm:$0xff] %v90
  %v539 = vld.sshfl [vmem:[#allocation1] sm:$0xff pattern:$0x75316420]
  %v540 = vld.sshfl [vmem:[#allocation1 + $0x8] sm:$0xff pattern:$0x75316420]
  %v541 = vld.sshfl [vmem:[#allocation1 + $0x10] sm:$0xff pattern:$0x75316420]
  %v542 = vld.sshfl [vmem:[#allocation1 + $0x18] sm:$0xff pattern:$0x75316420]
  %v543 = vld.sshfl [vmem:[#allocation1 + $0x20] sm:$0xff pattern:$0x75316420]
  %v544 = vld.sshfl [vmem:[#allocation1 + $0x28] sm:$0xff pattern:$0x75316420]
  %545 = vrot.lane.b32.xlu0 %v539, 127
  %v546 = vpop.permute.xlu0 %545
  %547 = vrot.lane.b32.xlu0 %v540, 127
  %v548 = vpop.permute.xlu0 %547
  %549 = vrot.lane.b32.xlu0 %v541, 127
  %v550 = vpop.permute.xlu0 %549
  %551 = vrot.lane.b32.xlu0 %v542, 127
  %v552 = vpop.permute.xlu0 %551
  %553 = vrot.lane.b32.xlu0 %v543, 127
  %v554 = vpop.permute.xlu0 %553
  %555 = vrot.lane.b32.xlu0 %v544, 127
  %v556 = vpop.permute.xlu0 %555
  %v557 = vsel %vm270, %v546, %v548
  %v558 = vsel %vm270, %v548, %v550
  %v559 = vsel %vm270, %v550, %v552
  %v560 = vsel %vm270, %v552, %v554
  %v561 = vsel %vm270, %v554, %v556
  %v568 = vsel %vm73, %v521, %v557
  %v569 = vsel %vm73, %v522, %v558
  %v570 = vsel %vm73, %v523, %v559
  %v571 = vsel %vm73, %v524, %v560
  %v572 = vsel %vm73, %v525, %v561
  %v573 = vsel %vm73, %v526, %v556
  %580 = vrot.lane.b32.xlu0 %v568, 49
  %v581 = vpop.permute.xlu0 %580
  %582 = vrot.lane.b32.xlu0 %v569, 49
  %v583 = vpop.permute.xlu0 %582
  %584 = vrot.lane.b32.xlu0 %v570, 49
  %v585 = vpop.permute.xlu0 %584
  %586 = vrot.lane.b32.xlu0 %v571, 49
  %v587 = vpop.permute.xlu0 %586
  %588 = vrot.lane.b32.xlu0 %v572, 49
  %v589 = vpop.permute.xlu0 %588
  %590 = vrot.lane.b32.xlu0 %v573, 49
  %v591 = vpop.permute.xlu0 %590
  %v592 = vsel %vm127, %v581, %v583
  %v593 = vsel %vm127, %v583, %v585
  %v594 = vsel %vm127, %v585, %v587
  %v595 = vsel %vm127, %v587, %v589
  %v596 = vsel %vm127, %v589, %v591
  %602 = vst [vmem:[#allocation3 + $0x78] sm:$0xff] %v592
  %603 = vst [vmem:[#allocation3 + $0x80] sm:$0xff] %v593
  %604 = vst [vmem:[#allocation3 + $0x88] sm:$0xff] %v594
  %605 = vst [vmem:[#allocation3 + $0x90] sm:$0xff] %v595
  %606 = vst [vmem:[#allocation3 + $0x98] sm:$0xff] %v596
  %610 = vst [vmem:[#allocation1] ss:$2 sm:$0xff] %v220
  %s611 = scalar_lea.vmem [#allocation1], 16
  %612 = vst [vmem:[%s611] ss:$2 sm:$0xff] %v221
  %s613 = scalar_lea.vmem [#allocation1], 32
  %614 = vst [vmem:[%s613] ss:$2 sm:$0xff] %v222
  %v615 = vld.sshfl [vmem:[#allocation1] sm:$0xff pattern:$0x75316420]
  %v616 = vld.sshfl [vmem:[#allocation1 + $0x8] sm:$0xff pattern:$0x75316420]
  %v617 = vld.sshfl [vmem:[#allocation1 + $0x10] sm:$0xff pattern:$0x75316420]
  %v618 = vld.sshfl [vmem:[#allocation1 + $0x18] sm:$0xff pattern:$0x75316420]
  %v619 = vld.sshfl [vmem:[#allocation1 + $0x20] sm:$0xff pattern:$0x75316420]
  %v620 = vld.sshfl [vmem:[#allocation1 + $0x28] sm:$0xff pattern:$0x75316420]
  %621 = vrot.lane.b32.xlu0 %v615, 47
  %v622 = vpop.permute.xlu0 %621
  %623 = vrot.lane.b32.xlu0 %v616, 47
  %v624 = vpop.permute.xlu0 %623
  %625 = vrot.lane.b32.xlu0 %v617, 47
  %v626 = vpop.permute.xlu0 %625
  %627 = vrot.lane.b32.xlu0 %v618, 47
  %v628 = vpop.permute.xlu0 %627
  %629 = vrot.lane.b32.xlu0 %v619, 47
  %v630 = vpop.permute.xlu0 %629
  %631 = vrot.lane.b32.xlu0 %v620, 47
  %v632 = vpop.permute.xlu0 %631
  %v633 = vsel %vm103, %v622, %v624
  %v634 = vsel %vm103, %v624, %v626
  %v635 = vsel %vm103, %v626, %v628
  %v636 = vsel %vm103, %v628, %v630
  %v637 = vsel %vm103, %v630, %v632
  %643 = vst [vmem:[#allocation3 + $0xa0] sm:$0xf] %v633
  %644 = vst [vmem:[#allocation3 + $0xa8] sm:$0xf] %v634
  %645 = vst [vmem:[#allocation3 + $0xb0] sm:$0xf] %v635
  %646 = vst [vmem:[#allocation3 + $0xb8] sm:$0xf] %v636
  %647 = vst [vmem:[#allocation3 + $0xc0] sm:$0xf] %v637
  %v648 = vld [vmem:[%s3] sm:$0xf]
  %v649 = vld [vmem:[#allocation3] sm:$0xff]
  %v650 = vld [vmem:[#allocation3 + $0x8] sm:$0xff]
  %v651 = vld [vmem:[#allocation3 + $0x10] sm:$0xff]
  %v652 = vld [vmem:[#allocation3 + $0x18] sm:$0xff]
  %v653 = vld [vmem:[#allocation3 + $0x20] sm:$0xff]
  %v654 = vld [vmem:[#allocation3 + $0x28] sm:$0xff]
  %v655 = vld [vmem:[#allocation3 + $0x30] sm:$0xff]
  %v656 = vld [vmem:[#allocation3 + $0x38] sm:$0xff]
  %v657 = vld [vmem:[#allocation3 + $0x40] sm:$0xff]
  %v658 = vld [vmem:[#allocation3 + $0x48] sm:$0xff]
  %v659 = vld [vmem:[#allocation3 + $0x50] sm:$0xff]
  %v660 = vld [vmem:[#allocation3 + $0x58] sm:$0xff]
  %v661 = vld [vmem:[#allocation3 + $0x60] sm:$0xff]
  %v662 = vld [vmem:[#allocation3 + $0x68] sm:$0xff]
  %v663 = vld [vmem:[#allocation3 + $0x70] sm:$0xff]
  %v664 = vld [vmem:[#allocation3 + $0x78] sm:$0xff]
  %v665 = vld [vmem:[#allocation3 + $0x80] sm:$0xff]
  %v666 = vld [vmem:[#allocation3 + $0x88] sm:$0xff]
  %v667 = vld [vmem:[#allocation3 + $0x90] sm:$0xff]
  %v668 = vld [vmem:[#allocation3 + $0x98] sm:$0xff]
  %v669 = vld [vmem:[#allocation3 + $0xa0] sm:$0xf]
  %v670 = vld [vmem:[#allocation3 + $0xa8] sm:$0xf]
  %v671 = vld [vmem:[#allocation3 + $0xb0] sm:$0xf]
  %v672 = vld [vmem:[#allocation3 + $0xb8] sm:$0xf]
  %v673 = vld [vmem:[#allocation3 + $0xc0] sm:$0xf]
  %v674 = vld [vmem:[%s4] sm:$0xf]
  %676 = vset.pattern.permute.xlu0 0
  %677 = vperm.xlu0 %676, %v674
  %v678 = vpop.permute.xlu0 %677
  %vm680 = vcmask 293888
  %v682 = vsel %vm680, %v648, 0
  %v685 = vsel %vm73, %v669, 0
  %v688 = vsel %vm73, %v670, 0
  %v691 = vsel %vm73, %v671, 0
  %v694 = vsel %vm73, %v672, 0
  %v697 = vsel %vm73, %v673, 0
  %699 = vmatpush.msra.mxu0 0.0
  %700 = vmatpush.msra.mxu0 0.0
  %701 = vmatpush.msra.mxu0 0.0
  %702 = vmatpush.msra.mxu0 0.0
  %703 = vmatpush.msra.mxu0 0.0
  %704 = vmatpush.msra.mxu0 0.0
  %705 = vmatpush.msra.mxu0 0.0
  %706 = vmatpush.msra.mxu0 0.0
  %707 = vmatpush.msra.mxu0 0.0
  %708 = vmatpush.msra.mxu0 0.0
  %709 = vmatpush.msra.mxu0 0.0
  %710 = vmatpush.msra.mxu0 %v685
  %711 = vmatpush.msra.mxu0 %v664
  %712 = vmatpush.msra.mxu0 %v659
  %713 = vmatpush.msra.mxu0 %v654
  %714 = vmatpush.msra.mxu0 %v649
  %715 = vmatmul.f32.gmra.mxu0 %v682
  %v716 = vpop.f32.mrf.mxu0
  %v717 = vadd.f32 %v678, %v716
  %718 = vdwg.mxu0
  %719 = vmatpush.msra.mxu0 0.0
  %720 = vmatpush.msra.mxu0 0.0
  %721 = vmatpush.msra.mxu0 0.0
  %722 = vmatpush.msra.mxu0 0.0
  %723 = vmatpush.msra.mxu0 0.0
  %724 = vmatpush.msra.mxu0 0.0
  %725 = vmatpush.msra.mxu0 0.0
  %726 = vmatpush.msra.mxu0 0.0
  %727 = vmatpush.msra.mxu0 0.0
  %728 = vmatpush.msra.mxu0 0.0
  %729 = vmatpush.msra.mxu0 0.0
  %730 = vmatpush.msra.mxu0 %v688
  %731 = vmatpush.msra.mxu0 %v665
  %732 = vmatpush.msra.mxu0 %v660
  %733 = vmatpush.msra.mxu0 %v655
  %734 = vmatpush.msra.mxu0 %v650
  %735 = vmatmul.f32.gmra.mxu0 %v682
  %v736 = vpop.f32.mrf.mxu0
  %v737 = vadd.f32 %v678, %v736
  %738 = vdwg.mxu0
  %739 = vmatpush.msra.mxu0 0.0
  %740 = vmatpush.msra.mxu0 0.0
  %741 = vmatpush.msra.mxu0 0.0
  %742 = vmatpush.msra.mxu0 0.0
  %743 = vmatpush.msra.mxu0 0.0
  %744 = vmatpush.msra.mxu0 0.0
  %745 = vmatpush.msra.mxu0 0.0
  %746 = vmatpush.msra.mxu0 0.0
  %747 = vmatpush.msra.mxu0 0.0
  %748 = vmatpush.msra.mxu0 0.0
  %749 = vmatpush.msra.mxu0 0.0
  %750 = vmatpush.msra.mxu0 %v691
  %751 = vmatpush.msra.mxu0 %v666
  %752 = vmatpush.msra.mxu0 %v661
  %753 = vmatpush.msra.mxu0 %v656
  %754 = vmatpush.msra.mxu0 %v651
  %755 = vmatmul.f32.gmra.mxu0 %v682
  %v756 = vpop.f32.mrf.mxu0
  %v757 = vadd.f32 %v678, %v756
  %758 = vdwg.mxu0
  %759 = vmatpush.msra.mxu0 0.0
  %760 = vmatpush.msra.mxu0 0.0
  %761 = vmatpush.msra.mxu0 0.0
  %762 = vmatpush.msra.mxu0 0.0
  %763 = vmatpush.msra.mxu0 0.0
  %764 = vmatpush.msra.mxu0 0.0
  %765 = vmatpush.msra.mxu0 0.0
  %766 = vmatpush.msra.mxu0 0.0
  %767 = vmatpush.msra.mxu0 0.0
  %768 = vmatpush.msra.mxu0 0.0
  %769 = vmatpush.msra.mxu0 0.0
  %770 = vmatpush.msra.mxu0 %v694
  %771 = vmatpush.msra.mxu0 %v667
  %772 = vmatpush.msra.mxu0 %v662
  %773 = vmatpush.msra.mxu0 %v657
  %774 = vmatpush.msra.mxu0 %v652
  %775 = vmatmul.f32.gmra.mxu0 %v682
  %v776 = vpop.f32.mrf.mxu0
  %v777 = vadd.f32 %v678, %v776
  %778 = vdwg.mxu0
  %779 = vmatpush.msra.mxu0 0.0
  %780 = vmatpush.msra.mxu0 0.0
  %781 = vmatpush.msra.mxu0 0.0
  %782 = vmatpush.msra.mxu0 0.0
  %783 = vmatpush.msra.mxu0 0.0
  %784 = vmatpush.msra.mxu0 0.0
  %785 = vmatpush.msra.mxu0 0.0
  %786 = vmatpush.msra.mxu0 0.0
  %787 = vmatpush.msra.mxu0 0.0
  %788 = vmatpush.msra.mxu0 0.0
  %789 = vmatpush.msra.mxu0 0.0
  %790 = vmatpush.msra.mxu0 %v697
  %791 = vmatpush.msra.mxu0 %v668
  %792 = vmatpush.msra.mxu0 %v663
  %793 = vmatpush.msra.mxu0 %v658
  %794 = vmatpush.msra.mxu0 %v653
  %795 = vmatmul.f32.gmra.mxu0 %v682
  %v796 = vpop.f32.mrf.mxu0
  %v797 = vadd.f32 %v678, %v796
  %798 = vdwg.mxu0
  %v799 = vmax.f32 %v717, 0.0
  %v800 = vmax.f32 %v737, 0.0
  %v801 = vmax.f32 %v757, 0.0
  %v802 = vmax.f32 %v777, 0.0
  %v803 = vmax.f32 %v797, 0.0
  %807 = vst [vmem:[#allocation1] ss:$2 sm:$0xff] %v53
  %s808 = scalar_lea.vmem [#allocation1], 16
  %809 = vst [vmem:[%s808] ss:$2 sm:$0xff] %v54
  %s810 = scalar_lea.vmem [#allocation1], 32
  %811 = vst [vmem:[%s810] ss:$2 sm:$0xff] %v55
  %v812 = vld.sshfl [vmem:[#allocation1] sm:$0xff pattern:$0x75316420]
  %v813 = vld.sshfl [vmem:[#allocation1 + $0x8] sm:$0xff pattern:$0x75316420]
  %v814 = vld.sshfl [vmem:[#allocation1 + $0x10] sm:$0xff pattern:$0x75316420]
  %v815 = vld.sshfl [vmem:[#allocation1 + $0x18] sm:$0xff pattern:$0x75316420]
  %v816 = vld.sshfl [vmem:[#allocation1 + $0x20] sm:$0xff pattern:$0x75316420]
  %v822 = vmul.f32 %v799, %v812
  %v823 = vmul.f32 %v800, %v813
  %v824 = vmul.f32 %v801, %v814
  %v825 = vmul.f32 %v802, %v815
  %v826 = vmul.f32 %v803, %v816
  %v832 = vrot.slane %v823, 4
  %v833 = vrot.slane %v825, 4
  %v834 = vsel %vm73, %v822, %v832
  %v835 = vsel %vm73, %v824, %v833
  %836 = vrot.lane.b32.xlu0 %v834, 64
  %v837 = vpop.permute.xlu0 %836
  %838 = vrot.lane.b32.xlu0 %v835, 64
  %v839 = vpop.permute.xlu0 %838
  %840 = vrot.lane.b32.xlu0 %v826, 64
  %v841 = vpop.permute.xlu0 %840
  %v842 = vrot.slane %v837, 4
  %v843 = vrot.slane %v839, 4
  %v844 = vrot.slane %v841, 4
  %v845 = vsel %vm71, %v842, %v837
  %v846 = vsel %vm73, %v842, %v843
  %v847 = vsel %vm71, %v846, %v839
  %v848 = vsel %vm73, %v843, %v844
  %v849 = vsel %vm71, %v848, %v841
  %853 = vst.msk [vmem:[#allocation2] sm:$0xff] %vm82, %v845
  %854 = vst [vmem:[#allocation2 + $0x8] sm:$0xff] %v847
  %855 = vst.msk [vmem:[#allocation2 + $0x10] sm:$0xff] %vm86, %v849
  %v856 = vld [vmem:[#allocation2] sm:$0xff]
  %v857 = vld [vmem:[#allocation2 + $0x8] sm:$0xff]
  %v858 = vld [vmem:[#allocation2 + $0x10] sm:$0xff]
  %v859 = vmul.f32 %v856, %v104
  %v860 = vmul.f32 %v857, %v106
  %v861 = vmul.f32 %v858, %v108
  %v862 = vmul.f32 %v856, %v128
  %v863 = vmul.f32 %v857, %v130
  %v864 = vmul.f32 %v858, %v132
  %v865 = vmul.f32 %v856, %v149
  %v866 = vmul.f32 %v857, %v151
  %v867 = vmul.f32 %v858, %v153
  %v868 = vmul.f32 %v856, %v170
  %v869 = vmul.f32 %v857, %v172
  %v870 = vmul.f32 %v858, %v174
  %v871 = vmul.f32 %v856, %v191
  %v872 = vmul.f32 %v857, %v193
  %v873 = vmul.f32 %v858, %v195
  %v874 = vmul.f32 %v856, %v212
  %v875 = vmul.f32 %v857, %v214
  %v876 = vmul.f32 %v858, %v216
  %880 = vst [vmem:[#allocation1] ss:$2 sm:$0xff] %v859
  %s881 = scalar_lea.vmem [#allocation1], 16
  %882 = vst [vmem:[%s881] ss:$2 sm:$0xff] %v860
  %s883 = scalar_lea.vmem [#allocation1], 32
  %884 = vst [vmem:[%s883] ss:$2 sm:$0xff] %v861
  %v885 = vld.sshfl [vmem:[#allocation1] sm:$0xff pattern:$0x75316420]
  %v886 = vld.sshfl [vmem:[#allocation1 + $0x8] sm:$0xff pattern:$0x75316420]
  %v887 = vld.sshfl [vmem:[#allocation1 + $0x10] sm:$0xff pattern:$0x75316420]
  %v888 = vld.sshfl [vmem:[#allocation1 + $0x18] sm:$0xff pattern:$0x75316420]
  %v889 = vld.sshfl [vmem:[#allocation1 + $0x20] sm:$0xff pattern:$0x75316420]
  %v890 = vld.sshfl [vmem:[#allocation1 + $0x28] sm:$0xff pattern:$0x75316420]
  %s900 = scalar_lea.vmem [#allocation1], 1
  %901 = vst [vmem:[%s900] ss:$2 sm:$0xff] %v856
  %s902 = scalar_lea.vmem [#allocation1], 17
  %903 = vst [vmem:[%s902] ss:$2 sm:$0xff] %v857
  %s904 = scalar_lea.vmem [#allocation1], 33
  %905 = vst [vmem:[%s904] ss:$2 sm:$0xff] %v858
  %v906 = vld.sshfl [vmem:[#allocation1] sm:$0xff pattern:$0x75316420]
  %v907 = vld.sshfl [vmem:[#allocation1 + $0x8] sm:$0xff pattern:$0x75316420]
  %v908 = vld.sshfl [vmem:[#allocation1 + $0x10] sm:$0xff pattern:$0x75316420]
  %v909 = vld.sshfl [vmem:[#allocation1 + $0x18] sm:$0xff pattern:$0x75316420]
  %v910 = vld.sshfl [vmem:[#allocation1 + $0x20] sm:$0xff pattern:$0x75316420]
  %v911 = vld.sshfl [vmem:[#allocation1 + $0x28] sm:$0xff pattern:$0x75316420]
  %912 = vrot.lane.b32.xlu0 %v906, 127
  %v913 = vpop.permute.xlu0 %912
  %914 = vrot.lane.b32.xlu0 %v907, 127
  %v915 = vpop.permute.xlu0 %914
  %916 = vrot.lane.b32.xlu0 %v908, 127
  %v917 = vpop.permute.xlu0 %916
  %918 = vrot.lane.b32.xlu0 %v909, 127
  %v919 = vpop.permute.xlu0 %918
  %920 = vrot.lane.b32.xlu0 %v910, 127
  %v921 = vpop.permute.xlu0 %920
  %922 = vrot.lane.b32.xlu0 %v911, 127
  %v923 = vpop.permute.xlu0 %922
  %v924 = vsel %vm270, %v913, %v915
  %v925 = vsel %vm270, %v915, %v917
  %v926 = vsel %vm270, %v917, %v919
  %v927 = vsel %vm270, %v919, %v921
  %v928 = vsel %vm270, %v921, %v923
  %v935 = vsel %vm73, %v885, %v924
  %v936 = vsel %vm73, %v886, %v925
  %v937 = vsel %vm73, %v887, %v926
  %v938 = vsel %vm73, %v888, %v927
  %v939 = vsel %vm73, %v889, %v928
  %v940 = vsel %vm73, %v890, %v923
  %947 = vrot.lane.b32.xlu0 %v935, 81
  %v948 = vpop.permute.xlu0 %947
  %949 = vrot.lane.b32.xlu0 %v936, 81
  %v950 = vpop.permute.xlu0 %949
  %951 = vrot.lane.b32.xlu0 %v937, 81
  %v952 = vpop.permute.xlu0 %951
  %953 = vrot.lane.b32.xlu0 %v938, 81
  %v954 = vpop.permute.xlu0 %953
  %955 = vrot.lane.b32.xlu0 %v939, 81
  %v956 = vpop.permute.xlu0 %955
  %957 = vrot.lane.b32.xlu0 %v940, 81
  %v958 = vpop.permute.xlu0 %957
  %v959 = vsel %vm211, %v948, %v950
  %v960 = vsel %vm211, %v950, %v952
  %v961 = vsel %vm211, %v952, %v954
  %v962 = vsel %vm211, %v954, %v956
  %v963 = vsel %vm211, %v956, %v958
  %969 = vst [vmem:[#allocation3] sm:$0xff] %v959
  %970 = vst [vmem:[#allocation3 + $0x8] sm:$0xff] %v960
  %971 = vst [vmem:[#allocation3 + $0x10] sm:$0xff] %v961
  %972 = vst [vmem:[#allocation3 + $0x18] sm:$0xff] %v962
  %973 = vst [vmem:[#allocation3 + $0x20] sm:$0xff] %v963
  %977 = vst [vmem:[#allocation1] ss:$2 sm:$0xff] %v862
  %s978 = scalar_lea.vmem [#allocation1], 16
  %979 = vst [vmem:[%s978] ss:$2 sm:$0xff] %v863
  %s980 = scalar_lea.vmem [#allocation1], 32
  %981 = vst [vmem:[%s980] ss:$2 sm:$0xff] %v864
  %v982 = vld.sshfl [vmem:[#allocation1] sm:$0xff pattern:$0x75316420]
  %v983 = vld.sshfl [vmem:[#allocation1 + $0x8] sm:$0xff pattern:$0x75316420]
  %v984 = vld.sshfl [vmem:[#allocation1 + $0x10] sm:$0xff pattern:$0x75316420]
  %v985 = vld.sshfl [vmem:[#allocation1 + $0x18] sm:$0xff pattern:$0x75316420]
  %v986 = vld.sshfl [vmem:[#allocation1 + $0x20] sm:$0xff pattern:$0x75316420]
  %v987 = vld.sshfl [vmem:[#allocation1 + $0x28] sm:$0xff pattern:$0x75316420]
  %s997 = scalar_lea.vmem [#allocation1], 1
  %998 = vst [vmem:[%s997] ss:$2 sm:$0xff] %v865
  %s999 = scalar_lea.vmem [#allocation1], 17
  %1000 = vst [vmem:[%s999] ss:$2 sm:$0xff] %v866
  %s1001 = scalar_lea.vmem [#allocation1], 33
  %1002 = vst [vmem:[%s1001] ss:$2 sm:$0xff] %v867
  %v1003 = vld.sshfl [vmem:[#allocation1] sm:$0xff pattern:$0x75316420]
  %v1004 = vld.sshfl [vmem:[#allocation1 + $0x8] sm:$0xff pattern:$0x75316420]
  %v1005 = vld.sshfl [vmem:[#allocation1 + $0x10] sm:$0xff pattern:$0x75316420]
  %v1006 = vld.sshfl [vmem:[#allocation1 + $0x18] sm:$0xff pattern:$0x75316420]
  %v1007 = vld.sshfl [vmem:[#allocation1 + $0x20] sm:$0xff pattern:$0x75316420]
  %v1008 = vld.sshfl [vmem:[#allocation1 + $0x28] sm:$0xff pattern:$0x75316420]
  %1009 = vrot.lane.b32.xlu0 %v1003, 114
  %v1010 = vpop.permute.xlu0 %1009
  %1011 = vrot.lane.b32.xlu0 %v1004, 114
  %v1012 = vpop.permute.xlu0 %1011
  %1013 = vrot.lane.b32.xlu0 %v1005, 114
  %v1014 = vpop.permute.xlu0 %1013
  %1015 = vrot.lane.b32.xlu0 %v1006, 114
  %v1016 = vpop.permute.xlu0 %1015
  %1017 = vrot.lane.b32.xlu0 %v1007, 114
  %v1018 = vpop.permute.xlu0 %1017
  %1019 = vrot.lane.b32.xlu0 %v1008, 114
  %v1020 = vpop.permute.xlu0 %1019
  %v1021 = vsel %vm368, %v1010, %v1012
  %v1022 = vsel %vm368, %v1012, %v1014
  %v1023 = vsel %vm368, %v1014, %v1016
  %v1024 = vsel %vm368, %v1016, %v1018
  %v1025 = vsel %vm368, %v1018, %v1020
  %v1032 = vsel %vm73, %v982, %v1021
  %v1033 = vsel %vm73, %v983, %v1022
  %v1034 = vsel %vm73, %v984, %v1023
  %v1035 = vsel %vm73, %v985, %v1024
  %v1036 = vsel %vm73, %v986, %v1025
  %v1037 = vsel %vm73, %v987, %v1020
  %1044 = vrot.lane.b32.xlu0 %v1032, 79
  %v1045 = vpop.permute.xlu0 %1044
  %1046 = vrot.lane.b32.xlu0 %v1033, 79
  %v1047 = vpop.permute.xlu0 %1046
  %1048 = vrot.lane.b32.xlu0 %v1034, 79
  %v1049 = vpop.permute.xlu0 %1048
  %1050 = vrot.lane.b32.xlu0 %v1035, 79
  %v1051 = vpop.permute.xlu0 %1050
  %1052 = vrot.lane.b32.xlu0 %v1036, 79
  %v1053 = vpop.permute.xlu0 %1052
  %1054 = vrot.lane.b32.xlu0 %v1037, 79
  %v1055 = vpop.permute.xlu0 %1054
  %v1056 = vsel %vm190, %v1045, %v1047
  %v1057 = vsel %vm190, %v1047, %v1049
  %v1058 = vsel %vm190, %v1049, %v1051
  %v1059 = vsel %vm190, %v1051, %v1053
  %v1060 = vsel %vm190, %v1053, %v1055
  %1066 = vst [vmem:[#allocation3 + $0x28] sm:$0xff] %v1056
  %1067 = vst [vmem:[#allocation3 + $0x30] sm:$0xff] %v1057
  %1068 = vst [vmem:[#allocation3 + $0x38] sm:$0xff] %v1058
  %1069 = vst [vmem:[#allocation3 + $0x40] sm:$0xff] %v1059
  %1070 = vst [vmem:[#allocation3 + $0x48] sm:$0xff] %v1060
  %1071 = vst [vmem:[#allocation1] ss:$2 sm:$0xff] %v856
  %s1072 = scalar_lea.vmem [#allocation1], 16
  %1073 = vst [vmem:[%s1072] ss:$2 sm:$0xff] %v857
  %s1074 = scalar_lea.vmem [#allocation1], 32
  %1075 = vst [vmem:[%s1074] ss:$2 sm:$0xff] %v858
  %v1076 = vld.sshfl [vmem:[#allocation1] sm:$0xff pattern:$0x75316420]
  %v1077 = vld.sshfl [vmem:[#allocation1 + $0x8] sm:$0xff pattern:$0x75316420]
  %v1078 = vld.sshfl [vmem:[#allocation1 + $0x10] sm:$0xff pattern:$0x75316420]
  %v1079 = vld.sshfl [vmem:[#allocation1 + $0x18] sm:$0xff pattern:$0x75316420]
  %v1080 = vld.sshfl [vmem:[#allocation1 + $0x20] sm:$0xff pattern:$0x75316420]
  %v1081 = vld.sshfl [vmem:[#allocation1 + $0x28] sm:$0xff pattern:$0x75316420]
  %s1091 = scalar_lea.vmem [#allocation1], 1
  %1092 = vst [vmem:[%s1091] ss:$2 sm:$0xff] %v868
  %s1093 = scalar_lea.vmem [#allocation1], 17
  %1094 = vst [vmem:[%s1093] ss:$2 sm:$0xff] %v869
  %s1095 = scalar_lea.vmem [#allocation1], 33
  %1096 = vst [vmem:[%s1095] ss:$2 sm:$0xff] %v870
  %v1097 = vld.sshfl [vmem:[#allocation1] sm:$0xff pattern:$0x75316420]
  %v1098 = vld.sshfl [vmem:[#allocation1 + $0x8] sm:$0xff pattern:$0x75316420]
  %v1099 = vld.sshfl [vmem:[#allocation1 + $0x10] sm:$0xff pattern:$0x75316420]
  %v1100 = vld.sshfl [vmem:[#allocation1 + $0x18] sm:$0xff pattern:$0x75316420]
  %v1101 = vld.sshfl [vmem:[#allocation1 + $0x20] sm:$0xff pattern:$0x75316420]
  %v1102 = vld.sshfl [vmem:[#allocation1 + $0x28] sm:$0xff pattern:$0x75316420]
  %1103 = vrot.lane.b32.xlu0 %v1097, 127
  %v1104 = vpop.permute.xlu0 %1103
  %1105 = vrot.lane.b32.xlu0 %v1098, 127
  %v1106 = vpop.permute.xlu0 %1105
  %1107 = vrot.lane.b32.xlu0 %v1099, 127
  %v1108 = vpop.permute.xlu0 %1107
  %1109 = vrot.lane.b32.xlu0 %v1100, 127
  %v1110 = vpop.permute.xlu0 %1109
  %1111 = vrot.lane.b32.xlu0 %v1101, 127
  %v1112 = vpop.permute.xlu0 %1111
  %1113 = vrot.lane.b32.xlu0 %v1102, 127
  %v1114 = vpop.permute.xlu0 %1113
  %v1115 = vsel %vm270, %v1104, %v1106
  %v1116 = vsel %vm270, %v1106, %v1108
  %v1117 = vsel %vm270, %v1108, %v1110
  %v1118 = vsel %vm270, %v1110, %v1112
  %v1119 = vsel %vm270, %v1112, %v1114
  %v1126 = vsel %vm73, %v1076, %v1115
  %v1127 = vsel %vm73, %v1077, %v1116
  %v1128 = vsel %vm73, %v1078, %v1117
  %v1129 = vsel %vm73, %v1079, %v1118
  %v1130 = vsel %vm73, %v1080, %v1119
  %v1131 = vsel %vm73, %v1081, %v1114
  %1138 = vrot.lane.b32.xlu0 %v1126, 64
  %v1139 = vpop.permute.xlu0 %1138
  %1140 = vrot.lane.b32.xlu0 %v1127, 64
  %v1141 = vpop.permute.xlu0 %1140
  %1142 = vrot.lane.b32.xlu0 %v1128, 64
  %v1143 = vpop.permute.xlu0 %1142
  %1144 = vrot.lane.b32.xlu0 %v1129, 64
  %v1145 = vpop.permute.xlu0 %1144
  %1146 = vrot.lane.b32.xlu0 %v1130, 64
  %v1147 = vpop.permute.xlu0 %1146
  %1148 = vrot.lane.b32.xlu0 %v1131, 64
  %v1149 = vpop.permute.xlu0 %1148
  %v1150 = vsel %vm71, %v1139, %v1141
  %v1151 = vsel %vm71, %v1141, %v1143
  %v1152 = vsel %vm71, %v1143, %v1145
  %v1153 = vsel %vm71, %v1145, %v1147
  %v1154 = vsel %vm71, %v1147, %v1149
  %1160 = vst [vmem:[#allocation3 + $0x50] sm:$0xff] %v1150
  %1161 = vst [vmem:[#allocation3 + $0x58] sm:$0xff] %v1151
  %1162 = vst [vmem:[#allocation3 + $0x60] sm:$0xff] %v1152
  %1163 = vst [vmem:[#allocation3 + $0x68] sm:$0xff] %v1153
  %1164 = vst [vmem:[#allocation3 + $0x70] sm:$0xff] %v1154
  %1168 = vst [vmem:[#allocation1] ss:$2 sm:$0xff] %v871
  %s1169 = scalar_lea.vmem [#allocation1], 16
  %1170 = vst [vmem:[%s1169] ss:$2 sm:$0xff] %v872
  %s1171 = scalar_lea.vmem [#allocation1], 32
  %1172 = vst [vmem:[%s1171] ss:$2 sm:$0xff] %v873
  %v1173 = vld.sshfl [vmem:[#allocation1] sm:$0xff pattern:$0x75316420]
  %v1174 = vld.sshfl [vmem:[#allocation1 + $0x8] sm:$0xff pattern:$0x75316420]
  %v1175 = vld.sshfl [vmem:[#allocation1 + $0x10] sm:$0xff pattern:$0x75316420]
  %v1176 = vld.sshfl [vmem:[#allocation1 + $0x18] sm:$0xff pattern:$0x75316420]
  %v1177 = vld.sshfl [vmem:[#allocation1 + $0x20] sm:$0xff pattern:$0x75316420]
  %v1178 = vld.sshfl [vmem:[#allocation1 + $0x28] sm:$0xff pattern:$0x75316420]
  %s1185 = scalar_lea.vmem [#allocation1], 1
  %1186 = vst [vmem:[%s1185] ss:$2 sm:$0xff] %v856
  %s1187 = scalar_lea.vmem [#allocation1], 17
  %1188 = vst [vmem:[%s1187] ss:$2 sm:$0xff] %v857
  %s1189 = scalar_lea.vmem [#allocation1], 33
  %1190 = vst [vmem:[%s1189] ss:$2 sm:$0xff] %v858
  %v1191 = vld.sshfl [vmem:[#allocation1] sm:$0xff pattern:$0x75316420]
  %v1192 = vld.sshfl [vmem:[#allocation1 + $0x8] sm:$0xff pattern:$0x75316420]
  %v1193 = vld.sshfl [vmem:[#allocation1 + $0x10] sm:$0xff pattern:$0x75316420]
  %v1194 = vld.sshfl [vmem:[#allocation1 + $0x18] sm:$0xff pattern:$0x75316420]
  %v1195 = vld.sshfl [vmem:[#allocation1 + $0x20] sm:$0xff pattern:$0x75316420]
  %v1196 = vld.sshfl [vmem:[#allocation1 + $0x28] sm:$0xff pattern:$0x75316420]
  %1197 = vrot.lane.b32.xlu0 %v1191, 127
  %v1198 = vpop.permute.xlu0 %1197
  %1199 = vrot.lane.b32.xlu0 %v1192, 127
  %v1200 = vpop.permute.xlu0 %1199
  %1201 = vrot.lane.b32.xlu0 %v1193, 127
  %v1202 = vpop.permute.xlu0 %1201
  %1203 = vrot.lane.b32.xlu0 %v1194, 127
  %v1204 = vpop.permute.xlu0 %1203
  %1205 = vrot.lane.b32.xlu0 %v1195, 127
  %v1206 = vpop.permute.xlu0 %1205
  %1207 = vrot.lane.b32.xlu0 %v1196, 127
  %v1208 = vpop.permute.xlu0 %1207
  %v1209 = vsel %vm270, %v1198, %v1200
  %v1210 = vsel %vm270, %v1200, %v1202
  %v1211 = vsel %vm270, %v1202, %v1204
  %v1212 = vsel %vm270, %v1204, %v1206
  %v1213 = vsel %vm270, %v1206, %v1208
  %v1220 = vsel %vm73, %v1173, %v1209
  %v1221 = vsel %vm73, %v1174, %v1210
  %v1222 = vsel %vm73, %v1175, %v1211
  %v1223 = vsel %vm73, %v1176, %v1212
  %v1224 = vsel %vm73, %v1177, %v1213
  %v1225 = vsel %vm73, %v1178, %v1208
  %1232 = vrot.lane.b32.xlu0 %v1220, 49
  %v1233 = vpop.permute.xlu0 %1232
  %1234 = vrot.lane.b32.xlu0 %v1221, 49
  %v1235 = vpop.permute.xlu0 %1234
  %1236 = vrot.lane.b32.xlu0 %v1222, 49
  %v1237 = vpop.permute.xlu0 %1236
  %1238 = vrot.lane.b32.xlu0 %v1223, 49
  %v1239 = vpop.permute.xlu0 %1238
  %1240 = vrot.lane.b32.xlu0 %v1224, 49
  %v1241 = vpop.permute.xlu0 %1240
  %1242 = vrot.lane.b32.xlu0 %v1225, 49
  %v1243 = vpop.permute.xlu0 %1242
  %v1244 = vsel %vm127, %v1233, %v1235
  %v1245 = vsel %vm127, %v1235, %v1237
  %v1246 = vsel %vm127, %v1237, %v1239
  %v1247 = vsel %vm127, %v1239, %v1241
  %v1248 = vsel %vm127, %v1241, %v1243
  %1254 = vst [vmem:[#allocation3 + $0x78] sm:$0xff] %v1244
  %1255 = vst [vmem:[#allocation3 + $0x80] sm:$0xff] %v1245
  %1256 = vst [vmem:[#allocation3 + $0x88] sm:$0xff] %v1246
  %1257 = vst [vmem:[#allocation3 + $0x90] sm:$0xff] %v1247
  %1258 = vst [vmem:[#allocation3 + $0x98] sm:$0xff] %v1248
  %1262 = vst [vmem:[#allocation1] ss:$2 sm:$0xff] %v874
  %s1263 = scalar_lea.vmem [#allocation1], 16
  %1264 = vst [vmem:[%s1263] ss:$2 sm:$0xff] %v875
  %s1265 = scalar_lea.vmem [#allocation1], 32
  %1266 = vst [vmem:[%s1265] ss:$2 sm:$0xff] %v876
  %v1267 = vld.sshfl [vmem:[#allocation1] sm:$0xff pattern:$0x75316420]
  %v1268 = vld.sshfl [vmem:[#allocation1 + $0x8] sm:$0xff pattern:$0x75316420]
  %v1269 = vld.sshfl [vmem:[#allocation1 + $0x10] sm:$0xff pattern:$0x75316420]
  %v1270 = vld.sshfl [vmem:[#allocation1 + $0x18] sm:$0xff pattern:$0x75316420]
  %v1271 = vld.sshfl [vmem:[#allocation1 + $0x20] sm:$0xff pattern:$0x75316420]
  %v1272 = vld.sshfl [vmem:[#allocation1 + $0x28] sm:$0xff pattern:$0x75316420]
  %1273 = vrot.lane.b32.xlu0 %v1267, 47
  %v1274 = vpop.permute.xlu0 %1273
  %1275 = vrot.lane.b32.xlu0 %v1268, 47
  %v1276 = vpop.permute.xlu0 %1275
  %1277 = vrot.lane.b32.xlu0 %v1269, 47
  %v1278 = vpop.permute.xlu0 %1277
  %1279 = vrot.lane.b32.xlu0 %v1270, 47
  %v1280 = vpop.permute.xlu0 %1279
  %1281 = vrot.lane.b32.xlu0 %v1271, 47
  %v1282 = vpop.permute.xlu0 %1281
  %1283 = vrot.lane.b32.xlu0 %v1272, 47
  %v1284 = vpop.permute.xlu0 %1283
  %v1285 = vsel %vm103, %v1274, %v1276
  %v1286 = vsel %vm103, %v1276, %v1278
  %v1287 = vsel %vm103, %v1278, %v1280
  %v1288 = vsel %vm103, %v1280, %v1282
  %v1289 = vsel %vm103, %v1282, %v1284
  %1295 = vst [vmem:[#allocation3 + $0xa0] sm:$0xf] %v1285
  %1296 = vst [vmem:[#allocation3 + $0xa8] sm:$0xf] %v1286
  %1297 = vst [vmem:[#allocation3 + $0xb0] sm:$0xf] %v1287
  %1298 = vst [vmem:[#allocation3 + $0xb8] sm:$0xf] %v1288
  %1299 = vst [vmem:[#allocation3 + $0xc0] sm:$0xf] %v1289
  %v1300 = vld [vmem:[%s5] sm:$0xf]
  %v1301 = vld [vmem:[#allocation3] sm:$0xff]
  %v1302 = vld [vmem:[#allocation3 + $0x8] sm:$0xff]
  %v1303 = vld [vmem:[#allocation3 + $0x10] sm:$0xff]
  %v1304 = vld [vmem:[#allocation3 + $0x18] sm:$0xff]
  %v1305 = vld [vmem:[#allocation3 + $0x20] sm:$0xff]
  %v1306 = vld [vmem:[#allocation3 + $0x28] sm:$0xff]
  %v1307 = vld [vmem:[#allocation3 + $0x30] sm:$0xff]
  %v1308 = vld [vmem:[#allocation3 + $0x38] sm:$0xff]
  %v1309 = vld [vmem:[#allocation3 + $0x40] sm:$0xff]
  %v1310 = vld [vmem:[#allocation3 + $0x48] sm:$0xff]
  %v1311 = vld [vmem:[#allocation3 + $0x50] sm:$0xff]
  %v1312 = vld [vmem:[#allocation3 + $0x58] sm:$0xff]
  %v1313 = vld [vmem:[#allocation3 + $0x60] sm:$0xff]
  %v1314 = vld [vmem:[#allocation3 + $0x68] sm:$0xff]
  %v1315 = vld [vmem:[#allocation3 + $0x70] sm:$0xff]
  %v1316 = vld [vmem:[#allocation3 + $0x78] sm:$0xff]
  %v1317 = vld [vmem:[#allocation3 + $0x80] sm:$0xff]
  %v1318 = vld [vmem:[#allocation3 + $0x88] sm:$0xff]
  %v1319 = vld [vmem:[#allocation3 + $0x90] sm:$0xff]
  %v1320 = vld [vmem:[#allocation3 + $0x98] sm:$0xff]
  %v1321 = vld [vmem:[#allocation3 + $0xa0] sm:$0xf]
  %v1322 = vld [vmem:[#allocation3 + $0xa8] sm:$0xf]
  %v1323 = vld [vmem:[#allocation3 + $0xb0] sm:$0xf]
  %v1324 = vld [vmem:[#allocation3 + $0xb8] sm:$0xf]
  %v1325 = vld [vmem:[#allocation3 + $0xc0] sm:$0xf]
  %v1326 = vld [vmem:[%s6] sm:$0xf]
  %1328 = vset.pattern.permute.xlu0 0
  %1329 = vperm.xlu0 %1328, %v1326
  %v1330 = vpop.permute.xlu0 %1329
  %v1333 = vsel %vm680, %v1300, 0
  %v1336 = vsel %vm73, %v1321, 0
  %v1339 = vsel %vm73, %v1322, 0
  %v1342 = vsel %vm73, %v1323, 0
  %v1345 = vsel %vm73, %v1324, 0
  %v1348 = vsel %vm73, %v1325, 0
  %1350 = vmatpush.msra.mxu0 0.0
  %1351 = vmatpush.msra.mxu0 0.0
  %1352 = vmatpush.msra.mxu0 0.0
  %1353 = vmatpush.msra.mxu0 0.0
  %1354 = vmatpush.msra.mxu0 0.0
  %1355 = vmatpush.msra.mxu0 0.0
  %1356 = vmatpush.msra.mxu0 0.0
  %1357 = vmatpush.msra.mxu0 0.0
  %1358 = vmatpush.msra.mxu0 0.0
  %1359 = vmatpush.msra.mxu0 0.0
  %1360 = vmatpush.msra.mxu0 0.0
  %1361 = vmatpush.msra.mxu0 %v1336
  %1362 = vmatpush.msra.mxu0 %v1316
  %1363 = vmatpush.msra.mxu0 %v1311
  %1364 = vmatpush.msra.mxu0 %v1306
  %1365 = vmatpush.msra.mxu0 %v1301
  %1366 = vmatmul.f32.gmra.mxu0 %v1333
  %v1367 = vpop.f32.mrf.mxu0
  %v1368 = vadd.f32 %v1330, %v1367
  %1369 = vdwg.mxu0
  %1370 = vmatpush.msra.mxu0 0.0
  %1371 = vmatpush.msra.mxu0 0.0
  %1372 = vmatpush.msra.mxu0 0.0
  %1373 = vmatpush.msra.mxu0 0.0
  %1374 = vmatpush.msra.mxu0 0.0
  %1375 = vmatpush.msra.mxu0 0.0
  %1376 = vmatpush.msra.mxu0 0.0
  %1377 = vmatpush.msra.mxu0 0.0
  %1378 = vmatpush.msra.mxu0 0.0
  %1379 = vmatpush.msra.mxu0 0.0
  %1380 = vmatpush.msra.mxu0 0.0
  %1381 = vmatpush.msra.mxu0 %v1339
  %1382 = vmatpush.msra.mxu0 %v1317
  %1383 = vmatpush.msra.mxu0 %v1312
  %1384 = vmatpush.msra.mxu0 %v1307
  %1385 = vmatpush.msra.mxu0 %v1302
  %1386 = vmatmul.f32.gmra.mxu0 %v1333
  %v1387 = vpop.f32.mrf.mxu0
  %v1388 = vadd.f32 %v1330, %v1387
  %1389 = vdwg.mxu0
  %1390 = vmatpush.msra.mxu0 0.0
  %1391 = vmatpush.msra.mxu0 0.0
  %1392 = vmatpush.msra.mxu0 0.0
  %1393 = vmatpush.msra.mxu0 0.0
  %1394 = vmatpush.msra.mxu0 0.0
  %1395 = vmatpush.msra.mxu0 0.0
  %1396 = vmatpush.msra.mxu0 0.0
  %1397 = vmatpush.msra.mxu0 0.0
  %1398 = vmatpush.msra.mxu0 0.0
  %1399 = vmatpush.msra.mxu0 0.0
  %1400 = vmatpush.msra.mxu0 0.0
  %1401 = vmatpush.msra.mxu0 %v1342
  %1402 = vmatpush.msra.mxu0 %v1318
  %1403 = vmatpush.msra.mxu0 %v1313
  %1404 = vmatpush.msra.mxu0 %v1308
  %1405 = vmatpush.msra.mxu0 %v1303
  %1406 = vmatmul.f32.gmra.mxu0 %v1333
  %v1407 = vpop.f32.mrf.mxu0
  %v1408 = vadd.f32 %v1330, %v1407
  %1409 = vdwg.mxu0
  %1410 = vmatpush.msra.mxu0 0.0
  %1411 = vmatpush.msra.mxu0 0.0
  %1412 = vmatpush.msra.mxu0 0.0
  %1413 = vmatpush.msra.mxu0 0.0
  %1414 = vmatpush.msra.mxu0 0.0
  %1415 = vmatpush.msra.mxu0 0.0
  %1416 = vmatpush.msra.mxu0 0.0
  %1417 = vmatpush.msra.mxu0 0.0
  %1418 = vmatpush.msra.mxu0 0.0
  %1419 = vmatpush.msra.mxu0 0.0
  %1420 = vmatpush.msra.mxu0 0.0
  %1421 = vmatpush.msra.mxu0 %v1345
  %1422 = vmatpush.msra.mxu0 %v1319
  %1423 = vmatpush.msra.mxu0 %v1314
  %1424 = vmatpush.msra.mxu0 %v1309
  %1425 = vmatpush.msra.mxu0 %v1304
  %1426 = vmatmul.f32.gmra.mxu0 %v1333
  %v1427 = vpop.f32.mrf.mxu0
  %v1428 = vadd.f32 %v1330, %v1427
  %1429 = vdwg.mxu0
  %1430 = vmatpush.msra.mxu0 0.0
  %1431 = vmatpush.msra.mxu0 0.0
  %1432 = vmatpush.msra.mxu0 0.0
  %1433 = vmatpush.msra.mxu0 0.0
  %1434 = vmatpush.msra.mxu0 0.0
  %1435 = vmatpush.msra.mxu0 0.0
  %1436 = vmatpush.msra.mxu0 0.0
  %1437 = vmatpush.msra.mxu0 0.0
  %1438 = vmatpush.msra.mxu0 0.0
  %1439 = vmatpush.msra.mxu0 0.0
  %1440 = vmatpush.msra.mxu0 0.0
  %1441 = vmatpush.msra.mxu0 %v1348
  %1442 = vmatpush.msra.mxu0 %v1320
  %1443 = vmatpush.msra.mxu0 %v1315
  %1444 = vmatpush.msra.mxu0 %v1310
  %1445 = vmatpush.msra.mxu0 %v1305
  %1446 = vmatmul.f32.gmra.mxu0 %v1333
  %v1447 = vpop.f32.mrf.mxu0
  %v1448 = vadd.f32 %v1330, %v1447
  %1449 = vdwg.mxu0
  %v1450 = vmax.f32 %v1368, 0.0
  %v1451 = vmax.f32 %v1388, 0.0
  %v1452 = vmax.f32 %v1408, 0.0
  %v1453 = vmax.f32 %v1428, 0.0
  %v1454 = vmax.f32 %v1448, 0.0
  %1455 = vst [vmem:[#allocation1] ss:$2 sm:$0xff] %v56
  %s1456 = scalar_lea.vmem [#allocation1], 16
  %1457 = vst [vmem:[%s1456] ss:$2 sm:$0xff] %v57
  %s1458 = scalar_lea.vmem [#allocation1], 32
  %1459 = vst [vmem:[%s1458] ss:$2 sm:$0xff] %v58
  %v1460 = vld.sshfl [vmem:[#allocation1] sm:$0xff pattern:$0x75316420]
  %v1461 = vld.sshfl [vmem:[#allocation1 + $0x8] sm:$0xff pattern:$0x75316420]
  %v1462 = vld.sshfl [vmem:[#allocation1 + $0x10] sm:$0xff pattern:$0x75316420]
  %v1463 = vld.sshfl [vmem:[#allocation1 + $0x18] sm:$0xff pattern:$0x75316420]
  %v1464 = vld.sshfl [vmem:[#allocation1 + $0x20] sm:$0xff pattern:$0x75316420]
  %v1470 = vadd.f32 %v1450, %v1460
  %v1471 = vadd.f32 %v1451, %v1461
  %v1472 = vadd.f32 %v1452, %v1462
  %v1473 = vadd.f32 %v1453, %v1463
  %v1474 = vadd.f32 %v1454, %v1464
  %1475 = vst [vmem:[#allocation1] ss:$2 sm:$0xff] %v53
  %s1476 = scalar_lea.vmem [#allocation1], 16
  %1477 = vst [vmem:[%s1476] ss:$2 sm:$0xff] %v54
  %s1478 = scalar_lea.vmem [#allocation1], 32
  %1479 = vst [vmem:[%s1478] ss:$2 sm:$0xff] %v55
  %v1480 = vld.sshfl [vmem:[#allocation1] sm:$0xff pattern:$0x75316420]
  %v1481 = vld.sshfl [vmem:[#allocation1 + $0x8] sm:$0xff pattern:$0x75316420]
  %v1482 = vld.sshfl [vmem:[#allocation1 + $0x10] sm:$0xff pattern:$0x75316420]
  %v1483 = vld.sshfl [vmem:[#allocation1 + $0x18] sm:$0xff pattern:$0x75316420]
  %v1484 = vld.sshfl [vmem:[#allocation1 + $0x20] sm:$0xff pattern:$0x75316420]
  %v1490 = vmul.f32 %v1470, %v1480
  %v1491 = vmul.f32 %v1471, %v1481
  %v1492 = vmul.f32 %v1472, %v1482
  %v1493 = vmul.f32 %v1473, %v1483
  %v1494 = vmul.f32 %v1474, %v1484
  %v1500 = vrot.slane %v1491, 4
  %v1501 = vrot.slane %v1493, 4
  %v1502 = vsel %vm73, %v1490, %v1500
  %v1503 = vsel %vm73, %v1492, %v1501
  %1504 = vrot.lane.b32.xlu0 %v1502, 64
  %v1505 = vpop.permute.xlu0 %1504
  %1506 = vrot.lane.b32.xlu0 %v1503, 64
  %v1507 = vpop.permute.xlu0 %1506
  %1508 = vrot.lane.b32.xlu0 %v1494, 64
  %v1509 = vpop.permute.xlu0 %1508
  %v1510 = vrot.slane %v1505, 4
  %v1511 = vrot.slane %v1507, 4
  %v1512 = vrot.slane %v1509, 4
  %v1513 = vsel %vm71, %v1510, %v1505
  %v1514 = vsel %vm73, %v1510, %v1511
  %v1515 = vsel %vm71, %v1514, %v1507
  %v1516 = vsel %vm73, %v1511, %v1512
  %v1517 = vsel %vm71, %v1516, %v1509
  %1521 = vst.msk [vmem:[#allocation2] sm:$0xff] %vm82, %v1513
  %1522 = vst [vmem:[#allocation2 + $0x8] sm:$0xff] %v1515
  %1523 = vst.msk [vmem:[#allocation2 + $0x10] sm:$0xff] %vm86, %v1517
  %v1524 = vld [vmem:[#allocation2] sm:$0xff]
  %v1525 = vld [vmem:[#allocation2 + $0x8] sm:$0xff]
  %v1526 = vld [vmem:[#allocation2 + $0x10] sm:$0xff]
  %1530 = vrot.lane.b32.xlu0 %v38, 30
  %v1531 = vpop.permute.xlu0 %1530
  %1532 = vrot.lane.b32.xlu0 %v39, 30
  %v1533 = vpop.permute.xlu0 %1532
  %1534 = vrot.lane.b32.xlu0 %v40, 30
  %v1535 = vpop.permute.xlu0 %1534
  %v1536 = vrot.slane %v1531, 4
  %v1537 = vrot.slane %v1533, 4
  %v1538 = vrot.slane %v1535, 4
  %vm1539 = vcmask 244736
  %v1540 = vsel %vm1539, %v1536, %v1531
  %v1541 = vsel %vm73, %v1536, %v1537
  %v1542 = vsel %vm1539, %v1541, %v1533
  %v1543 = vsel %vm73, %v1537, %v1538
  %v1544 = vsel %vm1539, %v1543, %v1535
  %v1548 = vmul.f32 %v1524, %v1540
  %v1549 = vmul.f32 %v1525, %v1542
  %v1550 = vmul.f32 %v1526, %v1544
  %1551 = vrot.lane.b32.xlu0 %v42, 31
  %v1552 = vpop.permute.xlu0 %1551
  %1553 = vrot.lane.b32.xlu0 %v43, 31
  %v1554 = vpop.permute.xlu0 %1553
  %1555 = vrot.lane.b32.xlu0 %v44, 31
  %v1556 = vpop.permute.xlu0 %1555
  %v1557 = vrot.slane %v1552, 4
  %v1558 = vrot.slane %v1554, 4
  %v1559 = vrot.slane %v1556, 4
  %vm1560 = vcmask 252928
  %v1561 = vsel %vm1560, %v1557, %v1552
  %v1562 = vsel %vm73, %v1557, %v1558
  %v1563 = vsel %vm1560, %v1562, %v1554
  %v1564 = vsel %vm73, %v1558, %v1559
  %v1565 = vsel %vm1560, %v1564, %v1556
  %v1569 = vmul.f32 %v1524, %v1561
  %v1570 = vmul.f32 %v1525, %v1563
  %v1571 = vmul.f32 %v1526, %v1565
  %1572 = vrot.lane.b32.xlu0 %v46, 33
  %v1573 = vpop.permute.xlu0 %1572
  %1574 = vrot.lane.b32.xlu0 %v47, 33
  %v1575 = vpop.permute.xlu0 %1574
  %1576 = vrot.lane.b32.xlu0 %v48, 33
  %v1577 = vpop.permute.xlu0 %1576
  %v1578 = vrot.slane %v1573, 4
  %v1579 = vrot.slane %v1575, 4
  %v1580 = vrot.slane %v1577, 4
  %vm1581 = vcmask 269312
  %v1582 = vsel %vm1581, %v1578, %v1573
  %v1583 = vsel %vm73, %v1578, %v1579
  %v1584 = vsel %vm1581, %v1583, %v1575
  %v1585 = vsel %vm73, %v1579, %v1580
  %v1586 = vsel %vm1581, %v1585, %v1577
  %v1590 = vmul.f32 %v1524, %v1582
  %v1591 = vmul.f32 %v1525, %v1584
  %v1592 = vmul.f32 %v1526, %v1586
  %1596 = vrot.lane.b32.xlu0 %v50, 34
  %v1597 = vpop.permute.xlu0 %1596
  %1598 = vrot.lane.b32.xlu0 %v51, 34
  %v1599 = vpop.permute.xlu0 %1598
  %1600 = vrot.lane.b32.xlu0 %v52, 34
  %v1601 = vpop.permute.xlu0 %1600
  %v1602 = vrot.slane %v1597, 4
  %v1603 = vrot.slane %v1599, 4
  %v1604 = vrot.slane %v1601, 4
  %vm1605 = vcmask 277504
  %v1606 = vsel %vm1605, %v1602, %v1597
  %v1607 = vsel %vm73, %v1602, %v1603
  %v1608 = vsel %vm1605, %v1607, %v1599
  %v1609 = vsel %vm73, %v1603, %v1604
  %v1610 = vsel %vm1605, %v1609, %v1601
  %v1614 = vmul.f32 %v1524, %v1606
  %v1615 = vmul.f32 %v1525, %v1608
  %v1616 = vmul.f32 %v1526, %v1610
  %1617 = vrot.lane.b32.xlu0 %v38, 46
  %v1618 = vpop.permute.xlu0 %1617
  %1619 = vrot.lane.b32.xlu0 %v39, 46
  %v1620 = vpop.permute.xlu0 %1619
  %1621 = vrot.lane.b32.xlu0 %v40, 46
  %v1622 = vpop.permute.xlu0 %1621
  %v1623 = vrot.slane %v1618, 4
  %v1624 = vrot.slane %v1620, 4
  %v1625 = vrot.slane %v1622, 4
  %vm1626 = vcmask 375808
  %v1627 = vsel %vm1626, %v1623, %v1618
  %v1628 = vsel %vm73, %v1623, %v1624
  %v1629 = vsel %vm1626, %v1628, %v1620
  %v1630 = vsel %vm73, %v1624, %v1625
  %v1631 = vsel %vm1626, %v1630, %v1622
  %v1635 = vmul.f32 %v1524, %v1627
  %v1636 = vmul.f32 %v1525, %v1629
  %v1637 = vmul.f32 %v1526, %v1631
  %v1638 = vmul.f32 %v1524, %v104
  %v1639 = vmul.f32 %v1525, %v106
  %v1640 = vmul.f32 %v1526, %v108
  %v1641 = vmul.f32 %v1524, %v128
  %v1642 = vmul.f32 %v1525, %v130
  %v1643 = vmul.f32 %v1526, %v132
  %1644 = vrot.lane.b32.xlu0 %v50, 50
  %v1645 = vpop.permute.xlu0 %1644
  %1646 = vrot.lane.b32.xlu0 %v51, 50
  %v1647 = vpop.permute.xlu0 %1646
  %1648 = vrot.lane.b32.xlu0 %v52, 50
  %v1649 = vpop.permute.xlu0 %1648
  %v1650 = vrot.slane %v1645, 4
  %v1651 = vrot.slane %v1647, 4
  %v1652 = vrot.slane %v1649, 4
  %vm1653 = vcmask 408576
  %v1654 = vsel %vm1653, %v1650, %v1645
  %v1655 = vsel %vm73, %v1650, %v1651
  %v1656 = vsel %vm1653, %v1655, %v1647
  %v1657 = vsel %vm73, %v1651, %v1652
  %v1658 = vsel %vm1653, %v1657, %v1649
  %v1662 = vmul.f32 %v1524, %v1654
  %v1663 = vmul.f32 %v1525, %v1656
  %v1664 = vmul.f32 %v1526, %v1658
  %1665 = vrot.lane.b32.xlu0 %v38, 62
  %v1666 = vpop.permute.xlu0 %1665
  %1667 = vrot.lane.b32.xlu0 %v39, 62
  %v1668 = vpop.permute.xlu0 %1667
  %1669 = vrot.lane.b32.xlu0 %v40, 62
  %v1670 = vpop.permute.xlu0 %1669
  %v1671 = vrot.slane %v1666, 4
  %v1672 = vrot.slane %v1668, 4
  %v1673 = vrot.slane %v1670, 4
  %vm1674 = vcmask 506880
  %v1675 = vsel %vm1674, %v1671, %v1666
  %v1676 = vsel %vm73, %v1671, %v1672
  %v1677 = vsel %vm1674, %v1676, %v1668
  %v1678 = vsel %vm73, %v1672, %v1673
  %v1679 = vsel %vm1674, %v1678, %v1670
  %v1683 = vmul.f32 %v1524, %v1675
  %v1684 = vmul.f32 %v1525, %v1677
  %v1685 = vmul.f32 %v1526, %v1679
  %v1686 = vmul.f32 %v1524, %v149
  %v1687 = vmul.f32 %v1525, %v151
  %v1688 = vmul.f32 %v1526, %v153
  %v1689 = vmul.f32 %v1524, %v170
  %v1690 = vmul.f32 %v1525, %v172
  %v1691 = vmul.f32 %v1526, %v174
  %1692 = vrot.lane.b32.xlu0 %v50, 66
  %v1693 = vpop.permute.xlu0 %1692
  %1694 = vrot.lane.b32.xlu0 %v51, 66
  %v1695 = vpop.permute.xlu0 %1694
  %1696 = vrot.lane.b32.xlu0 %v52, 66
  %v1697 = vpop.permute.xlu0 %1696
  %v1698 = vrot.slane %v1693, 4
  %v1699 = vrot.slane %v1695, 4
  %v1700 = vrot.slane %v1697, 4
  %vm1701 = vcmask 539648
  %v1702 = vsel %vm1701, %v1698, %v1693
  %v1703 = vsel %vm73, %v1698, %v1699
  %v1704 = vsel %vm1701, %v1703, %v1695
  %v1705 = vsel %vm73, %v1699, %v1700
  %v1706 = vsel %vm1701, %v1705, %v1697
  %v1710 = vmul.f32 %v1524, %v1702
  %v1711 = vmul.f32 %v1525, %v1704
  %v1712 = vmul.f32 %v1526, %v1706
  %1713 = vrot.lane.b32.xlu0 %v38, 78
  %v1714 = vpop.permute.xlu0 %1713
  %1715 = vrot.lane.b32.xlu0 %v39, 78
  %v1716 = vpop.permute.xlu0 %1715
  %1717 = vrot.lane.b32.xlu0 %v40, 78
  %v1718 = vpop.permute.xlu0 %1717
  %v1719 = vrot.slane %v1714, 4
  %v1720 = vrot.slane %v1716, 4
  %v1721 = vrot.slane %v1718, 4
  %vm1722 = vcmask 637952
  %v1723 = vsel %vm1722, %v1719, %v1714
  %v1724 = vsel %vm73, %v1719, %v1720
  %v1725 = vsel %vm1722, %v1724, %v1716
  %v1726 = vsel %vm73, %v1720, %v1721
  %v1727 = vsel %vm1722, %v1726, %v1718
  %v1731 = vmul.f32 %v1524, %v1723
  %v1732 = vmul.f32 %v1525, %v1725
  %v1733 = vmul.f32 %v1526, %v1727
  %v1734 = vmul.f32 %v1524, %v191
  %v1735 = vmul.f32 %v1525, %v193
  %v1736 = vmul.f32 %v1526, %v195
  %v1737 = vmul.f32 %v1524, %v212
  %v1738 = vmul.f32 %v1525, %v214
  %v1739 = vmul.f32 %v1526, %v216
  %1740 = vrot.lane.b32.xlu0 %v50, 82
  %v1741 = vpop.permute.xlu0 %1740
  %1742 = vrot.lane.b32.xlu0 %v51, 82
  %v1743 = vpop.permute.xlu0 %1742
  %1744 = vrot.lane.b32.xlu0 %v52, 82
  %v1745 = vpop.permute.xlu0 %1744
  %v1746 = vrot.slane %v1741, 4
  %v1747 = vrot.slane %v1743, 4
  %v1748 = vrot.slane %v1745, 4
  %vm1749 = vcmask 670720
  %v1750 = vsel %vm1749, %v1746, %v1741
  %v1751 = vsel %vm73, %v1746, %v1747
  %v1752 = vsel %vm1749, %v1751, %v1743
  %v1753 = vsel %vm73, %v1747, %v1748
  %v1754 = vsel %vm1749, %v1753, %v1745
  %v1758 = vmul.f32 %v1524, %v1750
  %v1759 = vmul.f32 %v1525, %v1752
  %v1760 = vmul.f32 %v1526, %v1754
  %1761 = vrot.lane.b32.xlu0 %v38, 94
  %v1762 = vpop.permute.xlu0 %1761
  %1763 = vrot.lane.b32.xlu0 %v39, 94
  %v1764 = vpop.permute.xlu0 %1763
  %1765 = vrot.lane.b32.xlu0 %v40, 94
  %v1766 = vpop.permute.xlu0 %1765
  %v1767 = vrot.slane %v1762, 4
  %v1768 = vrot.slane %v1764, 4
  %v1769 = vrot.slane %v1766, 4
  %vm1770 = vcmask 769024
  %v1771 = vsel %vm1770, %v1767, %v1762
  %v1772 = vsel %vm73, %v1767, %v1768
  %v1773 = vsel %vm1770, %v1772, %v1764
  %v1774 = vsel %vm73, %v1768, %v1769
  %v1775 = vsel %vm1770, %v1774, %v1766
  %v1779 = vmul.f32 %v1524, %v1771
  %v1780 = vmul.f32 %v1525, %v1773
  %v1781 = vmul.f32 %v1526, %v1775
  %1782 = vrot.lane.b32.xlu0 %v42, 95
  %v1783 = vpop.permute.xlu0 %1782
  %1784 = vrot.lane.b32.xlu0 %v43, 95
  %v1785 = vpop.permute.xlu0 %1784
  %1786 = vrot.lane.b32.xlu0 %v44, 95
  %v1787 = vpop.permute.xlu0 %1786
  %v1788 = vrot.slane %v1783, 4
  %v1789 = vrot.slane %v1785, 4
  %v1790 = vrot.slane %v1787, 4
  %vm1791 = vcmask 777216
  %v1792 = vsel %vm1791, %v1788, %v1783
  %v1793 = vsel %vm73, %v1788, %v1789
  %v1794 = vsel %vm1791, %v1793, %v1785
  %v1795 = vsel %vm73, %v1789, %v1790
  %v1796 = vsel %vm1791, %v1795, %v1787
  %v1800 = vmul.f32 %v1524, %v1792
  %v1801 = vmul.f32 %v1525, %v1794
  %v1802 = vmul.f32 %v1526, %v1796
  %1803 = vrot.lane.b32.xlu0 %v46, 97
  %v1804 = vpop.permute.xlu0 %1803
  %1805 = vrot.lane.b32.xlu0 %v47, 97
  %v1806 = vpop.permute.xlu0 %1805
  %1807 = vrot.lane.b32.xlu0 %v48, 97
  %v1808 = vpop.permute.xlu0 %1807
  %v1809 = vrot.slane %v1804, 4
  %v1810 = vrot.slane %v1806, 4
  %v1811 = vrot.slane %v1808, 4
  %vm1812 = vcmask 793600
  %v1813 = vsel %vm1812, %v1809, %v1804
  %v1814 = vsel %vm73, %v1809, %v1810
  %v1815 = vsel %vm1812, %v1814, %v1806
  %v1816 = vsel %vm73, %v1810, %v1811
  %v1817 = vsel %vm1812, %v1816, %v1808
  %v1821 = vmul.f32 %v1524, %v1813
  %v1822 = vmul.f32 %v1525, %v1815
  %v1823 = vmul.f32 %v1526, %v1817
  %1824 = vrot.lane.b32.xlu0 %v50, 98
  %v1825 = vpop.permute.xlu0 %1824
  %1826 = vrot.lane.b32.xlu0 %v51, 98
  %v1827 = vpop.permute.xlu0 %1826
  %1828 = vrot.lane.b32.xlu0 %v52, 98
  %v1829 = vpop.permute.xlu0 %1828
  %v1830 = vrot.slane %v1825, 4
  %v1831 = vrot.slane %v1827, 4
  %v1832 = vrot.slane %v1829, 4
  %vm1833 = vcmask 801792
  %v1834 = vsel %vm1833, %v1830, %v1825
  %v1835 = vsel %vm73, %v1830, %v1831
  %v1836 = vsel %vm1833, %v1835, %v1827
  %v1837 = vsel %vm73, %v1831, %v1832
  %v1838 = vsel %vm1833, %v1837, %v1829
  %v1842 = vmul.f32 %v1524, %v1834
  %v1843 = vmul.f32 %v1525, %v1836
  %v1844 = vmul.f32 %v1526, %v1838
  %1848 = vst [vmem:[#allocation1] ss:$2 sm:$0xff] %v1548
  %s1849 = scalar_lea.vmem [#allocation1], 16
  %1850 = vst [vmem:[%s1849] ss:$2 sm:$0xff] %v1549
  %s1851 = scalar_lea.vmem [#allocation1], 32
  %1852 = vst [vmem:[%s1851] ss:$2 sm:$0xff] %v1550
  %v1853 = vld.sshfl [vmem:[#allocation1] sm:$0xff pattern:$0x75316420]
  %v1854 = vld.sshfl [vmem:[#allocation1 + $0x8] sm:$0xff pattern:$0x75316420]
  %v1855 = vld.sshfl [vmem:[#allocation1 + $0x10] sm:$0xff pattern:$0x75316420]
  %v1856 = vld.sshfl [vmem:[#allocation1 + $0x18] sm:$0xff pattern:$0x75316420]
  %v1857 = vld.sshfl [vmem:[#allocation1 + $0x20] sm:$0xff pattern:$0x75316420]
  %v1858 = vld.sshfl [vmem:[#allocation1 + $0x28] sm:$0xff pattern:$0x75316420]
  %s1868 = scalar_lea.vmem [#allocation1], 1
  %1869 = vst [vmem:[%s1868] ss:$2 sm:$0xff] %v1569
  %s1870 = scalar_lea.vmem [#allocation1], 17
  %1871 = vst [vmem:[%s1870] ss:$2 sm:$0xff] %v1570
  %s1872 = scalar_lea.vmem [#allocation1], 33
  %1873 = vst [vmem:[%s1872] ss:$2 sm:$0xff] %v1571
  %v1874 = vld.sshfl [vmem:[#allocation1] sm:$0xff pattern:$0x75316420]
  %v1875 = vld.sshfl [vmem:[#allocation1 + $0x8] sm:$0xff pattern:$0x75316420]
  %v1876 = vld.sshfl [vmem:[#allocation1 + $0x10] sm:$0xff pattern:$0x75316420]
  %v1877 = vld.sshfl [vmem:[#allocation1 + $0x18] sm:$0xff pattern:$0x75316420]
  %v1878 = vld.sshfl [vmem:[#allocation1 + $0x20] sm:$0xff pattern:$0x75316420]
  %v1879 = vld.sshfl [vmem:[#allocation1 + $0x28] sm:$0xff pattern:$0x75316420]
  %1880 = vrot.lane.b32.xlu0 %v1874, 127
  %v1881 = vpop.permute.xlu0 %1880
  %1882 = vrot.lane.b32.xlu0 %v1875, 127
  %v1883 = vpop.permute.xlu0 %1882
  %1884 = vrot.lane.b32.xlu0 %v1876, 127
  %v1885 = vpop.permute.xlu0 %1884
  %1886 = vrot.lane.b32.xlu0 %v1877, 127
  %v1887 = vpop.permute.xlu0 %1886
  %1888 = vrot.lane.b32.xlu0 %v1878, 127
  %v1889 = vpop.permute.xlu0 %1888
  %1890 = vrot.lane.b32.xlu0 %v1879, 127
  %v1891 = vpop.permute.xlu0 %1890
  %v1892 = vsel %vm270, %v1881, %v1883
  %v1893 = vsel %vm270, %v1883, %v1885
  %v1894 = vsel %vm270, %v1885, %v1887
  %v1895 = vsel %vm270, %v1887, %v1889
  %v1896 = vsel %vm270, %v1889, %v1891
  %v1903 = vsel %vm73, %v1853, %v1892
  %v1904 = vsel %vm73, %v1854, %v1893
  %v1905 = vsel %vm73, %v1855, %v1894
  %v1906 = vsel %vm73, %v1856, %v1895
  %v1907 = vsel %vm73, %v1857, %v1896
  %v1908 = vsel %vm73, %v1858, %v1891
  %1915 = vrot.lane.b32.xlu0 %v1903, 98
  %v1916 = vpop.permute.xlu0 %1915
  %1917 = vrot.lane.b32.xlu0 %v1904, 98
  %v1918 = vpop.permute.xlu0 %1917
  %1919 = vrot.lane.b32.xlu0 %v1905, 98
  %v1920 = vpop.permute.xlu0 %1919
  %1921 = vrot.lane.b32.xlu0 %v1906, 98
  %v1922 = vpop.permute.xlu0 %1921
  %1923 = vrot.lane.b32.xlu0 %v1907, 98
  %v1924 = vpop.permute.xlu0 %1923
  %1925 = vrot.lane.b32.xlu0 %v1908, 98
  %v1926 = vpop.permute.xlu0 %1925
  %v1927 = vsel %vm1833, %v1916, %v1918
  %v1928 = vsel %vm1833, %v1918, %v1920
  %v1929 = vsel %vm1833, %v1920, %v1922
  %v1930 = vsel %vm1833, %v1922, %v1924
  %v1931 = vsel %vm1833, %v1924, %v1926
  %1937 = vst [vmem:[#allocation3] sm:$0xff] %v1927
  %1938 = vst [vmem:[#allocation3 + $0x8] sm:$0xff] %v1928
  %1939 = vst [vmem:[#allocation3 + $0x10] sm:$0xff] %v1929
  %1940 = vst [vmem:[#allocation3 + $0x18] sm:$0xff] %v1930
  %1941 = vst [vmem:[#allocation3 + $0x20] sm:$0xff] %v1931
  %1945 = vst [vmem:[#allocation1] ss:$2 sm:$0xff] %v1524
  %s1946 = scalar_lea.vmem [#allocation1], 16
  %1947 = vst [vmem:[%s1946] ss:$2 sm:$0xff] %v1525
  %s1948 = scalar_lea.vmem [#allocation1], 32
  %1949 = vst [vmem:[%s1948] ss:$2 sm:$0xff] %v1526
  %v1950 = vld.sshfl [vmem:[#allocation1] sm:$0xff pattern:$0x75316420]
  %v1951 = vld.sshfl [vmem:[#allocation1 + $0x8] sm:$0xff pattern:$0x75316420]
  %v1952 = vld.sshfl [vmem:[#allocation1 + $0x10] sm:$0xff pattern:$0x75316420]
  %v1953 = vld.sshfl [vmem:[#allocation1 + $0x18] sm:$0xff pattern:$0x75316420]
  %v1954 = vld.sshfl [vmem:[#allocation1 + $0x20] sm:$0xff pattern:$0x75316420]
  %v1955 = vld.sshfl [vmem:[#allocation1 + $0x28] sm:$0xff pattern:$0x75316420]
  %s1965 = scalar_lea.vmem [#allocation1], 1
  %1966 = vst [vmem:[%s1965] ss:$2 sm:$0xff] %v1590
  %s1967 = scalar_lea.vmem [#allocation1], 17
  %1968 = vst [vmem:[%s1967] ss:$2 sm:$0xff] %v1591
  %s1969 = scalar_lea.vmem [#allocation1], 33
  %1970 = vst [vmem:[%s1969] ss:$2 sm:$0xff] %v1592
  %v1971 = vld.sshfl [vmem:[#allocation1] sm:$0xff pattern:$0x75316420]
  %v1972 = vld.sshfl [vmem:[#allocation1 + $0x8] sm:$0xff pattern:$0x75316420]
  %v1973 = vld.sshfl [vmem:[#allocation1 + $0x10] sm:$0xff pattern:$0x75316420]
  %v1974 = vld.sshfl [vmem:[#allocation1 + $0x18] sm:$0xff pattern:$0x75316420]
  %v1975 = vld.sshfl [vmem:[#allocation1 + $0x20] sm:$0xff pattern:$0x75316420]
  %v1976 = vld.sshfl [vmem:[#allocation1 + $0x28] sm:$0xff pattern:$0x75316420]
  %1977 = vrot.lane.b32.xlu0 %v1971, 127
  %v1978 = vpop.permute.xlu0 %1977
  %1979 = vrot.lane.b32.xlu0 %v1972, 127
  %v1980 = vpop.permute.xlu0 %1979
  %1981 = vrot.lane.b32.xlu0 %v1973, 127
  %v1982 = vpop.permute.xlu0 %1981
  %1983 = vrot.lane.b32.xlu0 %v1974, 127
  %v1984 = vpop.permute.xlu0 %1983
  %1985 = vrot.lane.b32.xlu0 %v1975, 127
  %v1986 = vpop.permute.xlu0 %1985
  %1987 = vrot.lane.b32.xlu0 %v1976, 127
  %v1988 = vpop.permute.xlu0 %1987
  %v1989 = vsel %vm270, %v1978, %v1980
  %v1990 = vsel %vm270, %v1980, %v1982
  %v1991 = vsel %vm270, %v1982, %v1984
  %v1992 = vsel %vm270, %v1984, %v1986
  %v1993 = vsel %vm270, %v1986, %v1988
  %v2000 = vsel %vm73, %v1950, %v1989
  %v2001 = vsel %vm73, %v1951, %v1990
  %v2002 = vsel %vm73, %v1952, %v1991
  %v2003 = vsel %vm73, %v1953, %v1992
  %v2004 = vsel %vm73, %v1954, %v1993
  %v2005 = vsel %vm73, %v1955, %v1988
  %2012 = vrot.lane.b32.xlu0 %v2000, 96
  %v2013 = vpop.permute.xlu0 %2012
  %2014 = vrot.lane.b32.xlu0 %v2001, 96
  %v2015 = vpop.permute.xlu0 %2014
  %2016 = vrot.lane.b32.xlu0 %v2002, 96
  %v2017 = vpop.permute.xlu0 %2016
  %2018 = vrot.lane.b32.xlu0 %v2003, 96
  %v2019 = vpop.permute.xlu0 %2018
  %2020 = vrot.lane.b32.xlu0 %v2004, 96
  %v2021 = vpop.permute.xlu0 %2020
  %2022 = vrot.lane.b32.xlu0 %v2005, 96
  %v2023 = vpop.permute.xlu0 %2022
  %vm2024 = vcmask 785408
  %v2025 = vsel %vm2024, %v2013, %v2015
  %v2026 = vsel %vm2024, %v2015, %v2017
  %v2027 = vsel %vm2024, %v2017, %v2019
  %v2028 = vsel %vm2024, %v2019, %v2021
  %v2029 = vsel %vm2024, %v2021, %v2023
  %2035 = vst [vmem:[#allocation3 + $0x28] sm:$0xff] %v2025
  %2036 = vst [vmem:[#allocation3 + $0x30] sm:$0xff] %v2026
  %2037 = vst [vmem:[#allocation3 + $0x38] sm:$0xff] %v2027
  %2038 = vst [vmem:[#allocation3 + $0x40] sm:$0xff] %v2028
  %2039 = vst [vmem:[#allocation3 + $0x48] sm:$0xff] %v2029
  %2043 = vst [vmem:[#allocation1] ss:$2 sm:$0xff] %v1614
  %s2044 = scalar_lea.vmem [#allocation1], 16
  %2045 = vst [vmem:[%s2044] ss:$2 sm:$0xff] %v1615
  %s2046 = scalar_lea.vmem [#allocation1], 32
  %2047 = vst [vmem:[%s2046] ss:$2 sm:$0xff] %v1616
  %v2048 = vld.sshfl [vmem:[#allocation1] sm:$0xff pattern:$0x75316420]
  %v2049 = vld.sshfl [vmem:[#allocation1 + $0x8] sm:$0xff pattern:$0x75316420]
  %v2050 = vld.sshfl [vmem:[#allocation1 + $0x10] sm:$0xff pattern:$0x75316420]
  %v2051 = vld.sshfl [vmem:[#allocation1 + $0x18] sm:$0xff pattern:$0x75316420]
  %v2052 = vld.sshfl [vmem:[#allocation1 + $0x20] sm:$0xff pattern:$0x75316420]
  %v2053 = vld.sshfl [vmem:[#allocation1 + $0x28] sm:$0xff pattern:$0x75316420]
  %s2063 = scalar_lea.vmem [#allocation1], 1
  %2064 = vst [vmem:[%s2063] ss:$2 sm:$0xff] %v1635
  %s2065 = scalar_lea.vmem [#allocation1], 17
  %2066 = vst [vmem:[%s2065] ss:$2 sm:$0xff] %v1636
  %s2067 = scalar_lea.vmem [#allocation1], 33
  %2068 = vst [vmem:[%s2067] ss:$2 sm:$0xff] %v1637
  %v2069 = vld.sshfl [vmem:[#allocation1] sm:$0xff pattern:$0x75316420]
  %v2070 = vld.sshfl [vmem:[#allocation1 + $0x8] sm:$0xff pattern:$0x75316420]
  %v2071 = vld.sshfl [vmem:[#allocation1 + $0x10] sm:$0xff pattern:$0x75316420]
  %v2072 = vld.sshfl [vmem:[#allocation1 + $0x18] sm:$0xff pattern:$0x75316420]
  %v2073 = vld.sshfl [vmem:[#allocation1 + $0x20] sm:$0xff pattern:$0x75316420]
  %v2074 = vld.sshfl [vmem:[#allocation1 + $0x28] sm:$0xff pattern:$0x75316420]
  %2075 = vrot.lane.b32.xlu0 %v2069, 116
  %v2076 = vpop.permute.xlu0 %2075
  %2077 = vrot.lane.b32.xlu0 %v2070, 116
  %v2078 = vpop.permute.xlu0 %2077
  %2079 = vrot.lane.b32.xlu0 %v2071, 116
  %v2080 = vpop.permute.xlu0 %2079
  %2081 = vrot.lane.b32.xlu0 %v2072, 116
  %v2082 = vpop.permute.xlu0 %2081
  %2083 = vrot.lane.b32.xlu0 %v2073, 116
  %v2084 = vpop.permute.xlu0 %2083
  %2085 = vrot.lane.b32.xlu0 %v2074, 116
  %v2086 = vpop.permute.xlu0 %2085
  %vm2087 = vcmask 949248
  %v2088 = vsel %vm2087, %v2076, %v2078
  %v2089 = vsel %vm2087, %v2078, %v2080
  %v2090 = vsel %vm2087, %v2080, %v2082
  %v2091 = vsel %vm2087, %v2082, %v2084
  %v2092 = vsel %vm2087, %v2084, %v2086
  %v2099 = vsel %vm73, %v2048, %v2088
  %v2100 = vsel %vm73, %v2049, %v2089
  %v2101 = vsel %vm73, %v2050, %v2090
  %v2102 = vsel %vm73, %v2051, %v2091
  %v2103 = vsel %vm73, %v2052, %v2092
  %v2104 = vsel %vm73, %v2053, %v2086
  %2111 = vrot.lane.b32.xlu0 %v2099, 94
  %v2112 = vpop.permute.xlu0 %2111
  %2113 = vrot.lane.b32.xlu0 %v2100, 94
  %v2114 = vpop.permute.xlu0 %2113
  %2115 = vrot.lane.b32.xlu0 %v2101, 94
  %v2116 = vpop.permute.xlu0 %2115
  %2117 = vrot.lane.b32.xlu0 %v2102, 94
  %v2118 = vpop.permute.xlu0 %2117
  %2119 = vrot.lane.b32.xlu0 %v2103, 94
  %v2120 = vpop.permute.xlu0 %2119
  %2121 = vrot.lane.b32.xlu0 %v2104, 94
  %v2122 = vpop.permute.xlu0 %2121
  %v2123 = vsel %vm1770, %v2112, %v2114
  %v2124 = vsel %vm1770, %v2114, %v2116
  %v2125 = vsel %vm1770, %v2116, %v2118
  %v2126 = vsel %vm1770, %v2118, %v2120
  %v2127 = vsel %vm1770, %v2120, %v2122
  %2133 = vst [vmem:[#allocation3 + $0x50] sm:$0xff] %v2123
  %2134 = vst [vmem:[#allocation3 + $0x58] sm:$0xff] %v2124
  %2135 = vst [vmem:[#allocation3 + $0x60] sm:$0xff] %v2125
  %2136 = vst [vmem:[#allocation3 + $0x68] sm:$0xff] %v2126
  %2137 = vst [vmem:[#allocation3 + $0x70] sm:$0xff] %v2127
  %2141 = vst [vmem:[#allocation1] ss:$2 sm:$0xff] %v1638
  %s2142 = scalar_lea.vmem [#allocation1], 16
  %2143 = vst [vmem:[%s2142] ss:$2 sm:$0xff] %v1639
  %s2144 = scalar_lea.vmem [#allocation1], 32
  %2145 = vst [vmem:[%s2144] ss:$2 sm:$0xff] %v1640
  %v2146 = vld.sshfl [vmem:[#allocation1] sm:$0xff pattern:$0x75316420]
  %v2147 = vld.sshfl [vmem:[#allocation1 + $0x8] sm:$0xff pattern:$0x75316420]
  %v2148 = vld.sshfl [vmem:[#allocation1 + $0x10] sm:$0xff pattern:$0x75316420]
  %v2149 = vld.sshfl [vmem:[#allocation1 + $0x18] sm:$0xff pattern:$0x75316420]
  %v2150 = vld.sshfl [vmem:[#allocation1 + $0x20] sm:$0xff pattern:$0x75316420]
  %v2151 = vld.sshfl [vmem:[#allocation1 + $0x28] sm:$0xff pattern:$0x75316420]
  %s2158 = scalar_lea.vmem [#allocation1], 1
  %2159 = vst [vmem:[%s2158] ss:$2 sm:$0xff] %v1524
  %s2160 = scalar_lea.vmem [#allocation1], 17
  %2161 = vst [vmem:[%s2160] ss:$2 sm:$0xff] %v1525
  %s2162 = scalar_lea.vmem [#allocation1], 33
  %2163 = vst [vmem:[%s2162] ss:$2 sm:$0xff] %v1526
  %v2164 = vld.sshfl [vmem:[#allocation1] sm:$0xff pattern:$0x75316420]
  %v2165 = vld.sshfl [vmem:[#allocation1 + $0x8] sm:$0xff pattern:$0x75316420]
  %v2166 = vld.sshfl [vmem:[#allocation1 + $0x10] sm:$0xff pattern:$0x75316420]
  %v2167 = vld.sshfl [vmem:[#allocation1 + $0x18] sm:$0xff pattern:$0x75316420]
  %v2168 = vld.sshfl [vmem:[#allocation1 + $0x20] sm:$0xff pattern:$0x75316420]
  %v2169 = vld.sshfl [vmem:[#allocation1 + $0x28] sm:$0xff pattern:$0x75316420]
  %2170 = vrot.lane.b32.xlu0 %v2164, 127
  %v2171 = vpop.permute.xlu0 %2170
  %2172 = vrot.lane.b32.xlu0 %v2165, 127
  %v2173 = vpop.permute.xlu0 %2172
  %2174 = vrot.lane.b32.xlu0 %v2166, 127
  %v2175 = vpop.permute.xlu0 %2174
  %2176 = vrot.lane.b32.xlu0 %v2167, 127
  %v2177 = vpop.permute.xlu0 %2176
  %2178 = vrot.lane.b32.xlu0 %v2168, 127
  %v2179 = vpop.permute.xlu0 %2178
  %2180 = vrot.lane.b32.xlu0 %v2169, 127
  %v2181 = vpop.permute.xlu0 %2180
  %v2182 = vsel %vm270, %v2171, %v2173
  %v2183 = vsel %vm270, %v2173, %v2175
  %v2184 = vsel %vm270, %v2175, %v2177
  %v2185 = vsel %vm270, %v2177, %v2179
  %v2186 = vsel %vm270, %v2179, %v2181
  %v2193 = vsel %vm73, %v2146, %v2182
  %v2194 = vsel %vm73, %v2147, %v2183
  %v2195 = vsel %vm73, %v2148, %v2184
  %v2196 = vsel %vm73, %v2149, %v2185
  %v2197 = vsel %vm73, %v2150, %v2186
  %v2198 = vsel %vm73, %v2151, %v2181
  %2205 = vrot.lane.b32.xlu0 %v2193, 81
  %v2206 = vpop.permute.xlu0 %2205
  %2207 = vrot.lane.b32.xlu0 %v2194, 81
  %v2208 = vpop.permute.xlu0 %2207
  %2209 = vrot.lane.b32.xlu0 %v2195, 81
  %v2210 = vpop.permute.xlu0 %2209
  %2211 = vrot.lane.b32.xlu0 %v2196, 81
  %v2212 = vpop.permute.xlu0 %2211
  %2213 = vrot.lane.b32.xlu0 %v2197, 81
  %v2214 = vpop.permute.xlu0 %2213
  %2215 = vrot.lane.b32.xlu0 %v2198, 81
  %v2216 = vpop.permute.xlu0 %2215
  %v2217 = vsel %vm211, %v2206, %v2208
  %v2218 = vsel %vm211, %v2208, %v2210
  %v2219 = vsel %vm211, %v2210, %v2212
  %v2220 = vsel %vm211, %v2212, %v2214
  %v2221 = vsel %vm211, %v2214, %v2216
  %2227 = vst [vmem:[#allocation3 + $0x78] sm:$0xff] %v2217
  %2228 = vst [vmem:[#allocation3 + $0x80] sm:$0xff] %v2218
  %2229 = vst [vmem:[#allocation3 + $0x88] sm:$0xff] %v2219
  %2230 = vst [vmem:[#allocation3 + $0x90] sm:$0xff] %v2220
  %2231 = vst [vmem:[#allocation3 + $0x98] sm:$0xff] %v2221
  %2235 = vst [vmem:[#allocation1] ss:$2 sm:$0xff] %v1641
  %s2236 = scalar_lea.vmem [#allocation1], 16
  %2237 = vst [vmem:[%s2236] ss:$2 sm:$0xff] %v1642
  %s2238 = scalar_lea.vmem [#allocation1], 32
  %2239 = vst [vmem:[%s2238] ss:$2 sm:$0xff] %v1643
  %v2240 = vld.sshfl [vmem:[#allocation1] sm:$0xff pattern:$0x75316420]
  %v2241 = vld.sshfl [vmem:[#allocation1 + $0x8] sm:$0xff pattern:$0x75316420]
  %v2242 = vld.sshfl [vmem:[#allocation1 + $0x10] sm:$0xff pattern:$0x75316420]
  %v2243 = vld.sshfl [vmem:[#allocation1 + $0x18] sm:$0xff pattern:$0x75316420]
  %v2244 = vld.sshfl [vmem:[#allocation1 + $0x20] sm:$0xff pattern:$0x75316420]
  %v2245 = vld.sshfl [vmem:[#allocation1 + $0x28] sm:$0xff pattern:$0x75316420]
  %s2255 = scalar_lea.vmem [#allocation1], 1
  %2256 = vst [vmem:[%s2255] ss:$2 sm:$0xff] %v1662
  %s2257 = scalar_lea.vmem [#allocation1], 17
  %2258 = vst [vmem:[%s2257] ss:$2 sm:$0xff] %v1663
  %s2259 = scalar_lea.vmem [#allocation1], 33
  %2260 = vst [vmem:[%s2259] ss:$2 sm:$0xff] %v1664
  %v2261 = vld.sshfl [vmem:[#allocation1] sm:$0xff pattern:$0x75316420]
  %v2262 = vld.sshfl [vmem:[#allocation1 + $0x8] sm:$0xff pattern:$0x75316420]
  %v2263 = vld.sshfl [vmem:[#allocation1 + $0x10] sm:$0xff pattern:$0x75316420]
  %v2264 = vld.sshfl [vmem:[#allocation1 + $0x18] sm:$0xff pattern:$0x75316420]
  %v2265 = vld.sshfl [vmem:[#allocation1 + $0x20] sm:$0xff pattern:$0x75316420]
  %v2266 = vld.sshfl [vmem:[#allocation1 + $0x28] sm:$0xff pattern:$0x75316420]
  %2267 = vrot.lane.b32.xlu0 %v2261, 127
  %v2268 = vpop.permute.xlu0 %2267
  %2269 = vrot.lane.b32.xlu0 %v2262, 127
  %v2270 = vpop.permute.xlu0 %2269
  %2271 = vrot.lane.b32.xlu0 %v2263, 127
  %v2272 = vpop.permute.xlu0 %2271
  %2273 = vrot.lane.b32.xlu0 %v2264, 127
  %v2274 = vpop.permute.xlu0 %2273
  %2275 = vrot.lane.b32.xlu0 %v2265, 127
  %v2276 = vpop.permute.xlu0 %2275
  %2277 = vrot.lane.b32.xlu0 %v2266, 127
  %v2278 = vpop.permute.xlu0 %2277
  %v2279 = vsel %vm270, %v2268, %v2270
  %v2280 = vsel %vm270, %v2270, %v2272
  %v2281 = vsel %vm270, %v2272, %v2274
  %v2282 = vsel %vm270, %v2274, %v2276
  %v2283 = vsel %vm270, %v2276, %v2278
  %v2290 = vsel %vm73, %v2240, %v2279
  %v2291 = vsel %vm73, %v2241, %v2280
  %v2292 = vsel %vm73, %v2242, %v2281
  %v2293 = vsel %vm73, %v2243, %v2282
  %v2294 = vsel %vm73, %v2244, %v2283
  %v2295 = vsel %vm73, %v2245, %v2278
  %2302 = vrot.lane.b32.xlu0 %v2290, 79
  %v2303 = vpop.permute.xlu0 %2302
  %2304 = vrot.lane.b32.xlu0 %v2291, 79
  %v2305 = vpop.permute.xlu0 %2304
  %2306 = vrot.lane.b32.xlu0 %v2292, 79
  %v2307 = vpop.permute.xlu0 %2306
  %2308 = vrot.lane.b32.xlu0 %v2293, 79
  %v2309 = vpop.permute.xlu0 %2308
  %2310 = vrot.lane.b32.xlu0 %v2294, 79
  %v2311 = vpop.permute.xlu0 %2310
  %2312 = vrot.lane.b32.xlu0 %v2295, 79
  %v2313 = vpop.permute.xlu0 %2312
  %v2314 = vsel %vm190, %v2303, %v2305
  %v2315 = vsel %vm190, %v2305, %v2307
  %v2316 = vsel %vm190, %v2307, %v2309
  %v2317 = vsel %vm190, %v2309, %v2311
  %v2318 = vsel %vm190, %v2311, %v2313
  %2324 = vst [vmem:[#allocation3 + $0xa0] sm:$0xff] %v2314
  %2325 = vst [vmem:[#allocation3 + $0xa8] sm:$0xff] %v2315
  %2326 = vst [vmem:[#allocation3 + $0xb0] sm:$0xff] %v2316
  %2327 = vst [vmem:[#allocation3 + $0xb8] sm:$0xff] %v2317
  %2328 = vst [vmem:[#allocation3 + $0xc0] sm:$0xff] %v2318
  %2332 = vst [vmem:[#allocation1] ss:$2 sm:$0xff] %v1683
  %s2333 = scalar_lea.vmem [#allocation1], 16
  %2334 = vst [vmem:[%s2333] ss:$2 sm:$0xff] %v1684
  %s2335 = scalar_lea.vmem [#allocation1], 32
  %2336 = vst [vmem:[%s2335] ss:$2 sm:$0xff] %v1685
  %v2337 = vld.sshfl [vmem:[#allocation1] sm:$0xff pattern:$0x75316420]
  %v2338 = vld.sshfl [vmem:[#allocation1 + $0x8] sm:$0xff pattern:$0x75316420]
  %v2339 = vld.sshfl [vmem:[#allocation1 + $0x10] sm:$0xff pattern:$0x75316420]
  %v2340 = vld.sshfl [vmem:[#allocation1 + $0x18] sm:$0xff pattern:$0x75316420]
  %v2341 = vld.sshfl [vmem:[#allocation1 + $0x20] sm:$0xff pattern:$0x75316420]
  %v2342 = vld.sshfl [vmem:[#allocation1 + $0x28] sm:$0xff pattern:$0x75316420]
  %s2352 = scalar_lea.vmem [#allocation1], 1
  %2353 = vst [vmem:[%s2352] ss:$2 sm:$0xff] %v1686
  %s2354 = scalar_lea.vmem [#allocation1], 17
  %2355 = vst [vmem:[%s2354] ss:$2 sm:$0xff] %v1687
  %s2356 = scalar_lea.vmem [#allocation1], 33
  %2357 = vst [vmem:[%s2356] ss:$2 sm:$0xff] %v1688
  %v2358 = vld.sshfl [vmem:[#allocation1] sm:$0xff pattern:$0x75316420]
  %v2359 = vld.sshfl [vmem:[#allocation1 + $0x8] sm:$0xff pattern:$0x75316420]
  %v2360 = vld.sshfl [vmem:[#allocation1 + $0x10] sm:$0xff pattern:$0x75316420]
  %v2361 = vld.sshfl [vmem:[#allocation1 + $0x18] sm:$0xff pattern:$0x75316420]
  %v2362 = vld.sshfl [vmem:[#allocation1 + $0x20] sm:$0xff pattern:$0x75316420]
  %v2363 = vld.sshfl [vmem:[#allocation1 + $0x28] sm:$0xff pattern:$0x75316420]
  %2364 = vrot.lane.b32.xlu0 %v2358, 127
  %v2365 = vpop.permute.xlu0 %2364
  %2366 = vrot.lane.b32.xlu0 %v2359, 127
  %v2367 = vpop.permute.xlu0 %2366
  %2368 = vrot.lane.b32.xlu0 %v2360, 127
  %v2369 = vpop.permute.xlu0 %2368
  %2370 = vrot.lane.b32.xlu0 %v2361, 127
  %v2371 = vpop.permute.xlu0 %2370
  %2372 = vrot.lane.b32.xlu0 %v2362, 127
  %v2373 = vpop.permute.xlu0 %2372
  %2374 = vrot.lane.b32.xlu0 %v2363, 127
  %v2375 = vpop.permute.xlu0 %2374
  %v2376 = vsel %vm270, %v2365, %v2367
  %v2377 = vsel %vm270, %v2367, %v2369
  %v2378 = vsel %vm270, %v2369, %v2371
  %v2379 = vsel %vm270, %v2371, %v2373
  %v2380 = vsel %vm270, %v2373, %v2375
  %v2387 = vsel %vm73, %v2337, %v2376
  %v2388 = vsel %vm73, %v2338, %v2377
  %v2389 = vsel %vm73, %v2339, %v2378
  %v2390 = vsel %vm73, %v2340, %v2379
  %v2391 = vsel %vm73, %v2341, %v2380
  %v2392 = vsel %vm73, %v2342, %v2375
  %2399 = vrot.lane.b32.xlu0 %v2387, 66
  %v2400 = vpop.permute.xlu0 %2399
  %2401 = vrot.lane.b32.xlu0 %v2388, 66
  %v2402 = vpop.permute.xlu0 %2401
  %2403 = vrot.lane.b32.xlu0 %v2389, 66
  %v2404 = vpop.permute.xlu0 %2403
  %2405 = vrot.lane.b32.xlu0 %v2390, 66
  %v2406 = vpop.permute.xlu0 %2405
  %2407 = vrot.lane.b32.xlu0 %v2391, 66
  %v2408 = vpop.permute.xlu0 %2407
  %2409 = vrot.lane.b32.xlu0 %v2392, 66
  %v2410 = vpop.permute.xlu0 %2409
  %v2411 = vsel %vm1701, %v2400, %v2402
  %v2412 = vsel %vm1701, %v2402, %v2404
  %v2413 = vsel %vm1701, %v2404, %v2406
  %v2414 = vsel %vm1701, %v2406, %v2408
  %v2415 = vsel %vm1701, %v2408, %v2410
  %2421 = vst [vmem:[#allocation3 + $0xc8] sm:$0xff] %v2411
  %2422 = vst [vmem:[#allocation3 + $0xd0] sm:$0xff] %v2412
  %2423 = vst [vmem:[#allocation3 + $0xd8] sm:$0xff] %v2413
  %2424 = vst [vmem:[#allocation3 + $0xe0] sm:$0xff] %v2414
  %2425 = vst [vmem:[#allocation3 + $0xe8] sm:$0xff] %v2415
  %2426 = vst [vmem:[#allocation1] ss:$2 sm:$0xff] %v1524
  %s2427 = scalar_lea.vmem [#allocation1], 16
  %2428 = vst [vmem:[%s2427] ss:$2 sm:$0xff] %v1525
  %s2429 = scalar_lea.vmem [#allocation1], 32
  %2430 = vst [vmem:[%s2429] ss:$2 sm:$0xff] %v1526
  %v2431 = vld.sshfl [vmem:[#allocation1] sm:$0xff pattern:$0x75316420]
  %v2432 = vld.sshfl [vmem:[#allocation1 + $0x8] sm:$0xff pattern:$0x75316420]
  %v2433 = vld.sshfl [vmem:[#allocation1 + $0x10] sm:$0xff pattern:$0x75316420]
  %v2434 = vld.sshfl [vmem:[#allocation1 + $0x18] sm:$0xff pattern:$0x75316420]
  %v2435 = vld.sshfl [vmem:[#allocation1 + $0x20] sm:$0xff pattern:$0x75316420]
  %v2436 = vld.sshfl [vmem:[#allocation1 + $0x28] sm:$0xff pattern:$0x75316420]
  %s2446 = scalar_lea.vmem [#allocation1], 1
  %2447 = vst [vmem:[%s2446] ss:$2 sm:$0xff] %v1689
  %s2448 = scalar_lea.vmem [#allocation1], 17
  %2449 = vst [vmem:[%s2448] ss:$2 sm:$0xff] %v1690
  %s2450 = scalar_lea.vmem [#allocation1], 33
  %2451 = vst [vmem:[%s2450] ss:$2 sm:$0xff] %v1691
  %v2452 = vld.sshfl [vmem:[#allocation1] sm:$0xff pattern:$0x75316420]
  %v2453 = vld.sshfl [vmem:[#allocation1 + $0x8] sm:$0xff pattern:$0x75316420]
  %v2454 = vld.sshfl [vmem:[#allocation1 + $0x10] sm:$0xff pattern:$0x75316420]
  %v2455 = vld.sshfl [vmem:[#allocation1 + $0x18] sm:$0xff pattern:$0x75316420]
  %v2456 = vld.sshfl [vmem:[#allocation1 + $0x20] sm:$0xff pattern:$0x75316420]
  %v2457 = vld.sshfl [vmem:[#allocation1 + $0x28] sm:$0xff pattern:$0x75316420]
  %2458 = vrot.lane.b32.xlu0 %v2452, 127
  %v2459 = vpop.permute.xlu0 %2458
  %2460 = vrot.lane.b32.xlu0 %v2453, 127
  %v2461 = vpop.permute.xlu0 %2460
  %2462 = vrot.lane.b32.xlu0 %v2454, 127
  %v2463 = vpop.permute.xlu0 %2462
  %2464 = vrot.lane.b32.xlu0 %v2455, 127
  %v2465 = vpop.permute.xlu0 %2464
  %2466 = vrot.lane.b32.xlu0 %v2456, 127
  %v2467 = vpop.permute.xlu0 %2466
  %2468 = vrot.lane.b32.xlu0 %v2457, 127
  %v2469 = vpop.permute.xlu0 %2468
  %v2470 = vsel %vm270, %v2459, %v2461
  %v2471 = vsel %vm270, %v2461, %v2463
  %v2472 = vsel %vm270, %v2463, %v2465
  %v2473 = vsel %vm270, %v2465, %v2467
  %v2474 = vsel %vm270, %v2467, %v2469
  %v2481 = vsel %vm73, %v2431, %v2470
  %v2482 = vsel %vm73, %v2432, %v2471
  %v2483 = vsel %vm73, %v2433, %v2472
  %v2484 = vsel %vm73, %v2434, %v2473
  %v2485 = vsel %vm73, %v2435, %v2474
  %v2486 = vsel %vm73, %v2436, %v2469
  %2493 = vrot.lane.b32.xlu0 %v2481, 64
  %v2494 = vpop.permute.xlu0 %2493
  %2495 = vrot.lane.b32.xlu0 %v2482, 64
  %v2496 = vpop.permute.xlu0 %2495
  %2497 = vrot.lane.b32.xlu0 %v2483, 64
  %v2498 = vpop.permute.xlu0 %2497
  %2499 = vrot.lane.b32.xlu0 %v2484, 64
  %v2500 = vpop.permute.xlu0 %2499
  %2501 = vrot.lane.b32.xlu0 %v2485, 64
  %v2502 = vpop.permute.xlu0 %2501
  %2503 = vrot.lane.b32.xlu0 %v2486, 64
  %v2504 = vpop.permute.xlu0 %2503
  %v2505 = vsel %vm71, %v2494, %v2496
  %v2506 = vsel %vm71, %v2496, %v2498
  %v2507 = vsel %vm71, %v2498, %v2500
  %v2508 = vsel %vm71, %v2500, %v2502
  %v2509 = vsel %vm71, %v2502, %v2504
  %2515 = vst [vmem:[#allocation3 + $0xf0] sm:$0xff] %v2505
  %2516 = vst [vmem:[#allocation3 + $0xf8] sm:$0xff] %v2506
  %2517 = vst [vmem:[#allocation3 + $0x100] sm:$0xff] %v2507
  %2518 = vst [vmem:[#allocation3 + $0x108] sm:$0xff] %v2508
  %2519 = vst [vmem:[#allocation3 + $0x110] sm:$0xff] %v2509
  %2523 = vst [vmem:[#allocation1] ss:$2 sm:$0xff] %v1710
  %s2524 = scalar_lea.vmem [#allocation1], 16
  %2525 = vst [vmem:[%s2524] ss:$2 sm:$0xff] %v1711
  %s2526 = scalar_lea.vmem [#allocation1], 32
  %2527 = vst [vmem:[%s2526] ss:$2 sm:$0xff] %v1712
  %v2528 = vld.sshfl [vmem:[#allocation1] sm:$0xff pattern:$0x75316420]
  %v2529 = vld.sshfl [vmem:[#allocation1 + $0x8] sm:$0xff pattern:$0x75316420]
  %v2530 = vld.sshfl [vmem:[#allocation1 + $0x10] sm:$0xff pattern:$0x75316420]
  %v2531 = vld.sshfl [vmem:[#allocation1 + $0x18] sm:$0xff pattern:$0x75316420]
  %v2532 = vld.sshfl [vmem:[#allocation1 + $0x20] sm:$0xff pattern:$0x75316420]
  %v2533 = vld.sshfl [vmem:[#allocation1 + $0x28] sm:$0xff pattern:$0x75316420]
  %s2543 = scalar_lea.vmem [#allocation1], 1
  %2544 = vst [vmem:[%s2543] ss:$2 sm:$0xff] %v1731
  %s2545 = scalar_lea.vmem [#allocation1], 17
  %2546 = vst [vmem:[%s2545] ss:$2 sm:$0xff] %v1732
  %s2547 = scalar_lea.vmem [#allocation1], 33
  %2548 = vst [vmem:[%s2547] ss:$2 sm:$0xff] %v1733
  %v2549 = vld.sshfl [vmem:[#allocation1] sm:$0xff pattern:$0x75316420]
  %v2550 = vld.sshfl [vmem:[#allocation1 + $0x8] sm:$0xff pattern:$0x75316420]
  %v2551 = vld.sshfl [vmem:[#allocation1 + $0x10] sm:$0xff pattern:$0x75316420]
  %v2552 = vld.sshfl [vmem:[#allocation1 + $0x18] sm:$0xff pattern:$0x75316420]
  %v2553 = vld.sshfl [vmem:[#allocation1 + $0x20] sm:$0xff pattern:$0x75316420]
  %v2554 = vld.sshfl [vmem:[#allocation1 + $0x28] sm:$0xff pattern:$0x75316420]
  %2555 = vrot.lane.b32.xlu0 %v2549, 116
  %v2556 = vpop.permute.xlu0 %2555
  %2557 = vrot.lane.b32.xlu0 %v2550, 116
  %v2558 = vpop.permute.xlu0 %2557
  %2559 = vrot.lane.b32.xlu0 %v2551, 116
  %v2560 = vpop.permute.xlu0 %2559
  %2561 = vrot.lane.b32.xlu0 %v2552, 116
  %v2562 = vpop.permute.xlu0 %2561
  %2563 = vrot.lane.b32.xlu0 %v2553, 116
  %v2564 = vpop.permute.xlu0 %2563
  %2565 = vrot.lane.b32.xlu0 %v2554, 116
  %v2566 = vpop.permute.xlu0 %2565
  %v2567 = vsel %vm2087, %v2556, %v2558
  %v2568 = vsel %vm2087, %v2558, %v2560
  %v2569 = vsel %vm2087, %v2560, %v2562
  %v2570 = vsel %vm2087, %v2562, %v2564
  %v2571 = vsel %vm2087, %v2564, %v2566
  %v2578 = vsel %vm73, %v2528, %v2567
  %v2579 = vsel %vm73, %v2529, %v2568
  %v2580 = vsel %vm73, %v2530, %v2569
  %v2581 = vsel %vm73, %v2531, %v2570
  %v2582 = vsel %vm73, %v2532, %v2571
  %v2583 = vsel %vm73, %v2533, %v2566
  %2590 = vrot.lane.b32.xlu0 %v2578, 62
  %v2591 = vpop.permute.xlu0 %2590
  %2592 = vrot.lane.b32.xlu0 %v2579, 62
  %v2593 = vpop.permute.xlu0 %2592
  %2594 = vrot.lane.b32.xlu0 %v2580, 62
  %v2595 = vpop.permute.xlu0 %2594
  %2596 = vrot.lane.b32.xlu0 %v2581, 62
  %v2597 = vpop.permute.xlu0 %2596
  %2598 = vrot.lane.b32.xlu0 %v2582, 62
  %v2599 = vpop.permute.xlu0 %2598
  %2600 = vrot.lane.b32.xlu0 %v2583, 62
  %v2601 = vpop.permute.xlu0 %2600
  %v2602 = vsel %vm1674, %v2591, %v2593
  %v2603 = vsel %vm1674, %v2593, %v2595
  %v2604 = vsel %vm1674, %v2595, %v2597
  %v2605 = vsel %vm1674, %v2597, %v2599
  %v2606 = vsel %vm1674, %v2599, %v2601
  %2612 = vst [vmem:[#allocation3 + $0x118] sm:$0xff] %v2602
  %2613 = vst [vmem:[#allocation3 + $0x120] sm:$0xff] %v2603
  %2614 = vst [vmem:[#allocation3 + $0x128] sm:$0xff] %v2604
  %2615 = vst [vmem:[#allocation3 + $0x130] sm:$0xff] %v2605
  %2616 = vst [vmem:[#allocation3 + $0x138] sm:$0xff] %v2606
  %2620 = vst [vmem:[#allocation1] ss:$2 sm:$0xff] %v1734
  %s2621 = scalar_lea.vmem [#allocation1], 16
  %2622 = vst [vmem:[%s2621] ss:$2 sm:$0xff] %v1735
  %s2623 = scalar_lea.vmem [#allocation1], 32
  %2624 = vst [vmem:[%s2623] ss:$2 sm:$0xff] %v1736
  %v2625 = vld.sshfl [vmem:[#allocation1] sm:$0xff pattern:$0x75316420]
  %v2626 = vld.sshfl [vmem:[#allocation1 + $0x8] sm:$0xff pattern:$0x75316420]
  %v2627 = vld.sshfl [vmem:[#allocation1 + $0x10] sm:$0xff pattern:$0x75316420]
  %v2628 = vld.sshfl [vmem:[#allocation1 + $0x18] sm:$0xff pattern:$0x75316420]
  %v2629 = vld.sshfl [vmem:[#allocation1 + $0x20] sm:$0xff pattern:$0x75316420]
  %v2630 = vld.sshfl [vmem:[#allocation1 + $0x28] sm:$0xff pattern:$0x75316420]
  %s2637 = scalar_lea.vmem [#allocation1], 1
  %2638 = vst [vmem:[%s2637] ss:$2 sm:$0xff] %v1524
  %s2639 = scalar_lea.vmem [#allocation1], 17
  %2640 = vst [vmem:[%s2639] ss:$2 sm:$0xff] %v1525
  %s2641 = scalar_lea.vmem [#allocation1], 33
  %2642 = vst [vmem:[%s2641] ss:$2 sm:$0xff] %v1526
  %v2643 = vld.sshfl [vmem:[#allocation1] sm:$0xff pattern:$0x75316420]
  %v2644 = vld.sshfl [vmem:[#allocation1 + $0x8] sm:$0xff pattern:$0x75316420]
  %v2645 = vld.sshfl [vmem:[#allocation1 + $0x10] sm:$0xff pattern:$0x75316420]
  %v2646 = vld.sshfl [vmem:[#allocation1 + $0x18] sm:$0xff pattern:$0x75316420]
  %v2647 = vld.sshfl [vmem:[#allocation1 + $0x20] sm:$0xff pattern:$0x75316420]
  %v2648 = vld.sshfl [vmem:[#allocation1 + $0x28] sm:$0xff pattern:$0x75316420]
  %2649 = vrot.lane.b32.xlu0 %v2643, 127
  %v2650 = vpop.permute.xlu0 %2649
  %2651 = vrot.lane.b32.xlu0 %v2644, 127
  %v2652 = vpop.permute.xlu0 %2651
  %2653 = vrot.lane.b32.xlu0 %v2645, 127
  %v2654 = vpop.permute.xlu0 %2653
  %2655 = vrot.lane.b32.xlu0 %v2646, 127
  %v2656 = vpop.permute.xlu0 %2655
  %2657 = vrot.lane.b32.xlu0 %v2647, 127
  %v2658 = vpop.permute.xlu0 %2657
  %2659 = vrot.lane.b32.xlu0 %v2648, 127
  %v2660 = vpop.permute.xlu0 %2659
  %v2661 = vsel %vm270, %v2650, %v2652
  %v2662 = vsel %vm270, %v2652, %v2654
  %v2663 = vsel %vm270, %v2654, %v2656
  %v2664 = vsel %vm270, %v2656, %v2658
  %v2665 = vsel %vm270, %v2658, %v2660
  %v2672 = vsel %vm73, %v2625, %v2661
  %v2673 = vsel %vm73, %v2626, %v2662
  %v2674 = vsel %vm73, %v2627, %v2663
  %v2675 = vsel %vm73, %v2628, %v2664
  %v2676 = vsel %vm73, %v2629, %v2665
  %v2677 = vsel %vm73, %v2630, %v2660
  %2684 = vrot.lane.b32.xlu0 %v2672, 49
  %v2685 = vpop.permute.xlu0 %2684
  %2686 = vrot.lane.b32.xlu0 %v2673, 49
  %v2687 = vpop.permute.xlu0 %2686
  %2688 = vrot.lane.b32.xlu0 %v2674, 49
  %v2689 = vpop.permute.xlu0 %2688
  %2690 = vrot.lane.b32.xlu0 %v2675, 49
  %v2691 = vpop.permute.xlu0 %2690
  %2692 = vrot.lane.b32.xlu0 %v2676, 49
  %v2693 = vpop.permute.xlu0 %2692
  %2694 = vrot.lane.b32.xlu0 %v2677, 49
  %v2695 = vpop.permute.xlu0 %2694
  %v2696 = vsel %vm127, %v2685, %v2687
  %v2697 = vsel %vm127, %v2687, %v2689
  %v2698 = vsel %vm127, %v2689, %v2691
  %v2699 = vsel %vm127, %v2691, %v2693
  %v2700 = vsel %vm127, %v2693, %v2695
  %2706 = vst [vmem:[#allocation3 + $0x140] sm:$0xff] %v2696
  %2707 = vst [vmem:[#allocation3 + $0x148] sm:$0xff] %v2697
  %2708 = vst [vmem:[#allocation3 + $0x150] sm:$0xff] %v2698
  %2709 = vst [vmem:[#allocation3 + $0x158] sm:$0xff] %v2699
  %2710 = vst [vmem:[#allocation3 + $0x160] sm:$0xff] %v2700
  %2714 = vst [vmem:[#allocation1] ss:$2 sm:$0xff] %v1737
  %s2715 = scalar_lea.vmem [#allocation1], 16
  %2716 = vst [vmem:[%s2715] ss:$2 sm:$0xff] %v1738
  %s2717 = scalar_lea.vmem [#allocation1], 32
  %2718 = vst [vmem:[%s2717] ss:$2 sm:$0xff] %v1739
  %v2719 = vld.sshfl [vmem:[#allocation1] sm:$0xff pattern:$0x75316420]
  %v2720 = vld.sshfl [vmem:[#allocation1 + $0x8] sm:$0xff pattern:$0x75316420]
  %v2721 = vld.sshfl [vmem:[#allocation1 + $0x10] sm:$0xff pattern:$0x75316420]
  %v2722 = vld.sshfl [vmem:[#allocation1 + $0x18] sm:$0xff pattern:$0x75316420]
  %v2723 = vld.sshfl [vmem:[#allocation1 + $0x20] sm:$0xff pattern:$0x75316420]
  %v2724 = vld.sshfl [vmem:[#allocation1 + $0x28] sm:$0xff pattern:$0x75316420]
  %s2734 = scalar_lea.vmem [#allocation1], 1
  %2735 = vst [vmem:[%s2734] ss:$2 sm:$0xff] %v1758
  %s2736 = scalar_lea.vmem [#allocation1], 17
  %2737 = vst [vmem:[%s2736] ss:$2 sm:$0xff] %v1759
  %s2738 = scalar_lea.vmem [#allocation1], 33
  %2739 = vst [vmem:[%s2738] ss:$2 sm:$0xff] %v1760
  %v2740 = vld.sshfl [vmem:[#allocation1] sm:$0xff pattern:$0x75316420]
  %v2741 = vld.sshfl [vmem:[#allocation1 + $0x8] sm:$0xff pattern:$0x75316420]
  %v2742 = vld.sshfl [vmem:[#allocation1 + $0x10] sm:$0xff pattern:$0x75316420]
  %v2743 = vld.sshfl [vmem:[#allocation1 + $0x18] sm:$0xff pattern:$0x75316420]
  %v2744 = vld.sshfl [vmem:[#allocation1 + $0x20] sm:$0xff pattern:$0x75316420]
  %v2745 = vld.sshfl [vmem:[#allocation1 + $0x28] sm:$0xff pattern:$0x75316420]
  %2746 = vrot.lane.b32.xlu0 %v2740, 127
  %v2747 = vpop.permute.xlu0 %2746
  %2748 = vrot.lane.b32.xlu0 %v2741, 127
  %v2749 = vpop.permute.xlu0 %2748
  %2750 = vrot.lane.b32.xlu0 %v2742, 127
  %v2751 = vpop.permute.xlu0 %2750
  %2752 = vrot.lane.b32.xlu0 %v2743, 127
  %v2753 = vpop.permute.xlu0 %2752
  %2754 = vrot.lane.b32.xlu0 %v2744, 127
  %v2755 = vpop.permute.xlu0 %2754
  %2756 = vrot.lane.b32.xlu0 %v2745, 127
  %v2757 = vpop.permute.xlu0 %2756
  %v2758 = vsel %vm270, %v2747, %v2749
  %v2759 = vsel %vm270, %v2749, %v2751
  %v2760 = vsel %vm270, %v2751, %v2753
  %v2761 = vsel %vm270, %v2753, %v2755
  %v2762 = vsel %vm270, %v2755, %v2757
  %v2769 = vsel %vm73, %v2719, %v2758
  %v2770 = vsel %vm73, %v2720, %v2759
  %v2771 = vsel %vm73, %v2721, %v2760
  %v2772 = vsel %vm73, %v2722, %v2761
  %v2773 = vsel %vm73, %v2723, %v2762
  %v2774 = vsel %vm73, %v2724, %v2757
  %2781 = vrot.lane.b32.xlu0 %v2769, 47
  %v2782 = vpop.permute.xlu0 %2781
  %2783 = vrot.lane.b32.xlu0 %v2770, 47
  %v2784 = vpop.permute.xlu0 %2783
  %2785 = vrot.lane.b32.xlu0 %v2771, 47
  %v2786 = vpop.permute.xlu0 %2785
  %2787 = vrot.lane.b32.xlu0 %v2772, 47
  %v2788 = vpop.permute.xlu0 %2787
  %2789 = vrot.lane.b32.xlu0 %v2773, 47
  %v2790 = vpop.permute.xlu0 %2789
  %2791 = vrot.lane.b32.xlu0 %v2774, 47
  %v2792 = vpop.permute.xlu0 %2791
  %v2793 = vsel %vm103, %v2782, %v2784
  %v2794 = vsel %vm103, %v2784, %v2786
  %v2795 = vsel %vm103, %v2786, %v2788
  %v2796 = vsel %vm103, %v2788, %v2790
  %v2797 = vsel %vm103, %v2790, %v2792
  %2803 = vst [vmem:[#allocation3 + $0x168] sm:$0xff] %v2793
  %2804 = vst [vmem:[#allocation3 + $0x170] sm:$0xff] %v2794
  %2805 = vst [vmem:[#allocation3 + $0x178] sm:$0xff] %v2795
  %2806 = vst [vmem:[#allocation3 + $0x180] sm:$0xff] %v2796
  %2807 = vst [vmem:[#allocation3 + $0x188] sm:$0xff] %v2797
  %2811 = vst [vmem:[#allocation1] ss:$2 sm:$0xff] %v1779
  %s2812 = scalar_lea.vmem [#allocation1], 16
  %2813 = vst [vmem:[%s2812] ss:$2 sm:$0xff] %v1780
  %s2814 = scalar_lea.vmem [#allocation1], 32
  %2815 = vst [vmem:[%s2814] ss:$2 sm:$0xff] %v1781
  %v2816 = vld.sshfl [vmem:[#allocation1] sm:$0xff pattern:$0x75316420]
  %v2817 = vld.sshfl [vmem:[#allocation1 + $0x8] sm:$0xff pattern:$0x75316420]
  %v2818 = vld.sshfl [vmem:[#allocation1 + $0x10] sm:$0xff pattern:$0x75316420]
  %v2819 = vld.sshfl [vmem:[#allocation1 + $0x18] sm:$0xff pattern:$0x75316420]
  %v2820 = vld.sshfl [vmem:[#allocation1 + $0x20] sm:$0xff pattern:$0x75316420]
  %v2821 = vld.sshfl [vmem:[#allocation1 + $0x28] sm:$0xff pattern:$0x75316420]
  %s2831 = scalar_lea.vmem [#allocation1], 1
  %2832 = vst [vmem:[%s2831] ss:$2 sm:$0xff] %v1800
  %s2833 = scalar_lea.vmem [#allocation1], 17
  %2834 = vst [vmem:[%s2833] ss:$2 sm:$0xff] %v1801
  %s2835 = scalar_lea.vmem [#allocation1], 33
  %2836 = vst [vmem:[%s2835] ss:$2 sm:$0xff] %v1802
  %v2837 = vld.sshfl [vmem:[#allocation1] sm:$0xff pattern:$0x75316420]
  %v2838 = vld.sshfl [vmem:[#allocation1 + $0x8] sm:$0xff pattern:$0x75316420]
  %v2839 = vld.sshfl [vmem:[#allocation1 + $0x10] sm:$0xff pattern:$0x75316420]
  %v2840 = vld.sshfl [vmem:[#allocation1 + $0x18] sm:$0xff pattern:$0x75316420]
  %v2841 = vld.sshfl [vmem:[#allocation1 + $0x20] sm:$0xff pattern:$0x75316420]
  %v2842 = vld.sshfl [vmem:[#allocation1 + $0x28] sm:$0xff pattern:$0x75316420]
  %2843 = vrot.lane.b32.xlu0 %v2837, 127
  %v2844 = vpop.permute.xlu0 %2843
  %2845 = vrot.lane.b32.xlu0 %v2838, 127
  %v2846 = vpop.permute.xlu0 %2845
  %2847 = vrot.lane.b32.xlu0 %v2839, 127
  %v2848 = vpop.permute.xlu0 %2847
  %2849 = vrot.lane.b32.xlu0 %v2840, 127
  %v2850 = vpop.permute.xlu0 %2849
  %2851 = vrot.lane.b32.xlu0 %v2841, 127
  %v2852 = vpop.permute.xlu0 %2851
  %2853 = vrot.lane.b32.xlu0 %v2842, 127
  %v2854 = vpop.permute.xlu0 %2853
  %v2855 = vsel %vm270, %v2844, %v2846
  %v2856 = vsel %vm270, %v2846, %v2848
  %v2857 = vsel %vm270, %v2848, %v2850
  %v2858 = vsel %vm270, %v2850, %v2852
  %v2859 = vsel %vm270, %v2852, %v2854
  %v2866 = vsel %vm73, %v2816, %v2855
  %v2867 = vsel %vm73, %v2817, %v2856
  %v2868 = vsel %vm73, %v2818, %v2857
  %v2869 = vsel %vm73, %v2819, %v2858
  %v2870 = vsel %vm73, %v2820, %v2859
  %v2871 = vsel %vm73, %v2821, %v2854
  %2878 = vrot.lane.b32.xlu0 %v2866, 34
  %v2879 = vpop.permute.xlu0 %2878
  %2880 = vrot.lane.b32.xlu0 %v2867, 34
  %v2881 = vpop.permute.xlu0 %2880
  %2882 = vrot.lane.b32.xlu0 %v2868, 34
  %v2883 = vpop.permute.xlu0 %2882
  %2884 = vrot.lane.b32.xlu0 %v2869, 34
  %v2885 = vpop.permute.xlu0 %2884
  %2886 = vrot.lane.b32.xlu0 %v2870, 34
  %v2887 = vpop.permute.xlu0 %2886
  %2888 = vrot.lane.b32.xlu0 %v2871, 34
  %v2889 = vpop.permute.xlu0 %2888
  %v2890 = vsel %vm1605, %v2879, %v2881
  %v2891 = vsel %vm1605, %v2881, %v2883
  %v2892 = vsel %vm1605, %v2883, %v2885
  %v2893 = vsel %vm1605, %v2885, %v2887
  %v2894 = vsel %vm1605, %v2887, %v2889
  %2900 = vst [vmem:[#allocation3 + $0x190] sm:$0xff] %v2890
  %2901 = vst [vmem:[#allocation3 + $0x198] sm:$0xff] %v2891
  %2902 = vst [vmem:[#allocation3 + $0x1a0] sm:$0xff] %v2892
  %2903 = vst [vmem:[#allocation3 + $0x1a8] sm:$0xff] %v2893
  %2904 = vst [vmem:[#allocation3 + $0x1b0] sm:$0xff] %v2894
  %2905 = vst [vmem:[#allocation1] ss:$2 sm:$0xff] %v1524
  %s2906 = scalar_lea.vmem [#allocation1], 16
  %2907 = vst [vmem:[%s2906] ss:$2 sm:$0xff] %v1525
  %s2908 = scalar_lea.vmem [#allocation1], 32
  %2909 = vst [vmem:[%s2908] ss:$2 sm:$0xff] %v1526
  %v2910 = vld.sshfl [vmem:[#allocation1] sm:$0xff pattern:$0x75316420]
  %v2911 = vld.sshfl [vmem:[#allocation1 + $0x8] sm:$0xff pattern:$0x75316420]
  %v2912 = vld.sshfl [vmem:[#allocation1 + $0x10] sm:$0xff pattern:$0x75316420]
  %v2913 = vld.sshfl [vmem:[#allocation1 + $0x18] sm:$0xff pattern:$0x75316420]
  %v2914 = vld.sshfl [vmem:[#allocation1 + $0x20] sm:$0xff pattern:$0x75316420]
  %v2915 = vld.sshfl [vmem:[#allocation1 + $0x28] sm:$0xff pattern:$0x75316420]
  %s2925 = scalar_lea.vmem [#allocation1], 1
  %2926 = vst [vmem:[%s2925] ss:$2 sm:$0xff] %v1821
  %s2927 = scalar_lea.vmem [#allocation1], 17
  %2928 = vst [vmem:[%s2927] ss:$2 sm:$0xff] %v1822
  %s2929 = scalar_lea.vmem [#allocation1], 33
  %2930 = vst [vmem:[%s2929] ss:$2 sm:$0xff] %v1823
  %v2931 = vld.sshfl [vmem:[#allocation1] sm:$0xff pattern:$0x75316420]
  %v2932 = vld.sshfl [vmem:[#allocation1 + $0x8] sm:$0xff pattern:$0x75316420]
  %v2933 = vld.sshfl [vmem:[#allocation1 + $0x10] sm:$0xff pattern:$0x75316420]
  %v2934 = vld.sshfl [vmem:[#allocation1 + $0x18] sm:$0xff pattern:$0x75316420]
  %v2935 = vld.sshfl [vmem:[#allocation1 + $0x20] sm:$0xff pattern:$0x75316420]
  %v2936 = vld.sshfl [vmem:[#allocation1 + $0x28] sm:$0xff pattern:$0x75316420]
  %2937 = vrot.lane.b32.xlu0 %v2931, 127
  %v2938 = vpop.permute.xlu0 %2937
  %2939 = vrot.lane.b32.xlu0 %v2932, 127
  %v2940 = vpop.permute.xlu0 %2939
  %2941 = vrot.lane.b32.xlu0 %v2933, 127
  %v2942 = vpop.permute.xlu0 %2941
  %2943 = vrot.lane.b32.xlu0 %v2934, 127
  %v2944 = vpop.permute.xlu0 %2943
  %2945 = vrot.lane.b32.xlu0 %v2935, 127
  %v2946 = vpop.permute.xlu0 %2945
  %2947 = vrot.lane.b32.xlu0 %v2936, 127
  %v2948 = vpop.permute.xlu0 %2947
  %v2949 = vsel %vm270, %v2938, %v2940
  %v2950 = vsel %vm270, %v2940, %v2942
  %v2951 = vsel %vm270, %v2942, %v2944
  %v2952 = vsel %vm270, %v2944, %v2946
  %v2953 = vsel %vm270, %v2946, %v2948
  %v2960 = vsel %vm73, %v2910, %v2949
  %v2961 = vsel %vm73, %v2911, %v2950
  %v2962 = vsel %vm73, %v2912, %v2951
  %v2963 = vsel %vm73, %v2913, %v2952
  %v2964 = vsel %vm73, %v2914, %v2953
  %v2965 = vsel %vm73, %v2915, %v2948
  %2972 = vrot.lane.b32.xlu0 %v2960, 32
  %v2973 = vpop.permute.xlu0 %2972
  %2974 = vrot.lane.b32.xlu0 %v2961, 32
  %v2975 = vpop.permute.xlu0 %2974
  %2976 = vrot.lane.b32.xlu0 %v2962, 32
  %v2977 = vpop.permute.xlu0 %2976
  %2978 = vrot.lane.b32.xlu0 %v2963, 32
  %v2979 = vpop.permute.xlu0 %2978
  %2980 = vrot.lane.b32.xlu0 %v2964, 32
  %v2981 = vpop.permute.xlu0 %2980
  %2982 = vrot.lane.b32.xlu0 %v2965, 32
  %v2983 = vpop.permute.xlu0 %2982
  %vm2984 = vcmask 261120
  %v2985 = vsel %vm2984, %v2973, %v2975
  %v2986 = vsel %vm2984, %v2975, %v2977
  %v2987 = vsel %vm2984, %v2977, %v2979
  %v2988 = vsel %vm2984, %v2979, %v2981
  %v2989 = vsel %vm2984, %v2981, %v2983
  %2995 = vst [vmem:[#allocation3 + $0x1b8] sm:$0xff] %v2985
  %2996 = vst [vmem:[#allocation3 + $0x1c0] sm:$0xff] %v2986
  %2997 = vst [vmem:[#allocation3 + $0x1c8] sm:$0xff] %v2987
  %2998 = vst [vmem:[#allocation3 + $0x1d0] sm:$0xff] %v2988
  %2999 = vst [vmem:[#allocation3 + $0x1d8] sm:$0xff] %v2989
  %3003 = vst [vmem:[#allocation1] ss:$2 sm:$0xff] %v1842
  %s3004 = scalar_lea.vmem [#allocation1], 16
  %3005 = vst [vmem:[%s3004] ss:$2 sm:$0xff] %v1843
  %s3006 = scalar_lea.vmem [#allocation1], 32
  %3007 = vst [vmem:[%s3006] ss:$2 sm:$0xff] %v1844
  %v3008 = vld.sshfl [vmem:[#allocation1] sm:$0xff pattern:$0x75316420]
  %v3009 = vld.sshfl [vmem:[#allocation1 + $0x8] sm:$0xff pattern:$0x75316420]
  %v3010 = vld.sshfl [vmem:[#allocation1 + $0x10] sm:$0xff pattern:$0x75316420]
  %v3011 = vld.sshfl [vmem:[#allocation1 + $0x18] sm:$0xff pattern:$0x75316420]
  %v3012 = vld.sshfl [vmem:[#allocation1 + $0x20] sm:$0xff pattern:$0x75316420]
  %v3013 = vld.sshfl [vmem:[#allocation1 + $0x28] sm:$0xff pattern:$0x75316420]
  %3014 = vrot.lane.b32.xlu0 %v3008, 30
  %v3015 = vpop.permute.xlu0 %3014
  %3016 = vrot.lane.b32.xlu0 %v3009, 30
  %v3017 = vpop.permute.xlu0 %3016
  %3018 = vrot.lane.b32.xlu0 %v3010, 30
  %v3019 = vpop.permute.xlu0 %3018
  %3020 = vrot.lane.b32.xlu0 %v3011, 30
  %v3021 = vpop.permute.xlu0 %3020
  %3022 = vrot.lane.b32.xlu0 %v3012, 30
  %v3023 = vpop.permute.xlu0 %3022
  %3024 = vrot.lane.b32.xlu0 %v3013, 30
  %v3025 = vpop.permute.xlu0 %3024
  %v3026 = vsel %vm1539, %v3015, %v3017
  %v3027 = vsel %vm1539, %v3017, %v3019
  %v3028 = vsel %vm1539, %v3019, %v3021
  %v3029 = vsel %vm1539, %v3021, %v3023
  %v3030 = vsel %vm1539, %v3023, %v3025
  %3036 = vst [vmem:[#allocation3 + $0x1e0] sm:$0xf] %v3026
  %3037 = vst [vmem:[#allocation3 + $0x1e8] sm:$0xf] %v3027
  %3038 = vst [vmem:[#allocation3 + $0x1f0] sm:$0xf] %v3028
  %3039 = vst [vmem:[#allocation3 + $0x1f8] sm:$0xf] %v3029
  %3040 = vst [vmem:[#allocation3 + $0x200] sm:$0xf] %v3030
  %v3041 = vld [vmem:[%s7] sm:$0x1]
  %v3042 = vld [vmem:[#allocation3] sm:$0xff]
  %v3043 = vld [vmem:[#allocation3 + $0x8] sm:$0xff]
  %v3044 = vld [vmem:[#allocation3 + $0x10] sm:$0xff]
  %v3045 = vld [vmem:[#allocation3 + $0x18] sm:$0xff]
  %v3046 = vld [vmem:[#allocation3 + $0x20] sm:$0xff]
  %v3047 = vld [vmem:[#allocation3 + $0x28] sm:$0xff]
  %v3048 = vld [vmem:[#allocation3 + $0x30] sm:$0xff]
  %v3049 = vld [vmem:[#allocation3 + $0x38] sm:$0xff]
  %v3050 = vld [vmem:[#allocation3 + $0x40] sm:$0xff]
  %v3051 = vld [vmem:[#allocation3 + $0x48] sm:$0xff]
  %v3052 = vld [vmem:[#allocation3 + $0x50] sm:$0xff]
  %v3053 = vld [vmem:[#allocation3 + $0x58] sm:$0xff]
  %v3054 = vld [vmem:[#allocation3 + $0x60] sm:$0xff]
  %v3055 = vld [vmem:[#allocation3 + $0x68] sm:$0xff]
  %v3056 = vld [vmem:[#allocation3 + $0x70] sm:$0xff]
  %v3057 = vld [vmem:[#allocation3 + $0x78] sm:$0xff]
  %v3058 = vld [vmem:[#allocation3 + $0x80] sm:$0xff]
  %v3059 = vld [vmem:[#allocation3 + $0x88] sm:$0xff]
  %v3060 = vld [vmem:[#allocation3 + $0x90] sm:$0xff]
  %v3061 = vld [vmem:[#allocation3 + $0x98] sm:$0xff]
  %v3062 = vld [vmem:[#allocation3 + $0xa0] sm:$0xff]
  %v3063 = vld [vmem:[#allocation3 + $0xa8] sm:$0xff]
  %v3064 = vld [vmem:[#allocation3 + $0xb0] sm:$0xff]
  %v3065 = vld [vmem:[#allocation3 + $0xb8] sm:$0xff]
  %v3066 = vld [vmem:[#allocation3 + $0xc0] sm:$0xff]
  %v3067 = vld [vmem:[#allocation3 + $0xc8] sm:$0xff]
  %v3068 = vld [vmem:[#allocation3 + $0xd0] sm:$0xff]
  %v3069 = vld [vmem:[#allocation3 + $0xd8] sm:$0xff]
  %v3070 = vld [vmem:[#allocation3 + $0xe0] sm:$0xff]
  %v3071 = vld [vmem:[#allocation3 + $0xe8] sm:$0xff]
  %v3072 = vld [vmem:[#allocation3 + $0xf0] sm:$0xff]
  %v3073 = vld [vmem:[#allocation3 + $0xf8] sm:$0xff]
  %v3074 = vld [vmem:[#allocation3 + $0x100] sm:$0xff]
  %v3075 = vld [vmem:[#allocation3 + $0x108] sm:$0xff]
  %v3076 = vld [vmem:[#allocation3 + $0x110] sm:$0xff]
  %v3077 = vld [vmem:[#allocation3 + $0x118] sm:$0xff]
  %v3078 = vld [vmem:[#allocation3 + $0x120] sm:$0xff]
  %v3079 = vld [vmem:[#allocation3 + $0x128] sm:$0xff]
  %v3080 = vld [vmem:[#allocation3 + $0x130] sm:$0xff]
  %v3081 = vld [vmem:[#allocation3 + $0x138] sm:$0xff]
  %v3082 = vld [vmem:[#allocation3 + $0x140] sm:$0xff]
  %v3083 = vld [vmem:[#allocation3 + $0x148] sm:$0xff]
  %v3084 = vld [vmem:[#allocation3 + $0x150] sm:$0xff]
  %v3085 = vld [vmem:[#allocation3 + $0x158] sm:$0xff]
  %v3086 = vld [vmem:[#allocation3 + $0x160] sm:$0xff]
  %v3087 = vld [vmem:[#allocation3 + $0x168] sm:$0xff]
  %v3088 = vld [vmem:[#allocation3 + $0x170] sm:$0xff]
  %v3089 = vld [vmem:[#allocation3 + $0x178] sm:$0xff]
  %v3090 = vld [vmem:[#allocation3 + $0x180] sm:$0xff]
  %v3091 = vld [vmem:[#allocation3 + $0x188] sm:$0xff]
  %v3092 = vld [vmem:[#allocation3 + $0x190] sm:$0xff]
  %v3093 = vld [vmem:[#allocation3 + $0x198] sm:$0xff]
  %v3094 = vld [vmem:[#allocation3 + $0x1a0] sm:$0xff]
  %v3095 = vld [vmem:[#allocation3 + $0x1a8] sm:$0xff]
  %v3096 = vld [vmem:[#allocation3 + $0x1b0] sm:$0xff]
  %v3097 = vld [vmem:[#allocation3 + $0x1b8] sm:$0xff]
  %v3098 = vld [vmem:[#allocation3 + $0x1c0] sm:$0xff]
  %v3099 = vld [vmem:[#allocation3 + $0x1c8] sm:$0xff]
  %v3100 = vld [vmem:[#allocation3 + $0x1d0] sm:$0xff]
  %v3101 = vld [vmem:[#allocation3 + $0x1d8] sm:$0xff]
  %v3102 = vld [vmem:[#allocation3 + $0x1e0] sm:$0xf]
  %v3103 = vld [vmem:[#allocation3 + $0x1e8] sm:$0xf]
  %v3104 = vld [vmem:[#allocation3 + $0x1f0] sm:$0xf]
  %v3105 = vld [vmem:[#allocation3 + $0x1f8] sm:$0xf]
  %v3106 = vld [vmem:[#allocation3 + $0x200] sm:$0xf]
  %v3107 = vld [vmem:[#allocation4] sm:$0x1]
  %3109 = vset.pattern.permute.xlu0 0
  %3110 = vperm.xlu0 %3109, %v3107
  %v3111 = vpop.permute.xlu0 %3110
  %v3113 = vperm.slane %v3111, 0
  %vm3114 = vcmask 818176
  %v3116 = vsel %vm3114, %v3041, 0
  %v3119 = vsel %vm73, %v3102, 0
  %v3122 = vsel %vm73, %v3103, 0
  %v3125 = vsel %vm73, %v3104, 0
  %v3128 = vsel %vm73, %v3105, 0
  %v3131 = vsel %vm73, %v3106, 0
  %3133 = vmatpush.msra.mxu0 0.0
  %3134 = vmatpush.msra.mxu0 0.0
  %3135 = vmatpush.msra.mxu0 0.0
  %3136 = vmatpush.msra.mxu0 %v3119
  %3137 = vmatpush.msra.mxu0 %v3097
  %3138 = vmatpush.msra.mxu0 %v3092
  %3139 = vmatpush.msra.mxu0 %v3087
  %3140 = vmatpush.msra.mxu0 %v3082
  %3141 = vmatpush.msra.mxu0 %v3077
  %3142 = vmatpush.msra.mxu0 %v3072
  %3143 = vmatpush.msra.mxu0 %v3067
  %3144 = vmatpush.msra.mxu0 %v3062
  %3145 = vmatpush.msra.mxu0 %v3057
  %3146 = vmatpush.msra.mxu0 %v3052
  %3147 = vmatpush.msra.mxu0 %v3047
  %3148 = vmatpush.msra.mxu0 %v3042
  %3149 = vmatmul.f32.gmra.mxu0 %v3116
  %v3150 = vpop.f32.mrf.mxu0
  %v3151 = vadd.f32 %v3113, %v3150
  %3152 = vdwg.mxu0
  %3153 = vmatpush.msra.mxu0 0.0
  %3154 = vmatpush.msra.mxu0 0.0
  %3155 = vmatpush.msra.mxu0 0.0
  %3156 = vmatpush.msra.mxu0 %v3122
  %3157 = vmatpush.msra.mxu0 %v3098
  %3158 = vmatpush.msra.mxu0 %v3093
  %3159 = vmatpush.msra.mxu0 %v3088
  %3160 = vmatpush.msra.mxu0 %v3083
  %3161 = vmatpush.msra.mxu0 %v3078
  %3162 = vmatpush.msra.mxu0 %v3073
  %3163 = vmatpush.msra.mxu0 %v3068
  %3164 = vmatpush.msra.mxu0 %v3063
  %3165 = vmatpush.msra.mxu0 %v3058
  %3166 = vmatpush.msra.mxu0 %v3053
  %3167 = vmatpush.msra.mxu0 %v3048
  %3168 = vmatpush.msra.mxu0 %v3043
  %3169 = vmatmul.f32.gmra.mxu0 %v3116
  %v3170 = vpop.f32.mrf.mxu0
  %v3171 = vadd.f32 %v3113, %v3170
  %3172 = vdwg.mxu0
  %3173 = vmatpush.msra.mxu0 0.0
  %3174 = vmatpush.msra.mxu0 0.0
  %3175 = vmatpush.msra.mxu0 0.0
  %3176 = vmatpush.msra.mxu0 %v3125
  %3177 = vmatpush.msra.mxu0 %v3099
  %3178 = vmatpush.msra.mxu0 %v3094
  %3179 = vmatpush.msra.mxu0 %v3089
  %3180 = vmatpush.msra.mxu0 %v3084
  %3181 = vmatpush.msra.mxu0 %v3079
  %3182 = vmatpush.msra.mxu0 %v3074
  %3183 = vmatpush.msra.mxu0 %v3069
  %3184 = vmatpush.msra.mxu0 %v3064
  %3185 = vmatpush.msra.mxu0 %v3059
  %3186 = vmatpush.msra.mxu0 %v3054
  %3187 = vmatpush.msra.mxu0 %v3049
  %3188 = vmatpush.msra.mxu0 %v3044
  %3189 = vmatmul.f32.gmra.mxu0 %v3116
  %v3190 = vpop.f32.mrf.mxu0
  %v3191 = vadd.f32 %v3113, %v3190
  %3192 = vdwg.mxu0
  %3193 = vmatpush.msra.mxu0 0.0
  %3194 = vmatpush.msra.mxu0 0.0
  %3195 = vmatpush.msra.mxu0 0.0
  %3196 = vmatpush.msra.mxu0 %v3128
  %3197 = vmatpush.msra.mxu0 %v3100
  %3198 = vmatpush.msra.mxu0 %v3095
  %3199 = vmatpush.msra.mxu0 %v3090
  %3200 = vmatpush.msra.mxu0 %v3085
  %3201 = vmatpush.msra.mxu0 %v3080
  %3202 = vmatpush.msra.mxu0 %v3075
  %3203 = vmatpush.msra.mxu0 %v3070
  %3204 = vmatpush.msra.mxu0 %v3065
  %3205 = vmatpush.msra.mxu0 %v3060
  %3206 = vmatpush.msra.mxu0 %v3055
  %3207 = vmatpush.msra.mxu0 %v3050
  %3208 = vmatpush.msra.mxu0 %v3045
  %3209 = vmatmul.f32.gmra.mxu0 %v3116
  %v3210 = vpop.f32.mrf.mxu0
  %v3211 = vadd.f32 %v3113, %v3210
  %3212 = vdwg.mxu0
  %3213 = vmatpush.msra.mxu0 0.0
  %3214 = vmatpush.msra.mxu0 0.0
  %3215 = vmatpush.msra.mxu0 0.0
  %3216 = vmatpush.msra.mxu0 %v3131
  %3217 = vmatpush.msra.mxu0 %v3101
  %3218 = vmatpush.msra.mxu0 %v3096
  %3219 = vmatpush.msra.mxu0 %v3091
  %3220 = vmatpush.msra.mxu0 %v3086
  %3221 = vmatpush.msra.mxu0 %v3081
  %3222 = vmatpush.msra.mxu0 %v3076
  %3223 = vmatpush.msra.mxu0 %v3071
  %3224 = vmatpush.msra.mxu0 %v3066
  %3225 = vmatpush.msra.mxu0 %v3061
  %3226 = vmatpush.msra.mxu0 %v3056
  %3227 = vmatpush.msra.mxu0 %v3051
  %3228 = vmatpush.msra.mxu0 %v3046
  %3229 = vmatmul.f32.gmra.mxu0 %v3116
  %v3230 = vpop.f32.mrf.mxu0
  %v3231 = vadd.f32 %v3113, %v3230
  %3232 = vdwg.mxu0
  %v3238 = vrot.slane %v3171, 7
  %v3239 = vrot.slane %v3191, 6
  %v3240 = vrot.slane %v3211, 5
  %v3241 = vrot.slane %v3231, 4
  %vm3242 = vcmask 1040384
  %v3243 = vsel %vm3242, %v3151, %v3238
  %vm3244 = vcmask 1041408
  %v3245 = vsel %vm3244, %v3243, %v3239
  %vm3246 = vcmask 1043459
  %v3247 = vsel %vm3246, %v3240, %v3241
  %vm3248 = vcmask 1042432
  %v3249 = vsel %vm3248, %v3245, %v3247
  %v3251 = vlaneseq
  %vm3252 = vcmp.ge.s32.totalorder %v3251, 0
  %vm3253 = vcmp.lt.s32.totalorder %v3251, 640
  %vm3254 = vmand %vm3252, %vm3253
  %3255 = vst.msk [vmem:[%s9] sm:$0x1f] %vm3254, %v3249
  // Predicated region
  $region38: #{convd_forward.1} parent=0 // pred_check
    _
  $region39: #{convd_forward.1} parent=0 // pred_check_branch
    %3257 = sbr.rel (0) target = $region41
  $region40: #{convd_forward.1} parent=0 // pred_region
    _
  $region41: #{convd_forward.1} parent=0 // pred_fallthru
    _
  // Predicated region
  $region42: #{convd_forward.1} parent=0 // pred_check
    _
  $region43: #{convd_forward.1} parent=0 // pred_check_branch
    %3259 = sbr.rel (0) target = $region45
  $region44: #{convd_forward.1} parent=0 // pred_region
    _
  $region45: #{convd_forward.1} parent=0 // pred_fallthru
    _

</llo_original>
